<compile_context>
chip_gen: v7x
topology: tpu7x:2x2x1
jax: 0.10.0
libtpu: 0.0.40
codegen_flags: <defaults>
</compile_context>

<pallas_src>
import math

import jax
import jax.numpy as jnp
from jax.experimental import pallas as pl
from jax.experimental.pallas import tpu as pltpu


# ----------------------------------------------------------------------------
# Per-generation tuning knobs (static, decided at trace time).
# ----------------------------------------------------------------------------
def _tpu_generation() -> int:
    try:
        kind = jax.devices()[0].device_kind.lower()
    except Exception:
        return 0
    for g in (7, 6, 5, 4):
        if f"v{g}" in kind:
            return g
    return 0


_GEN = _tpu_generation()
# bf16 transcendentals only where VPU/EUP have native bf16 (v6e / v7x).
_BF16_TRANSCENDENTALS = _GEN >= 6
# v7x: 64 MiB VMEM per TensorCore -> leave headroom; v4/v5e/v6e have 128 MiB.
_VMEM_LIMIT = (96 * 1024 * 1024) if _GEN in (4, 5, 6) else (48 * 1024 * 1024)


def _pick_tile_q(S, target=128):
    t = min(target, S)
    while S % t:
        t -= 1
    return t


# ----------------------------------------------------------------------------
# Pallas kernel: one full TransformerBlock for a single batch element,
# query-tiled internally.
# ----------------------------------------------------------------------------
def make_transformer_block_kernel(S, H, n_heads, tile_q, bf16_transcendentals):
    d_k = H // n_heads
    n_tiles = S // tile_q
    eps = 1e-6
    c0 = math.sqrt(2.0 / math.pi)

    def layer_norm(z, g, b):
        # bert_pytorch LayerNorm: torch.std (unbiased, ddof=1) and (std + eps).
        mean = jnp.mean(z, axis=-1, keepdims=True)
        d = z - mean
        var = jnp.sum(d * d, axis=-1, keepdims=True) * (1.0 / (H - 1))
        # exact division here (review: approx reciprocal can fail tight parity).
        return g * d / (jnp.sqrt(var) + eps) + b

    def gelu(z):
        # tanh-approximation GELU, exactly as in bert_pytorch.
        return 0.5 * z * (1.0 + jnp.tanh(c0 * (z + 0.044715 * z * z * z)))

    def kernel(x_ref, bias_ref,
               wqkv_ref, bqkv_ref, wo_ref, bo_ref,
               ln1g_ref, ln1b_ref, ln2g_ref, ln2b_ref,
               w1_ref, b1_ref, w2_ref, b2_ref,
               out_ref, q_scr):
        x = x_ref[0]                      # (S, H) f32
        bias = bias_ref[0]                # (1, S) additive key bias (0 / -1e9)

        # ---- pre-LN + fused QKV projection, once for the whole sequence ----
        xn = layer_norm(x, ln1g_ref[...], ln1b_ref[...])
        qkv = jnp.dot(xn.astype(jnp.bfloat16), wqkv_ref[...],
                      preferred_element_type=jnp.float32) + bqkv_ref[...]
        # Q already carries the 1/sqrt(d_k) scale (folded into the weights).
        q_scr[...] = qkv[:, :H]
        kh = jnp.transpose(qkv[:, H:2 * H].reshape(S, n_heads, d_k),
                           (1, 0, 2)).astype(jnp.bfloat16)        # (nh, S, dk)
        vh = jnp.transpose(qkv[:, 2 * H:].reshape(S, n_heads, d_k),
                           (1, 0, 2)).astype(jnp.bfloat16)        # (nh, S, dk)

        # weights stay resident in VMEM across the q-tile loop
        wo = wo_ref[...]
        bo = bo_ref[...]
        ln2g = ln2g_ref[...]
        ln2b = ln2b_ref[...]
        w1 = w1_ref[...]
        b1 = b1_ref[...]
        w2 = w2_ref[...]
        b2 = b2_ref[...]

        def process_tile(r0):
            x_t = x_ref[0, pl.ds(r0, tile_q), :]                  # (tq, H) residual
            q_t = q_scr[pl.ds(r0, tile_q), :]                     # (tq, H) f32
            qh = jnp.transpose(q_t.reshape(tile_q, n_heads, d_k),
                               (1, 0, 2)).astype(jnp.bfloat16)    # (nh, tq, dk)

            # ----- attention for this q-tile (batched over heads, bf16 MXU) -----
            s = jnp.einsum('hqd,hkd->hqk', qh, kh,
                           preferred_element_type=jnp.float32)    # (nh, tq, S)
            s = s + bias[None, :, :]
            s = s - jnp.max(s, axis=-1, keepdims=True)
            if bf16_transcendentals:
                p = jnp.exp(s.astype(jnp.bfloat16))               # bf16 EUP
                denom = jnp.sum(p, axis=-1, keepdims=True, dtype=jnp.float32)
            else:
                p_f = jnp.exp(s)
                denom = jnp.sum(p_f, axis=-1, keepdims=True)
                p = p_f.astype(jnp.bfloat16)

            ctx = jnp.einsum('hqk,hkd->hqd', p, vh,
                             preferred_element_type=jnp.float32)  # (nh, tq, dk)
            # normalize AFTER the PV matmul: per-row 1/denom over dk, not over S.
            ctx = ctx * pl.reciprocal(denom, approx=True)
            ctx = jnp.transpose(ctx, (1, 0, 2)).reshape(tile_q, H)

            attn = jnp.dot(ctx.astype(jnp.bfloat16), wo,
                           preferred_element_type=jnp.float32) + bo
            # TODO(synk): dropout layers are stochastic; eval-mode identity here.
            h = x_t + attn

            # ----- feed-forward sublayer (pre-LN, residual) for this q-tile -----
            hn = layer_norm(h, ln2g, ln2b)
            h1 = jnp.dot(hn.astype(jnp.bfloat16), w1,
                         preferred_element_type=jnp.float32) + b1
            if bf16_transcendentals:
                h1a = gelu(h1.astype(jnp.bfloat16))               # bf16 VPU+EUP
            else:
                h1a = gelu(h1).astype(jnp.bfloat16)
            ffn = jnp.dot(h1a, w2, preferred_element_type=jnp.float32) + b2

            out_ref[0, pl.ds(r0, tile_q), :] = (h + ffn).astype(out_ref.dtype)

        if n_tiles == 1:
            process_tile(0)
        else:
            @pl.loop(0, n_tiles)
            def _(t):
                process_tile(pl.multiple_of(t * tile_q, tile_q))

    return kernel


def transformer_block(x, attn_bias, lp, n_heads, *, tile_q=128,
                      single_buffer_weights=True):
    """Apply one transformer block via a Pallas kernel (grid over batch)."""
    B, S, H = x.shape
    tq = _pick_tile_q(S, tile_q)
    kernel = make_transformer_block_kernel(S, H, n_heads, tq, _BF16_TRANSCENDENTALS)

    names = ('wqkv', 'bqkv', 'wo', 'bo', 'ln1g', 'ln1b', 'ln2g', 'ln2b',
             'w1', 'b1', 'w2', 'b2')
    weights = [lp[n] for n in names]

    def weight_spec(a):
        nd = a.ndim
        kwargs = {}
        if single_buffer_weights:
            # grid-invariant input: double buffering buys nothing, halves VMEM use.
            kwargs['pipeline_mode'] = pl.Buffered(buffer_count=1)
        return pl.BlockSpec(a.shape, lambda b, _n=nd: (0,) * _n, **kwargs)

    in_specs = [pl.BlockSpec((1, S, H), lambda b: (b, 0, 0)),   # activations
                pl.BlockSpec((1, 1, S), lambda b: (b, 0, 0))]   # additive key bias
    in_specs += [weight_spec(w) for w in weights]

    d_ff = lp['w1'].shape[1]
    flops = B * (24 * S * H * H + 4 * S * S * H)
    transcendentals = B * (n_heads * S * S + S * d_ff)          # softmax exp + GELU tanh
    weight_bytes = sum(int(w.size) * w.dtype.itemsize for w in weights)
    bytes_accessed = 2 * B * S * H * 4 + B * S * 4 + weight_bytes

    return pl.pallas_call(
        kernel,
        out_shape=jax.ShapeDtypeStruct((B, S, H), jnp.float32),
        grid=(B,),
        in_specs=in_specs,
        out_specs=pl.BlockSpec((1, S, H), lambda b: (b, 0, 0)),
        scratch_shapes=[pltpu.VMEM((S, H), jnp.float32)],       # resident Q
        compiler_params=pltpu.CompilerParams(
            dimension_semantics=("parallel",),
            vmem_limit_bytes=_VMEM_LIMIT),
        cost_estimate=pl.CostEstimate(flops=flops,
                                      transcendentals=transcendentals,
                                      bytes_accessed=bytes_accessed),
    )(x, attn_bias, *weights)


# ----------------------------------------------------------------------------
# Plain-JAX glue: embeddings + parameter init + full BERT forward.
# ----------------------------------------------------------------------------
def positional_encoding(S, H):
    position = jnp.arange(S, dtype=jnp.float32)[:, None]
    div_term = jnp.exp(jnp.arange(0, H, 2, dtype=jnp.float32)
                       * (-(math.log(10000.0) / H)))
    pe = jnp.zeros((S, H), jnp.float32)
    pe = pe.at[:, 0::2].set(jnp.sin(position * div_term))
    pe = pe.at[:, 1::2].set(jnp.cos(position * div_term))
    return pe


def init_params(key, vocab_size, H, n_heads, n_layers):
    d_ff = 4 * H
    d_k = H // n_heads
    scale = 1.0 / math.sqrt(d_k)
    std = 0.02
    keys = iter(jax.random.split(key, 2 + n_layers * 6))

    def dense_f32(k, shape):
        return (std * jax.random.normal(k, shape)).astype(jnp.float32)

    params = {}
    params['token_emb'] = dense_f32(next(keys), (vocab_size, H)).at[0].set(0.0)  # padding_idx=0
    params['seg_emb'] = dense_f32(next(keys), (3, H)).at[0].set(0.0)             # padding_idx=0

    layers = []
    for _ in range(n_layers):
        wq = dense_f32(next(keys), (H, H))
        wk = dense_f32(next(keys), (H, H))
        wv = dense_f32(next(keys), (H, H))
        # fused QKV with the 1/sqrt(d_k) attention scale folded into the Q block;
        # matmul weights live in HBM as bf16 (halves DMA, feeds the bf16 MXU).
        wqkv = jnp.concatenate([wq * scale, wk, wv], axis=1).astype(jnp.bfloat16)
        lp = {
            'wqkv': wqkv,
            'bqkv': jnp.zeros((1, 3 * H), jnp.float32),
            'wo': dense_f32(next(keys), (H, H)).astype(jnp.bfloat16),
            'bo': jnp.zeros((1, H), jnp.float32),
            'ln1g': jnp.ones((1, H), jnp.float32), 'ln1b': jnp.zeros((1, H), jnp.float32),
            'ln2g': jnp.ones((1, H), jnp.float32), 'ln2b': jnp.zeros((1, H), jnp.float32),
            'w1': dense_f32(next(keys), (H, d_ff)).astype(jnp.bfloat16),
            'b1': jnp.zeros((1, d_ff), jnp.float32),
            'w2': dense_f32(next(keys), (d_ff, H)).astype(jnp.bfloat16),
            'b2': jnp.zeros((1, H), jnp.float32),
        }
        layers.append(lp)
    params['layers'] = layers
    return params


def bert_forward(tokens, segments, params, n_heads):
    B, S = tokens.shape
    H = params['token_emb'].shape[1]

    # torch: mask = (x > 0).unsqueeze(1).repeat(1, S, 1).unsqueeze(1) then
    # masked_fill(mask == 0, -1e9); it depends only on the key position, so pass
    # a compact (B, 1, S) additive bias instead of the (B, S, S) mask.
    attn_bias = jnp.where(tokens > 0, 0.0, -1e9).astype(jnp.float32)[:, None, :]

    # BERTEmbedding: token + sinusoidal positional + segment (dropout = identity).
    x = (params['token_emb'][tokens]
         + positional_encoding(S, H)[None, :, :]
         + params['seg_emb'][segments]).astype(jnp.float32)

    single_buffer = True
    for i, lp in enumerate(params['layers']):
        if i == 0:
            try:
                y = transformer_block(x, attn_bias, lp, n_heads,
                                      single_buffer_weights=True)
                y = jax.block_until_ready(y)
            except Exception:
                # TODO(synk): pipeline_mode=pl.Buffered(1) not supported on this
                # jax build; fall back to default double-buffered weight specs.
                single_buffer = False
                y = transformer_block(x, attn_bias, lp, n_heads,
                                      single_buffer_weights=False)
            x = y
        else:
            x = transformer_block(x, attn_bias, lp, n_heads,
                                  single_buffer_weights=single_buffer)
    return x


if __name__ == "__main__":
    B, S, H, n_heads, n_layers, vocab = 2, 8, 32, 4, 2, 64

    key = jax.random.PRNGKey(0)
    k_tok, k_seg, k_param = jax.random.split(key, 3)

    tokens = jax.random.randint(k_tok, (B, S), 1, vocab, dtype=jnp.int32)
    tokens = tokens.at[1, -2:].set(0)  # padding to exercise the mask path
    segments = jax.random.randint(k_seg, (B, S), 1, 3, dtype=jnp.int32)

    params = init_params(k_param, vocab, H, n_heads, n_layers)

    out = bert_forward(tokens, segments, params, n_heads)
    out = jax.block_until_ready(out)
    assert out.shape == (B, S, H) and out.dtype == jnp.float32
    assert bool(jnp.all(jnp.isfinite(out)))
    print("KERNEL_OK")
</pallas_src>

<mosaic_0001>
module attributes {stable_mosaic.version = 11 : i64} {
  func.func @kernel(%arg0: i32, %arg1: memref<1x8x32xf32, #tpu.memory_space<vmem>>, %arg2: memref<1x1x8xf32, #tpu.memory_space<vmem>>, %arg3: memref<32x96xbf16, #tpu.memory_space<vmem>>, %arg4: memref<1x96xf32, #tpu.memory_space<vmem>>, %arg5: memref<32x32xbf16, #tpu.memory_space<vmem>>, %arg6: memref<1x32xf32, #tpu.memory_space<vmem>>, %arg7: memref<1x32xf32, #tpu.memory_space<vmem>>, %arg8: memref<1x32xf32, #tpu.memory_space<vmem>>, %arg9: memref<1x32xf32, #tpu.memory_space<vmem>>, %arg10: memref<1x32xf32, #tpu.memory_space<vmem>>, %arg11: memref<32x128xbf16, #tpu.memory_space<vmem>>, %arg12: memref<1x128xf32, #tpu.memory_space<vmem>>, %arg13: memref<128x32xbf16, #tpu.memory_space<vmem>>, %arg14: memref<1x32xf32, #tpu.memory_space<vmem>>, %arg15: memref<1x8x32xf32, #tpu.memory_space<vmem>>, %arg16: memref<8x32xf32, #tpu.memory_space<vmem>>) attributes {dimension_semantics = [#tpu.dimension_semantics<parallel>], iteration_bounds = array<i64: 2>, scalar_prefetch = 0 : i64, scratch_operands = 1 : i64, tpu.core_type = #tpu.core_type<tc>, window_params = [{transform_indices = @transform_0, window_bounds = array<i64: 1, 8, 32>}, {transform_indices = @transform_1, window_bounds = array<i64: 1, 1, 8>}, {pipeline_mode = #tpu.pipeline_mode<synchronous>, transform_indices = @transform_2, window_bounds = array<i64: 32, 96>}, {pipeline_mode = #tpu.pipeline_mode<synchronous>, transform_indices = @transform_3, window_bounds = array<i64: 1, 96>}, {pipeline_mode = #tpu.pipeline_mode<synchronous>, transform_indices = @transform_4, window_bounds = array<i64: 32, 32>}, {pipeline_mode = #tpu.pipeline_mode<synchronous>, transform_indices = @transform_5, window_bounds = array<i64: 1, 32>}, {pipeline_mode = #tpu.pipeline_mode<synchronous>, transform_indices = @transform_6, window_bounds = array<i64: 1, 32>}, {pipeline_mode = #tpu.pipeline_mode<synchronous>, transform_indices = @transform_7, window_bounds = array<i64: 1, 32>}, {pipeline_mode = #tpu.pipeline_mode<synchronous>, transform_indices = @transform_8, window_bounds = array<i64: 1, 32>}, {pipeline_mode = #tpu.pipeline_mode<synchronous>, transform_indices = @transform_9, window_bounds = array<i64: 1, 32>}, {pipeline_mode = #tpu.pipeline_mode<synchronous>, transform_indices = @transform_10, window_bounds = array<i64: 32, 128>}, {pipeline_mode = #tpu.pipeline_mode<synchronous>, transform_indices = @transform_11, window_bounds = array<i64: 1, 128>}, {pipeline_mode = #tpu.pipeline_mode<synchronous>, transform_indices = @transform_12, window_bounds = array<i64: 128, 32>}, {pipeline_mode = #tpu.pipeline_mode<synchronous>, transform_indices = @transform_13, window_bounds = array<i64: 1, 32>}, {transform_indices = @transform_14, window_bounds = array<i64: 1, 8, 32>}]} {
    %c0 = arith.constant 0 : index
    %c0_0 = arith.constant 0 : index
    %c0_1 = arith.constant 0 : index
    %0 = vector.load %arg1[%c0, %c0_0, %c0_1] : memref<1x8x32xf32, #tpu.memory_space<vmem>>, vector<1x8x32xf32>
    %1 = vector.shape_cast %0 : vector<1x8x32xf32> to vector<8x32xf32>
    %c0_2 = arith.constant 0 : index
    %c0_3 = arith.constant 0 : index
    %c0_4 = arith.constant 0 : index
    %2 = vector.load %arg2[%c0_2, %c0_3, %c0_4] : memref<1x1x8xf32, #tpu.memory_space<vmem>>, vector<1x1x8xf32>
    %3 = vector.shape_cast %2 : vector<1x1x8xf32> to vector<1x8xf32>
    %c0_5 = arith.constant 0 : index
    %c0_6 = arith.constant 0 : index
    %4 = vector.load %arg7[%c0_5, %c0_6] : memref<1x32xf32, #tpu.memory_space<vmem>>, vector<1x32xf32>
    %c0_7 = arith.constant 0 : index
    %c0_8 = arith.constant 0 : index
    %5 = vector.load %arg8[%c0_7, %c0_8] : memref<1x32xf32, #tpu.memory_space<vmem>>, vector<1x32xf32>
    %cst = arith.constant dense<0.000000e+00> : vector<8xf32>
    %6 = vector.multi_reduction <add>, %1, %cst [1] : vector<8x32xf32> to vector<8xf32>
    %7 = vector.shape_cast %6 : vector<8xf32> to vector<8x1xf32>
    %cst_9 = arith.constant 3.200000e+01 : f32
    %8 = vector.broadcast %cst_9 : f32 to vector<8x1xf32>
    %9 = arith.divf %7, %8 : vector<8x1xf32>
    %10 = vector.broadcast %9 : vector<8x1xf32> to vector<8x32xf32>
    %11 = arith.subf %1, %10 : vector<8x32xf32>
    %12 = arith.mulf %11, %11 : vector<8x32xf32>
    %cst_10 = arith.constant dense<0.000000e+00> : vector<8xf32>
    %13 = vector.multi_reduction <add>, %12, %cst_10 [1] : vector<8x32xf32> to vector<8xf32>
    %14 = vector.shape_cast %13 : vector<8xf32> to vector<8x1xf32>
    %cst_11 = arith.constant 0.0322580636 : f32
    %15 = vector.broadcast %cst_11 : f32 to vector<8x1xf32>
    %16 = arith.mulf %14, %15 : vector<8x1xf32>
    %17 = vector.broadcast %4 : vector<1x32xf32> to vector<8x32xf32>
    %18 = arith.mulf %17, %11 : vector<8x32xf32>
    %19 = math.sqrt %16 : vector<8x1xf32>
    %cst_12 = arith.constant 9.99999997E-7 : f32
    %20 = vector.broadcast %cst_12 : f32 to vector<8x1xf32>
    %21 = arith.addf %19, %20 : vector<8x1xf32>
    %22 = vector.broadcast %21 : vector<8x1xf32> to vector<8x32xf32>
    %23 = arith.divf %18, %22 : vector<8x32xf32>
    %24 = vector.broadcast %5 : vector<1x32xf32> to vector<8x32xf32>
    %25 = arith.addf %23, %24 : vector<8x32xf32>
    %26 = arith.truncf %25 : vector<8x32xf32> to vector<8x32xbf16>
    %c0_13 = arith.constant 0 : index
    %c0_14 = arith.constant 0 : index
    %27 = vector.load %arg3[%c0_13, %c0_14] : memref<32x96xbf16, #tpu.memory_space<vmem>>, vector<32x96xbf16>
    %cst_15 = arith.constant dense<0.000000e+00> : vector<8x96xf32>
    %28 = tpu.matmul %26, %27, %cst_15 {dimension_numbers = #tpu.dot_dimension_numbers<[1], [0], [0], [1], [0, 0, 1, 1], [], []>} : vector<8x32xbf16>, vector<32x96xbf16>, vector<8x96xf32> -> vector<8x96xf32>
    %c0_16 = arith.constant 0 : index
    %c0_17 = arith.constant 0 : index
    %29 = vector.load %arg4[%c0_16, %c0_17] : memref<1x96xf32, #tpu.memory_space<vmem>>, vector<1x96xf32>
    %30 = vector.broadcast %29 : vector<1x96xf32> to vector<8x96xf32>
    %31 = arith.addf %28, %30 : vector<8x96xf32>
    %32 = vector.extract_strided_slice %31 {offsets = [0, 0], sizes = [8, 32], strides = [1, 1]} : vector<8x96xf32> to vector<8x32xf32>
    %c0_18 = arith.constant 0 : index
    %c0_19 = arith.constant 0 : index
    %33 = vector.load %arg16[%c0_18, %c0_19] : memref<8x32xf32, #tpu.memory_space<vmem>>, vector<8x32xf32>
    tpu.vector_store %arg16[%c0_18, %c0_19], %32 {strides = array<i32>} : memref<8x32xf32, #tpu.memory_space<vmem>>, vector<8x32xf32>,
    %34 = vector.extract_strided_slice %31 {offsets = [0, 32], sizes = [8, 32], strides = [1, 1]} : vector<8x96xf32> to vector<8x32xf32>
    %35 = vector.shape_cast %34 : vector<8x32xf32> to vector<8x4x8xf32>
    %36 = tpu.transpose %35, [1, 0, 2] : vector<8x4x8xf32> -> vector<4x8x8xf32>
    %37 = arith.truncf %36 : vector<4x8x8xf32> to vector<4x8x8xbf16>
    %38 = vector.extract_strided_slice %31 {offsets = [0, 64], sizes = [8, 32], strides = [1, 1]} : vector<8x96xf32> to vector<8x32xf32>
    %39 = vector.shape_cast %38 : vector<8x32xf32> to vector<8x4x8xf32>
    %40 = tpu.transpose %39, [1, 0, 2] : vector<8x4x8xf32> -> vector<4x8x8xf32>
    %41 = arith.truncf %40 : vector<4x8x8xf32> to vector<4x8x8xbf16>
    %c0_20 = arith.constant 0 : index
    %c0_21 = arith.constant 0 : index
    %42 = vector.load %arg5[%c0_20, %c0_21] : memref<32x32xbf16, #tpu.memory_space<vmem>>, vector<32x32xbf16>
    %c0_22 = arith.constant 0 : index
    %c0_23 = arith.constant 0 : index
    %43 = vector.load %arg6[%c0_22, %c0_23] : memref<1x32xf32, #tpu.memory_space<vmem>>, vector<1x32xf32>
    %c0_24 = arith.constant 0 : index
    %c0_25 = arith.constant 0 : index
    %44 = vector.load %arg9[%c0_24, %c0_25] : memref<1x32xf32, #tpu.memory_space<vmem>>, vector<1x32xf32>
    %c0_26 = arith.constant 0 : index
    %c0_27 = arith.constant 0 : index
    %45 = vector.load %arg10[%c0_26, %c0_27] : memref<1x32xf32, #tpu.memory_space<vmem>>, vector<1x32xf32>
    %c0_28 = arith.constant 0 : index
    %c0_29 = arith.constant 0 : index
    %46 = vector.load %arg11[%c0_28, %c0_29] : memref<32x128xbf16, #tpu.memory_space<vmem>>, vector<32x128xbf16>
    %c0_30 = arith.constant 0 : index
    %c0_31 = arith.constant 0 : index
    %47 = vector.load %arg12[%c0_30, %c0_31] : memref<1x128xf32, #tpu.memory_space<vmem>>, vector<1x128xf32>
    %c0_32 = arith.constant 0 : index
    %c0_33 = arith.constant 0 : index
    %48 = vector.load %arg13[%c0_32, %c0_33] : memref<128x32xbf16, #tpu.memory_space<vmem>>, vector<128x32xbf16>
    %c0_34 = arith.constant 0 : index
    %c0_35 = arith.constant 0 : index
    %49 = vector.load %arg14[%c0_34, %c0_35] : memref<1x32xf32, #tpu.memory_space<vmem>>, vector<1x32xf32>
    %c0_36 = arith.constant 0 : index
    %c0_37 = arith.constant 0 : index
    %c0_38 = arith.constant 0 : index
    %50 = vector.load %arg1[%c0_36, %c0_37, %c0_38] : memref<1x8x32xf32, #tpu.memory_space<vmem>>, vector<1x8x32xf32>
    %51 = vector.shape_cast %50 : vector<1x8x32xf32> to vector<8x32xf32>
    %c0_39 = arith.constant 0 : index
    %c0_40 = arith.constant 0 : index
    %52 = vector.load %arg16[%c0_39, %c0_40] : memref<8x32xf32, #tpu.memory_space<vmem>>, vector<8x32xf32>
    %53 = vector.shape_cast %52 : vector<8x32xf32> to vector<8x4x8xf32>
    %54 = tpu.transpose %53, [1, 0, 2] : vector<8x4x8xf32> -> vector<4x8x8xf32>
    %55 = arith.truncf %54 : vector<4x8x8xf32> to vector<4x8x8xbf16>
    "tpu.trace_start"() <{level = 10 : i32, message = "hqd,hkd->hqk"}> : () -> ()
    %cst_41 = arith.constant dense<0.000000e+00> : vector<4x8x8xf32>
    %56 = tpu.matmul %55, %37, %cst_41 {dimension_numbers = #tpu.dot_dimension_numbers<[2], [2], [1], [1], [0, 0, 0, 1, 1, 1], [0], [0]>} : vector<4x8x8xbf16>, vector<4x8x8xbf16>, vector<4x8x8xf32> -> vector<4x8x8xf32>
    "tpu.trace_stop"() : () -> ()
    %57 = vector.shape_cast %3 : vector<1x8xf32> to vector<1x1x8xf32>
    %58 = vector.broadcast %57 : vector<1x1x8xf32> to vector<4x8x8xf32>
    %59 = arith.addf %56, %58 : vector<4x8x8xf32>
    %cst_42 = arith.constant dense<0xFF800000> : vector<4x8xf32>
    %60 = vector.multi_reduction <maximumf>, %59, %cst_42 [2] : vector<4x8x8xf32> to vector<4x8xf32>
    %61 = vector.shape_cast %60 : vector<4x8xf32> to vector<4x8x1xf32>
    %62 = vector.broadcast %61 : vector<4x8x1xf32> to vector<4x8x8xf32>
    %63 = arith.subf %59, %62 : vector<4x8x8xf32>
    %64 = math.exp %63 : vector<4x8x8xf32>
    %cst_43 = arith.constant dense<0.000000e+00> : vector<4x8xf32>
    %65 = vector.multi_reduction <add>, %64, %cst_43 [2] : vector<4x8x8xf32> to vector<4x8xf32>
    %66 = vector.shape_cast %65 : vector<4x8xf32> to vector<4x8x1xf32>
    %67 = arith.truncf %64 : vector<4x8x8xf32> to vector<4x8x8xbf16>
    "tpu.trace_start"() <{level = 10 : i32, message = "hqk,hkd->hqd"}> : () -> ()
    %cst_44 = arith.constant dense<0.000000e+00> : vector<4x8x8xf32>
    %68 = tpu.matmul %67, %41, %cst_44 {dimension_numbers = #tpu.dot_dimension_numbers<[2], [1], [1], [2], [0, 0, 0, 1, 1, 2], [0], [0]>} : vector<4x8x8xbf16>, vector<4x8x8xbf16>, vector<4x8x8xf32> -> vector<4x8x8xf32>
    "tpu.trace_stop"() : () -> ()
    %69 = tpu.reciprocal %66 {approx = true} : vector<4x8x1xf32> -> vector<4x8x1xf32>
    %70 = vector.broadcast %69 : vector<4x8x1xf32> to vector<4x8x8xf32>
    %71 = arith.mulf %68, %70 : vector<4x8x8xf32>
    %72 = tpu.transpose %71, [1, 0, 2] : vector<4x8x8xf32> -> vector<8x4x8xf32>
    %73 = vector.shape_cast %72 : vector<8x4x8xf32> to vector<8x32xf32>
    %74 = arith.truncf %73 : vector<8x32xf32> to vector<8x32xbf16>
    %cst_45 = arith.constant dense<0.000000e+00> : vector<8x32xf32>
    %75 = tpu.matmul %74, %42, %cst_45 {dimension_numbers = #tpu.dot_dimension_numbers<[1], [0], [0], [1], [0, 0, 1, 1], [], []>} : vector<8x32xbf16>, vector<32x32xbf16>, vector<8x32xf32> -> vector<8x32xf32>
    %76 = vector.broadcast %43 : vector<1x32xf32> to vector<8x32xf32>
    %77 = arith.addf %75, %76 : vector<8x32xf32>
    %78 = arith.addf %51, %77 : vector<8x32xf32>
    %cst_46 = arith.constant dense<0.000000e+00> : vector<8xf32>
    %79 = vector.multi_reduction <add>, %78, %cst_46 [1] : vector<8x32xf32> to vector<8xf32>
    %80 = vector.shape_cast %79 : vector<8xf32> to vector<8x1xf32>
    %cst_47 = arith.constant 3.200000e+01 : f32
    %81 = vector.broadcast %cst_47 : f32 to vector<8x1xf32>
    %82 = arith.divf %80, %81 : vector<8x1xf32>
    %83 = vector.broadcast %82 : vector<8x1xf32> to vector<8x32xf32>
    %84 = arith.subf %78, %83 : vector<8x32xf32>
    %85 = arith.mulf %84, %84 : vector<8x32xf32>
    %cst_48 = arith.constant dense<0.000000e+00> : vector<8xf32>
    %86 = vector.multi_reduction <add>, %85, %cst_48 [1] : vector<8x32xf32> to vector<8xf32>
    %87 = vector.shape_cast %86 : vector<8xf32> to vector<8x1xf32>
    %cst_49 = arith.constant 0.0322580636 : f32
    %88 = vector.broadcast %cst_49 : f32 to vector<8x1xf32>
    %89 = arith.mulf %87, %88 : vector<8x1xf32>
    %90 = vector.broadcast %44 : vector<1x32xf32> to vector<8x32xf32>
    %91 = arith.mulf %90, %84 : vector<8x32xf32>
    %92 = math.sqrt %89 : vector<8x1xf32>
    %cst_50 = arith.constant 9.99999997E-7 : f32
    %93 = vector.broadcast %cst_50 : f32 to vector<8x1xf32>
    %94 = arith.addf %92, %93 : vector<8x1xf32>
    %95 = vector.broadcast %94 : vector<8x1xf32> to vector<8x32xf32>
    %96 = arith.divf %91, %95 : vector<8x32xf32>
    %97 = vector.broadcast %45 : vector<1x32xf32> to vector<8x32xf32>
    %98 = arith.addf %96, %97 : vector<8x32xf32>
    %99 = arith.truncf %98 : vector<8x32xf32> to vector<8x32xbf16>
    %cst_51 = arith.constant dense<0.000000e+00> : vector<8x128xf32>
    %100 = tpu.matmul %99, %46, %cst_51 {dimension_numbers = #tpu.dot_dimension_numbers<[1], [0], [0], [1], [0, 0, 1, 1], [], []>} : vector<8x32xbf16>, vector<32x128xbf16>, vector<8x128xf32> -> vector<8x128xf32>
    %101 = vector.broadcast %47 : vector<1x128xf32> to vector<8x128xf32>
    %102 = arith.addf %100, %101 : vector<8x128xf32>
    %cst_52 = arith.constant 5.000000e-01 : f32
    %103 = vector.broadcast %cst_52 : f32 to vector<8x128xf32>
    %104 = arith.mulf %103, %102 : vector<8x128xf32>
    %cst_53 = arith.constant 4.471500e-02 : f32
    %105 = vector.broadcast %cst_53 : f32 to vector<8x128xf32>
    %106 = arith.mulf %105, %102 : vector<8x128xf32>
    %107 = arith.mulf %106, %102 : vector<8x128xf32>
    %108 = arith.mulf %107, %102 : vector<8x128xf32>
    %109 = arith.addf %102, %108 : vector<8x128xf32>
    %cst_54 = arith.constant 0.797884583 : f32
    %110 = vector.broadcast %cst_54 : f32 to vector<8x128xf32>
    %111 = arith.mulf %110, %109 : vector<8x128xf32>
    %112 = math.tanh %111 : vector<8x128xf32>
    %cst_55 = arith.constant 1.000000e+00 : f32
    %113 = vector.broadcast %cst_55 : f32 to vector<8x128xf32>
    %114 = arith.addf %113, %112 : vector<8x128xf32>
    %115 = arith.mulf %104, %114 : vector<8x128xf32>
    %116 = arith.truncf %115 : vector<8x128xf32> to vector<8x128xbf16>
    %cst_56 = arith.constant dense<0.000000e+00> : vector<8x32xf32>
    %117 = tpu.matmul %116, %48, %cst_56 {dimension_numbers = #tpu.dot_dimension_numbers<[1], [0], [0], [1], [0, 0, 1, 1], [], []>} : vector<8x128xbf16>, vector<128x32xbf16>, vector<8x32xf32> -> vector<8x32xf32>
    %118 = vector.broadcast %49 : vector<1x32xf32> to vector<8x32xf32>
    %119 = arith.addf %117, %118 : vector<8x32xf32>
    %120 = arith.addf %78, %119 : vector<8x32xf32>
    %c0_57 = arith.constant 0 : index
    %c0_58 = arith.constant 0 : index
    %c0_59 = arith.constant 0 : index
    %121 = vector.load %arg15[%c0_57, %c0_58, %c0_59] : memref<1x8x32xf32, #tpu.memory_space<vmem>>, vector<1x8x32xf32>
    %122 = vector.shape_cast %121 : vector<1x8x32xf32> to vector<8x32xf32>
    %123 = vector.shape_cast %120 : vector<8x32xf32> to vector<1x8x32xf32>
    tpu.vector_store %arg15[%c0_57, %c0_58, %c0_59], %123 {strides = array<i32>} : memref<1x8x32xf32, #tpu.memory_space<vmem>>, vector<1x8x32xf32>,
    return
  }
  func.func @transform_0(%arg0: i32) -> (i32, i32, i32) {
    %c0_i32 = arith.constant 0 : i32
    %c0_i32_0 = arith.constant 0 : i32
    %c0_i32_1 = arith.constant 0 : i32
    return %arg0, %c0_i32, %c0_i32_0 : i32, i32, i32
  }
  func.func @transform_1(%arg0: i32) -> (i32, i32, i32) {
    %c0_i32 = arith.constant 0 : i32
    %c0_i32_0 = arith.constant 0 : i32
    %c0_i32_1 = arith.constant 0 : i32
    return %arg0, %c0_i32, %c0_i32_0 : i32, i32, i32
  }
  func.func @transform_2(%arg0: i32) -> (i32, i32) {
    %c0_i32 = arith.constant 0 : i32
    %c0_i32_0 = arith.constant 0 : i32
    %c0_i32_1 = arith.constant 0 : i32
    return %c0_i32, %c0_i32_0 : i32, i32
  }
  func.func @transform_3(%arg0: i32) -> (i32, i32) {
    %c0_i32 = arith.constant 0 : i32
    %c0_i32_0 = arith.constant 0 : i32
    %c0_i32_1 = arith.constant 0 : i32
    return %c0_i32, %c0_i32_0 : i32, i32
  }
  func.func @transform_4(%arg0: i32) -> (i32, i32) {
    %c0_i32 = arith.constant 0 : i32
    %c0_i32_0 = arith.constant 0 : i32
    %c0_i32_1 = arith.constant 0 : i32
    return %c0_i32, %c0_i32_0 : i32, i32
  }
  func.func @transform_5(%arg0: i32) -> (i32, i32) {
    %c0_i32 = arith.constant 0 : i32
    %c0_i32_0 = arith.constant 0 : i32
    %c0_i32_1 = arith.constant 0 : i32
    return %c0_i32, %c0_i32_0 : i32, i32
  }
  func.func @transform_6(%arg0: i32) -> (i32, i32) {
    %c0_i32 = arith.constant 0 : i32
    %c0_i32_0 = arith.constant 0 : i32
    %c0_i32_1 = arith.constant 0 : i32
    return %c0_i32, %c0_i32_0 : i32, i32
  }
  func.func @transform_7(%arg0: i32) -> (i32, i32) {
    %c0_i32 = arith.constant 0 : i32
    %c0_i32_0 = arith.constant 0 : i32
    %c0_i32_1 = arith.constant 0 : i32
    return %c0_i32, %c0_i32_0 : i32, i32
  }
  func.func @transform_8(%arg0: i32) -> (i32, i32) {
    %c0_i32 = arith.constant 0 : i32
    %c0_i32_0 = arith.constant 0 : i32
    %c0_i32_1 = arith.constant 0 : i32
    return %c0_i32, %c0_i32_0 : i32, i32
  }
  func.func @transform_9(%arg0: i32) -> (i32, i32) {
    %c0_i32 = arith.constant 0 : i32
    %c0_i32_0 = arith.constant 0 : i32
    %c0_i32_1 = arith.constant 0 : i32
    return %c0_i32, %c0_i32_0 : i32, i32
  }
  func.func @transform_10(%arg0: i32) -> (i32, i32) {
    %c0_i32 = arith.constant 0 : i32
    %c0_i32_0 = arith.constant 0 : i32
    %c0_i32_1 = arith.constant 0 : i32
    return %c0_i32, %c0_i32_0 : i32, i32
  }
  func.func @transform_11(%arg0: i32) -> (i32, i32) {
    %c0_i32 = arith.constant 0 : i32
    %c0_i32_0 = arith.constant 0 : i32
    %c0_i32_1 = arith.constant 0 : i32
    return %c0_i32, %c0_i32_0 : i32, i32
  }
  func.func @transform_12(%arg0: i32) -> (i32, i32) {
    %c0_i32 = arith.constant 0 : i32
    %c0_i32_0 = arith.constant 0 : i32
    %c0_i32_1 = arith.constant 0 : i32
    return %c0_i32, %c0_i32_0 : i32, i32
  }
  func.func @transform_13(%arg0: i32) -> (i32, i32) {
    %c0_i32 = arith.constant 0 : i32
    %c0_i32_0 = arith.constant 0 : i32
    %c0_i32_1 = arith.constant 0 : i32
    return %c0_i32, %c0_i32_0 : i32, i32
  }
  func.func @transform_14(%arg0: i32) -> (i32, i32, i32) {
    %c0_i32 = arith.constant 0 : i32
    %c0_i32_0 = arith.constant 0 : i32
    %c0_i32_1 = arith.constant 0 : i32
    return %arg0, %c0_i32, %c0_i32_0 : i32, i32, i32
  }
}

module attributes {stable_mosaic.version = 11 : i64} {
  func.func @kernel(%arg0: i32, %arg1: memref<1x8x32xf32, #tpu.memory_space<vmem>>, %arg2: memref<1x1x8xf32, #tpu.memory_space<vmem>>, %arg3: memref<32x96xbf16, #tpu.memory_space<vmem>>, %arg4: memref<1x96xf32, #tpu.memory_space<vmem>>, %arg5: memref<32x32xbf16, #tpu.memory_space<vmem>>, %arg6: memref<1x32xf32, #tpu.memory_space<vmem>>, %arg7: memref<1x32xf32, #tpu.memory_space<vmem>>, %arg8: memref<1x32xf32, #tpu.memory_space<vmem>>, %arg9: memref<1x32xf32, #tpu.memory_space<vmem>>, %arg10: memref<1x32xf32, #tpu.memory_space<vmem>>, %arg11: memref<32x128xbf16, #tpu.memory_space<vmem>>, %arg12: memref<1x128xf32, #tpu.memory_space<vmem>>, %arg13: memref<128x32xbf16, #tpu.memory_space<vmem>>, %arg14: memref<1x32xf32, #tpu.memory_space<vmem>>, %arg15: memref<1x8x32xf32, #tpu.memory_space<vmem>>, %arg16: memref<8x32xf32, #tpu.memory_space<vmem>>) attributes {dimension_semantics = [#tpu.dimension_semantics<parallel>], iteration_bounds = array<i64: 2>, scalar_prefetch = 0 : i64, scratch_operands = 1 : i64, tpu.core_type = #tpu.core_type<tc>, window_params = [{transform_indices = @transform_0, window_bounds = array<i64: 1, 8, 32>}, {transform_indices = @transform_1, window_bounds = array<i64: 1, 1, 8>}, {pipeline_mode = #tpu.pipeline_mode<synchronous>, transform_indices = @transform_2, window_bounds = array<i64: 32, 96>}, {pipeline_mode = #tpu.pipeline_mode<synchronous>, transform_indices = @transform_3, window_bounds = array<i64: 1, 96>}, {pipeline_mode = #tpu.pipeline_mode<synchronous>, transform_indices = @transform_4, window_bounds = array<i64: 32, 32>}, {pipeline_mode = #tpu.pipeline_mode<synchronous>, transform_indices = @transform_5, window_bounds = array<i64: 1, 32>}, {pipeline_mode = #tpu.pipeline_mode<synchronous>, transform_indices = @transform_6, window_bounds = array<i64: 1, 32>}, {pipeline_mode = #tpu.pipeline_mode<synchronous>, transform_indices = @transform_7, window_bounds = array<i64: 1, 32>}, {pipeline_mode = #tpu.pipeline_mode<synchronous>, transform_indices = @transform_8, window_bounds = array<i64: 1, 32>}, {pipeline_mode = #tpu.pipeline_mode<synchronous>, transform_indices = @transform_9, window_bounds = array<i64: 1, 32>}, {pipeline_mode = #tpu.pipeline_mode<synchronous>, transform_indices = @transform_10, window_bounds = array<i64: 32, 128>}, {pipeline_mode = #tpu.pipeline_mode<synchronous>, transform_indices = @transform_11, window_bounds = array<i64: 1, 128>}, {pipeline_mode = #tpu.pipeline_mode<synchronous>, transform_indices = @transform_12, window_bounds = array<i64: 128, 32>}, {pipeline_mode = #tpu.pipeline_mode<synchronous>, transform_indices = @transform_13, window_bounds = array<i64: 1, 32>}, {transform_indices = @transform_14, window_bounds = array<i64: 1, 8, 32>}]} {
    %c0 = arith.constant 0 : index
    %c0_0 = arith.constant 0 : index
    %c0_1 = arith.constant 0 : index
    %0 = vector.load %arg1[%c0, %c0_0, %c0_1] : memref<1x8x32xf32, #tpu.memory_space<vmem>>, vector<1x8x32xf32>
    %1 = vector.shape_cast %0 : vector<1x8x32xf32> to vector<8x32xf32>
    %c0_2 = arith.constant 0 : index
    %c0_3 = arith.constant 0 : index
    %c0_4 = arith.constant 0 : index
    %2 = vector.load %arg2[%c0_2, %c0_3, %c0_4] : memref<1x1x8xf32, #tpu.memory_space<vmem>>, vector<1x1x8xf32>
    %3 = vector.shape_cast %2 : vector<1x1x8xf32> to vector<1x8xf32>
    %c0_5 = arith.constant 0 : index
    %c0_6 = arith.constant 0 : index
    %4 = vector.load %arg7[%c0_5, %c0_6] : memref<1x32xf32, #tpu.memory_space<vmem>>, vector<1x32xf32>
    %c0_7 = arith.constant 0 : index
    %c0_8 = arith.constant 0 : index
    %5 = vector.load %arg8[%c0_7, %c0_8] : memref<1x32xf32, #tpu.memory_space<vmem>>, vector<1x32xf32>
    %cst = arith.constant dense<0.000000e+00> : vector<8xf32>
    %6 = vector.multi_reduction <add>, %1, %cst [1] : vector<8x32xf32> to vector<8xf32>
    %7 = vector.shape_cast %6 : vector<8xf32> to vector<8x1xf32>
    %cst_9 = arith.constant 3.200000e+01 : f32
    %8 = vector.broadcast %cst_9 : f32 to vector<8x1xf32>
    %9 = arith.divf %7, %8 : vector<8x1xf32>
    %10 = vector.broadcast %9 : vector<8x1xf32> to vector<8x32xf32>
    %11 = arith.subf %1, %10 : vector<8x32xf32>
    %12 = arith.mulf %11, %11 : vector<8x32xf32>
    %cst_10 = arith.constant dense<0.000000e+00> : vector<8xf32>
    %13 = vector.multi_reduction <add>, %12, %cst_10 [1] : vector<8x32xf32> to vector<8xf32>
    %14 = vector.shape_cast %13 : vector<8xf32> to vector<8x1xf32>
    %cst_11 = arith.constant 0.0322580636 : f32
    %15 = vector.broadcast %cst_11 : f32 to vector<8x1xf32>
    %16 = arith.mulf %14, %15 : vector<8x1xf32>
    %17 = vector.broadcast %4 : vector<1x32xf32> to vector<8x32xf32>
    %18 = arith.mulf %17, %11 : vector<8x32xf32>
    %19 = math.sqrt %16 : vector<8x1xf32>
    %cst_12 = arith.constant 9.99999997E-7 : f32
    %20 = vector.broadcast %cst_12 : f32 to vector<8x1xf32>
    %21 = arith.addf %19, %20 : vector<8x1xf32>
    %22 = vector.broadcast %21 : vector<8x1xf32> to vector<8x32xf32>
    %23 = arith.divf %18, %22 : vector<8x32xf32>
    %24 = vector.broadcast %5 : vector<1x32xf32> to vector<8x32xf32>
    %25 = arith.addf %23, %24 : vector<8x32xf32>
    %26 = arith.truncf %25 : vector<8x32xf32> to vector<8x32xbf16>
    %c0_13 = arith.constant 0 : index
    %c0_14 = arith.constant 0 : index
    %27 = vector.load %arg3[%c0_13, %c0_14] : memref<32x96xbf16, #tpu.memory_space<vmem>>, vector<32x96xbf16>
    %cst_15 = arith.constant dense<0.000000e+00> : vector<8x96xf32>
    %28 = tpu.matmul %26, %27, %cst_15 {dimension_numbers = #tpu.dot_dimension_numbers<[1], [0], [0], [1], [0, 0, 1, 1], [], []>} : vector<8x32xbf16>, vector<32x96xbf16>, vector<8x96xf32> -> vector<8x96xf32>
    %c0_16 = arith.constant 0 : index
    %c0_17 = arith.constant 0 : index
    %29 = vector.load %arg4[%c0_16, %c0_17] : memref<1x96xf32, #tpu.memory_space<vmem>>, vector<1x96xf32>
    %30 = vector.broadcast %29 : vector<1x96xf32> to vector<8x96xf32>
    %31 = arith.addf %28, %30 : vector<8x96xf32>
    %32 = vector.extract_strided_slice %31 {offsets = [0, 0], sizes = [8, 32], strides = [1, 1]} : vector<8x96xf32> to vector<8x32xf32>
    %c0_18 = arith.constant 0 : index
    %c0_19 = arith.constant 0 : index
    %33 = vector.load %arg16[%c0_18, %c0_19] : memref<8x32xf32, #tpu.memory_space<vmem>>, vector<8x32xf32>
    tpu.vector_store %arg16[%c0_18, %c0_19], %32 {strides = array<i32>} : memref<8x32xf32, #tpu.memory_space<vmem>>, vector<8x32xf32>,
    %34 = vector.extract_strided_slice %31 {offsets = [0, 32], sizes = [8, 32], strides = [1, 1]} : vector<8x96xf32> to vector<8x32xf32>
    %35 = vector.shape_cast %34 : vector<8x32xf32> to vector<8x4x8xf32>
    %36 = tpu.transpose %35, [1, 0, 2] : vector<8x4x8xf32> -> vector<4x8x8xf32>
    %37 = arith.truncf %36 : vector<4x8x8xf32> to vector<4x8x8xbf16>
    %38 = vector.extract_strided_slice %31 {offsets = [0, 64], sizes = [8, 32], strides = [1, 1]} : vector<8x96xf32> to vector<8x32xf32>
    %39 = vector.shape_cast %38 : vector<8x32xf32> to vector<8x4x8xf32>
    %40 = tpu.transpose %39, [1, 0, 2] : vector<8x4x8xf32> -> vector<4x8x8xf32>
    %41 = arith.truncf %40 : vector<4x8x8xf32> to vector<4x8x8xbf16>
    %c0_20 = arith.constant 0 : index
    %c0_21 = arith.constant 0 : index
    %42 = vector.load %arg5[%c0_20, %c0_21] : memref<32x32xbf16, #tpu.memory_space<vmem>>, vector<32x32xbf16>
    %c0_22 = arith.constant 0 : index
    %c0_23 = arith.constant 0 : index
    %43 = vector.load %arg6[%c0_22, %c0_23] : memref<1x32xf32, #tpu.memory_space<vmem>>, vector<1x32xf32>
    %c0_24 = arith.constant 0 : index
    %c0_25 = arith.constant 0 : index
    %44 = vector.load %arg9[%c0_24, %c0_25] : memref<1x32xf32, #tpu.memory_space<vmem>>, vector<1x32xf32>
    %c0_26 = arith.constant 0 : index
    %c0_27 = arith.constant 0 : index
    %45 = vector.load %arg10[%c0_26, %c0_27] : memref<1x32xf32, #tpu.memory_space<vmem>>, vector<1x32xf32>
    %c0_28 = arith.constant 0 : index
    %c0_29 = arith.constant 0 : index
    %46 = vector.load %arg11[%c0_28, %c0_29] : memref<32x128xbf16, #tpu.memory_space<vmem>>, vector<32x128xbf16>
    %c0_30 = arith.constant 0 : index
    %c0_31 = arith.constant 0 : index
    %47 = vector.load %arg12[%c0_30, %c0_31] : memref<1x128xf32, #tpu.memory_space<vmem>>, vector<1x128xf32>
    %c0_32 = arith.constant 0 : index
    %c0_33 = arith.constant 0 : index
    %48 = vector.load %arg13[%c0_32, %c0_33] : memref<128x32xbf16, #tpu.memory_space<vmem>>, vector<128x32xbf16>
    %c0_34 = arith.constant 0 : index
    %c0_35 = arith.constant 0 : index
    %49 = vector.load %arg14[%c0_34, %c0_35] : memref<1x32xf32, #tpu.memory_space<vmem>>, vector<1x32xf32>
    %c0_36 = arith.constant 0 : index
    %c0_37 = arith.constant 0 : index
    %c0_38 = arith.constant 0 : index
    %50 = vector.load %arg1[%c0_36, %c0_37, %c0_38] : memref<1x8x32xf32, #tpu.memory_space<vmem>>, vector<1x8x32xf32>
    %51 = vector.shape_cast %50 : vector<1x8x32xf32> to vector<8x32xf32>
    %c0_39 = arith.constant 0 : index
    %c0_40 = arith.constant 0 : index
    %52 = vector.load %arg16[%c0_39, %c0_40] : memref<8x32xf32, #tpu.memory_space<vmem>>, vector<8x32xf32>
    %53 = vector.shape_cast %52 : vector<8x32xf32> to vector<8x4x8xf32>
    %54 = tpu.transpose %53, [1, 0, 2] : vector<8x4x8xf32> -> vector<4x8x8xf32>
    %55 = arith.truncf %54 : vector<4x8x8xf32> to vector<4x8x8xbf16>
    "tpu.trace_start"() <{level = 10 : i32, message = "hqd,hkd->hqk"}> : () -> ()
    %cst_41 = arith.constant dense<0.000000e+00> : vector<4x8x8xf32>
    %56 = tpu.matmul %55, %37, %cst_41 {dimension_numbers = #tpu.dot_dimension_numbers<[2], [2], [1], [1], [0, 0, 0, 1, 1, 1], [0], [0]>} : vector<4x8x8xbf16>, vector<4x8x8xbf16>, vector<4x8x8xf32> -> vector<4x8x8xf32>
    "tpu.trace_stop"() : () -> ()
    %57 = vector.shape_cast %3 : vector<1x8xf32> to vector<1x1x8xf32>
    %58 = vector.broadcast %57 : vector<1x1x8xf32> to vector<4x8x8xf32>
    %59 = arith.addf %56, %58 : vector<4x8x8xf32>
    %cst_42 = arith.constant dense<0xFF800000> : vector<4x8xf32>
    %60 = vector.multi_reduction <maximumf>, %59, %cst_42 [2] : vector<4x8x8xf32> to vector<4x8xf32>
    %61 = vector.shape_cast %60 : vector<4x8xf32> to vector<4x8x1xf32>
    %62 = vector.broadcast %61 : vector<4x8x1xf32> to vector<4x8x8xf32>
    %63 = arith.subf %59, %62 : vector<4x8x8xf32>
    %64 = math.exp %63 : vector<4x8x8xf32>
    %cst_43 = arith.constant dense<0.000000e+00> : vector<4x8xf32>
    %65 = vector.multi_reduction <add>, %64, %cst_43 [2] : vector<4x8x8xf32> to vector<4x8xf32>
    %66 = vector.shape_cast %65 : vector<4x8xf32> to vector<4x8x1xf32>
    %67 = arith.truncf %64 : vector<4x8x8xf32> to vector<4x8x8xbf16>
    "tpu.trace_start"() <{level = 10 : i32, message = "hqk,hkd->hqd"}> : () -> ()
    %cst_44 = arith.constant dense<0.000000e+00> : vector<4x8x8xf32>
    %68 = tpu.matmul %67, %41, %cst_44 {dimension_numbers = #tpu.dot_dimension_numbers<[2], [1], [1], [2], [0, 0, 0, 1, 1, 2], [0], [0]>} : vector<4x8x8xbf16>, vector<4x8x8xbf16>, vector<4x8x8xf32> -> vector<4x8x8xf32>
    "tpu.trace_stop"() : () -> ()
    %69 = tpu.reciprocal %66 {approx = true} : vector<4x8x1xf32> -> vector<4x8x1xf32>
    %70 = vector.broadcast %69 : vector<4x8x1xf32> to vector<4x8x8xf32>
    %71 = arith.mulf %68, %70 : vector<4x8x8xf32>
    %72 = tpu.transpose %71, [1, 0, 2] : vector<4x8x8xf32> -> vector<8x4x8xf32>
    %73 = vector.shape_cast %72 : vector<8x4x8xf32> to vector<8x32xf32>
    %74 = arith.truncf %73 : vector<8x32xf32> to vector<8x32xbf16>
    %cst_45 = arith.constant dense<0.000000e+00> : vector<8x32xf32>
    %75 = tpu.matmul %74, %42, %cst_45 {dimension_numbers = #tpu.dot_dimension_numbers<[1], [0], [0], [1], [0, 0, 1, 1], [], []>} : vector<8x32xbf16>, vector<32x32xbf16>, vector<8x32xf32> -> vector<8x32xf32>
    %76 = vector.broadcast %43 : vector<1x32xf32> to vector<8x32xf32>
    %77 = arith.addf %75, %76 : vector<8x32xf32>
    %78 = arith.addf %51, %77 : vector<8x32xf32>
    %cst_46 = arith.constant dense<0.000000e+00> : vector<8xf32>
    %79 = vector.multi_reduction <add>, %78, %cst_46 [1] : vector<8x32xf32> to vector<8xf32>
    %80 = vector.shape_cast %79 : vector<8xf32> to vector<8x1xf32>
    %cst_47 = arith.constant 3.200000e+01 : f32
    %81 = vector.broadcast %cst_47 : f32 to vector<8x1xf32>
    %82 = arith.divf %80, %81 : vector<8x1xf32>
    %83 = vector.broadcast %82 : vector<8x1xf32> to vector<8x32xf32>
    %84 = arith.subf %78, %83 : vector<8x32xf32>
    %85 = arith.mulf %84, %84 : vector<8x32xf32>
    %cst_48 = arith.constant dense<0.000000e+00> : vector<8xf32>
    %86 = vector.multi_reduction <add>, %85, %cst_48 [1] : vector<8x32xf32> to vector<8xf32>
    %87 = vector.shape_cast %86 : vector<8xf32> to vector<8x1xf32>
    %cst_49 = arith.constant 0.0322580636 : f32
    %88 = vector.broadcast %cst_49 : f32 to vector<8x1xf32>
    %89 = arith.mulf %87, %88 : vector<8x1xf32>
    %90 = vector.broadcast %44 : vector<1x32xf32> to vector<8x32xf32>
    %91 = arith.mulf %90, %84 : vector<8x32xf32>
    %92 = math.sqrt %89 : vector<8x1xf32>
    %cst_50 = arith.constant 9.99999997E-7 : f32
    %93 = vector.broadcast %cst_50 : f32 to vector<8x1xf32>
    %94 = arith.addf %92, %93 : vector<8x1xf32>
    %95 = vector.broadcast %94 : vector<8x1xf32> to vector<8x32xf32>
    %96 = arith.divf %91, %95 : vector<8x32xf32>
    %97 = vector.broadcast %45 : vector<1x32xf32> to vector<8x32xf32>
    %98 = arith.addf %96, %97 : vector<8x32xf32>
    %99 = arith.truncf %98 : vector<8x32xf32> to vector<8x32xbf16>
    %cst_51 = arith.constant dense<0.000000e+00> : vector<8x128xf32>
    %100 = tpu.matmul %99, %46, %cst_51 {dimension_numbers = #tpu.dot_dimension_numbers<[1], [0], [0], [1], [0, 0, 1, 1], [], []>} : vector<8x32xbf16>, vector<32x128xbf16>, vector<8x128xf32> -> vector<8x128xf32>
    %101 = vector.broadcast %47 : vector<1x128xf32> to vector<8x128xf32>
    %102 = arith.addf %100, %101 : vector<8x128xf32>
    %cst_52 = arith.constant 5.000000e-01 : f32
    %103 = vector.broadcast %cst_52 : f32 to vector<8x128xf32>
    %104 = arith.mulf %103, %102 : vector<8x128xf32>
    %cst_53 = arith.constant 4.471500e-02 : f32
    %105 = vector.broadcast %cst_53 : f32 to vector<8x128xf32>
    %106 = arith.mulf %105, %102 : vector<8x128xf32>
    %107 = arith.mulf %106, %102 : vector<8x128xf32>
    %108 = arith.mulf %107, %102 : vector<8x128xf32>
    %109 = arith.addf %102, %108 : vector<8x128xf32>
    %cst_54 = arith.constant 0.797884583 : f32
    %110 = vector.broadcast %cst_54 : f32 to vector<8x128xf32>
    %111 = arith.mulf %110, %109 : vector<8x128xf32>
    %112 = math.tanh %111 : vector<8x128xf32>
    %cst_55 = arith.constant 1.000000e+00 : f32
    %113 = vector.broadcast %cst_55 : f32 to vector<8x128xf32>
    %114 = arith.addf %113, %112 : vector<8x128xf32>
    %115 = arith.mulf %104, %114 : vector<8x128xf32>
    %116 = arith.truncf %115 : vector<8x128xf32> to vector<8x128xbf16>
    %cst_56 = arith.constant dense<0.000000e+00> : vector<8x32xf32>
    %117 = tpu.matmul %116, %48, %cst_56 {dimension_numbers = #tpu.dot_dimension_numbers<[1], [0], [0], [1], [0, 0, 1, 1], [], []>} : vector<8x128xbf16>, vector<128x32xbf16>, vector<8x32xf32> -> vector<8x32xf32>
    %118 = vector.broadcast %49 : vector<1x32xf32> to vector<8x32xf32>
    %119 = arith.addf %117, %118 : vector<8x32xf32>
    %120 = arith.addf %78, %119 : vector<8x32xf32>
    %c0_57 = arith.constant 0 : index
    %c0_58 = arith.constant 0 : index
    %c0_59 = arith.constant 0 : index
    %121 = vector.load %arg15[%c0_57, %c0_58, %c0_59] : memref<1x8x32xf32, #tpu.memory_space<vmem>>, vector<1x8x32xf32>
    %122 = vector.shape_cast %121 : vector<1x8x32xf32> to vector<8x32xf32>
    %123 = vector.shape_cast %120 : vector<8x32xf32> to vector<1x8x32xf32>
    tpu.vector_store %arg15[%c0_57, %c0_58, %c0_59], %123 {strides = array<i32>} : memref<1x8x32xf32, #tpu.memory_space<vmem>>, vector<1x8x32xf32>,
    return
  }
  func.func @transform_0(%arg0: i32) -> (i32, i32, i32) {
    %c0_i32 = arith.constant 0 : i32
    %c0_i32_0 = arith.constant 0 : i32
    %c0_i32_1 = arith.constant 0 : i32
    return %arg0, %c0_i32, %c0_i32_0 : i32, i32, i32
  }
  func.func @transform_1(%arg0: i32) -> (i32, i32, i32) {
    %c0_i32 = arith.constant 0 : i32
    %c0_i32_0 = arith.constant 0 : i32
    %c0_i32_1 = arith.constant 0 : i32
    return %arg0, %c0_i32, %c0_i32_0 : i32, i32, i32
  }
  func.func @transform_2(%arg0: i32) -> (i32, i32) {
    %c0_i32 = arith.constant 0 : i32
    %c0_i32_0 = arith.constant 0 : i32
    %c0_i32_1 = arith.constant 0 : i32
    return %c0_i32, %c0_i32_0 : i32, i32
  }
  func.func @transform_3(%arg0: i32) -> (i32, i32) {
    %c0_i32 = arith.constant 0 : i32
    %c0_i32_0 = arith.constant 0 : i32
    %c0_i32_1 = arith.constant 0 : i32
    return %c0_i32, %c0_i32_0 : i32, i32
  }
  func.func @transform_4(%arg0: i32) -> (i32, i32) {
    %c0_i32 = arith.constant 0 : i32
    %c0_i32_0 = arith.constant 0 : i32
    %c0_i32_1 = arith.constant 0 : i32
    return %c0_i32, %c0_i32_0 : i32, i32
  }
  func.func @transform_5(%arg0: i32) -> (i32, i32) {
    %c0_i32 = arith.constant 0 : i32
    %c0_i32_0 = arith.constant 0 : i32
    %c0_i32_1 = arith.constant 0 : i32
    return %c0_i32, %c0_i32_0 : i32, i32
  }
  func.func @transform_6(%arg0: i32) -> (i32, i32) {
    %c0_i32 = arith.constant 0 : i32
    %c0_i32_0 = arith.constant 0 : i32
    %c0_i32_1 = arith.constant 0 : i32
    return %c0_i32, %c0_i32_0 : i32, i32
  }
  func.func @transform_7(%arg0: i32) -> (i32, i32) {
    %c0_i32 = arith.constant 0 : i32
    %c0_i32_0 = arith.constant 0 : i32
    %c0_i32_1 = arith.constant 0 : i32
    return %c0_i32, %c0_i32_0 : i32, i32
  }
  func.func @transform_8(%arg0: i32) -> (i32, i32) {
    %c0_i32 = arith.constant 0 : i32
    %c0_i32_0 = arith.constant 0 : i32
    %c0_i32_1 = arith.constant 0 : i32
    return %c0_i32, %c0_i32_0 : i32, i32
  }
  func.func @transform_9(%arg0: i32) -> (i32, i32) {
    %c0_i32 = arith.constant 0 : i32
    %c0_i32_0 = arith.constant 0 : i32
    %c0_i32_1 = arith.constant 0 : i32
    return %c0_i32, %c0_i32_0 : i32, i32
  }
  func.func @transform_10(%arg0: i32) -> (i32, i32) {
    %c0_i32 = arith.constant 0 : i32
    %c0_i32_0 = arith.constant 0 : i32
    %c0_i32_1 = arith.constant 0 : i32
    return %c0_i32, %c0_i32_0 : i32, i32
  }
  func.func @transform_11(%arg0: i32) -> (i32, i32) {
    %c0_i32 = arith.constant 0 : i32
    %c0_i32_0 = arith.constant 0 : i32
    %c0_i32_1 = arith.constant 0 : i32
    return %c0_i32, %c0_i32_0 : i32, i32
  }
  func.func @transform_12(%arg0: i32) -> (i32, i32) {
    %c0_i32 = arith.constant 0 : i32
    %c0_i32_0 = arith.constant 0 : i32
    %c0_i32_1 = arith.constant 0 : i32
    return %c0_i32, %c0_i32_0 : i32, i32
  }
  func.func @transform_13(%arg0: i32) -> (i32, i32) {
    %c0_i32 = arith.constant 0 : i32
    %c0_i32_0 = arith.constant 0 : i32
    %c0_i32_1 = arith.constant 0 : i32
    return %c0_i32, %c0_i32_0 : i32, i32
  }
  func.func @transform_14(%arg0: i32) -> (i32, i32, i32) {
    %c0_i32 = arith.constant 0 : i32
    %c0_i32_0 = arith.constant 0 : i32
    %c0_i32_1 = arith.constant 0 : i32
    return %arg0, %c0_i32, %c0_i32_0 : i32, i32, i32
  }
}

</mosaic_0001>

<llo_original>
// kernel: tpu_custom_call.1
$region0: #{tpu_custom_call.1}
  #allocation0 [shape = 'u32[]', space=smem, size = 0x4, offset = 0x4, fixed_abs, tag = 'smem constant byte address 0x4 - core index']
  #allocation1 [shape = 'u32[144,128]{1,0:T(1,128)}', space=vmem, size = 0x12000, scoped, tag = 'internal scratch']
  #allocation2 [shape = 'f32[8,32]{1,0:T(8,128)}', space=vmem, size = 0x1000, scoped, tag = 'scratch operand']
  %s0 = inlined_call_operand.vmem [shape: f32[2,8,32], index: 0, kind: input, shape index: {}]
  %s1 = inlined_call_operand.vmem [shape: f32[2,1,8], index: 1, kind: input, shape index: {}]
  %s2 = inlined_call_operand.vmem [shape: bf16[32,96], index: 2, kind: input, shape index: {}]
  %s3 = inlined_call_operand.vmem [shape: f32[1,96], index: 3, kind: input, shape index: {}]
  %s4 = inlined_call_operand.vmem [shape: bf16[32,32], index: 4, kind: input, shape index: {}]
  %s5 = inlined_call_operand.vmem [shape: f32[1,32], index: 5, kind: input, shape index: {}]
  %s6 = inlined_call_operand.vmem [shape: f32[1,32], index: 6, kind: input, shape index: {}]
  %s7 = inlined_call_operand.vmem [shape: f32[1,32], index: 7, kind: input, shape index: {}]
  %s8 = inlined_call_operand.vmem [shape: f32[1,32], index: 8, kind: input, shape index: {}]
  %s9 = inlined_call_operand.vmem [shape: f32[1,32], index: 9, kind: input, shape index: {}]
  %s10 = inlined_call_operand.vmem [shape: bf16[32,128], index: 10, kind: input, shape index: {}]
  %s11 = inlined_call_operand.vmem [shape: f32[1,128], index: 11, kind: input, shape index: {}]
  %s12 = inlined_call_operand.vmem [shape: bf16[128,32], index: 12, kind: input, shape index: {}]
  %s13 = inlined_call_operand.vmem [shape: f32[1,32], index: 13, kind: input, shape index: {}]
  %s14 = inlined_call_operand.hbm [shape: f32[2,8,32], index: 14, kind: output, shape index: {}]
  %s15 = sld [smem:[#allocation0]]
  $region89: #{tpu_custom_call.1} parent=0
    _
  %s17 = ssub.s32 1, %s15
  %s18 = scalar_select 0, %s17, %s15
  $region1: #{tpu_custom_call.1} parent=0
    #allocation3 [shape = 'u8[8192]{0}', space=vmem, size = 0x2000, scoped, tag = 'output window, operand 0']
    #allocation4 [shape = 's32[2]{0}', space=sflag, size = 0x8, scoped, tag = 'scoped memory for tpu_custom_call.1']
    %19 = vsyncpa [#allocation4], 0
    %s20 = scalar_lea.sflag [#allocation4], 1
    %21 = vsyncpa %s20, 0
    loop: start=0, step=1, limit=4
    $region2: #{tpu_custom_call.1} parent=1 // loop_pre_header
      _
    $region3: #{tpu_custom_call.1} parent=1 // loop_header
      %s23 = sphi 0, %s27
      %p24 = scmp.ge.s32.totalorder %s23, 4
      %s33 = sphi 0, %s35
      %s36 = sphi 0, %s33
      %s37 = sphi 0, %s36
      %s53 = sphi 0, %s37
      %s59 = sphi 0, %s61
      %s62 = sphi 0, %s59
      %s63 = sphi 0, %s62
      %s79 = sphi 0, %s63
      %s83 = sphi 0, %s83
      %s85 = sphi 0, %s83
      %s86 = sphi 0, %s85
      %s100 = sphi 0, %s86
      %s104 = sphi 0, %s104
      %s106 = sphi 0, %s104
      %s107 = sphi 0, %s106
      %s121 = sphi 0, %s107
      %s125 = sphi 0, %s125
      %s127 = sphi 0, %s125
      %s128 = sphi 0, %s127
      %s142 = sphi 0, %s128
      %s146 = sphi 0, %s146
      %s148 = sphi 0, %s146
      %s149 = sphi 0, %s148
      %s163 = sphi 0, %s149
      %s167 = sphi 0, %s167
      %s169 = sphi 0, %s167
      %s170 = sphi 0, %s169
      %s184 = sphi 0, %s170
      %s188 = sphi 0, %s188
      %s190 = sphi 0, %s188
      %s191 = sphi 0, %s190
      %s205 = sphi 0, %s191
      %s209 = sphi 0, %s209
      %s211 = sphi 0, %s209
      %s212 = sphi 0, %s211
      %s226 = sphi 0, %s212
      %s230 = sphi 0, %s230
      %s232 = sphi 0, %s230
      %s233 = sphi 0, %s232
      %s247 = sphi 0, %s233
      %s251 = sphi 0, %s251
      %s253 = sphi 0, %s251
      %s254 = sphi 0, %s253
      %s268 = sphi 0, %s254
      %s272 = sphi 0, %s272
      %s274 = sphi 0, %s272
      %s275 = sphi 0, %s274
      %s289 = sphi 0, %s275
      %s293 = sphi 0, %s293
      %s295 = sphi 0, %s293
      %s296 = sphi 0, %s295
      %s310 = sphi 0, %s296
      %s314 = sphi 0, %s314
      %s316 = sphi 0, %s314
      %s317 = sphi 0, %s316
      %s331 = sphi 0, %s317
      %s337 = sphi 0, %s339
      %s340 = sphi 0, %s337
      %s341 = sphi 0, %s340
      %s357 = sphi 0, %s341
    $region4: #{tpu_custom_call.1} parent=1 // loop_header_branch
      %26 = sbr.rel (%p24) target = $region8
    $region5: #{tpu_custom_call.1} parent=1 // loop_body
      %s28 = ssub.s32 %s23, 1
      %s29 = ssub.s32 %s23, 2
      %s30 = sadd.s32 %s23, 1
      %s31 = ssub.s32 %s23, %s30
      %p32 = scmp.eq.s32.totalorder %s31, 0
      %s34 = sadd.s32 %s33, 1
      %s35 = scalar_select %p32, %s33, %s34
      %p38 = pneg %p32
      %p39 = scmp.eq.s32.totalorder %s23, 1
      %p40 = por %p38, %p39
      %p41 = scmp.ne.s32.totalorder %s33, %s36
      %p42 = scmp.eq.s32.totalorder %s23, 0
      %p43 = por %p41, %p42
      %p44 = scmp.ne.s32.totalorder %s33, %s36
      %p45 = scmp.eq.s32.totalorder %s28, 1
      %p46 = por %p44, %p45
      %p47 = scmp.ne.s32.totalorder %s36, %s37
      %p48 = scmp.eq.s32.totalorder %s28, 0
      %p49 = por %p47, %p48
      %p50 = scmp.ne.s32.totalorder %s36, %s37
      %p51 = scmp.eq.s32.totalorder %s29, 1
      %p52 = por %p50, %p51
      %p54 = scmp.ne.s32.totalorder %s37, %s53
      %p55 = scmp.eq.s32.totalorder %s29, 0
      %p56 = por %p54, %p55
      %s57 = ssub.s32 %s23, %s30
      %p58 = scmp.eq.s32.totalorder %s57, 0
      %s60 = sadd.s32 %s59, 1
      %s61 = scalar_select %p58, %s59, %s60
      %p64 = pneg %p58
      %p65 = scmp.eq.s32.totalorder %s23, 1
      %p66 = por %p64, %p65
      %p67 = scmp.ne.s32.totalorder %s59, %s62
      %p68 = scmp.eq.s32.totalorder %s23, 0
      %p69 = por %p67, %p68
      %p70 = scmp.ne.s32.totalorder %s59, %s62
      %p71 = scmp.eq.s32.totalorder %s28, 1
      %p72 = por %p70, %p71
      %p73 = scmp.ne.s32.totalorder %s62, %s63
      %p74 = scmp.eq.s32.totalorder %s28, 0
      %p75 = por %p73, %p74
      %p76 = scmp.ne.s32.totalorder %s62, %s63
      %p77 = scmp.eq.s32.totalorder %s29, 1
      %p78 = por %p76, %p77
      %p80 = scmp.ne.s32.totalorder %s63, %s79
      %p81 = scmp.eq.s32.totalorder %s29, 0
      %p82 = por %p80, %p81
      %s84 = sadd.s32 %s83, 1
      %p87 = scmp.eq.s32.totalorder %s23, 1
      %p88 = scmp.ne.s32.totalorder %s83, %s85
      %p89 = scmp.eq.s32.totalorder %s23, 0
      %p90 = por %p88, %p89
      %p91 = scmp.ne.s32.totalorder %s83, %s85
      %p92 = scmp.eq.s32.totalorder %s28, 1
      %p93 = por %p91, %p92
      %p94 = scmp.ne.s32.totalorder %s85, %s86
      %p95 = scmp.eq.s32.totalorder %s28, 0
      %p96 = por %p94, %p95
      %p97 = scmp.ne.s32.totalorder %s85, %s86
      %p98 = scmp.eq.s32.totalorder %s29, 1
      %p99 = por %p97, %p98
      %p101 = scmp.ne.s32.totalorder %s86, %s100
      %p102 = scmp.eq.s32.totalorder %s29, 0
      %p103 = por %p101, %p102
      %s105 = sadd.s32 %s104, 1
      %p108 = scmp.eq.s32.totalorder %s23, 1
      %p109 = scmp.ne.s32.totalorder %s104, %s106
      %p110 = scmp.eq.s32.totalorder %s23, 0
      %p111 = por %p109, %p110
      %p112 = scmp.ne.s32.totalorder %s104, %s106
      %p113 = scmp.eq.s32.totalorder %s28, 1
      %p114 = por %p112, %p113
      %p115 = scmp.ne.s32.totalorder %s106, %s107
      %p116 = scmp.eq.s32.totalorder %s28, 0
      %p117 = por %p115, %p116
      %p118 = scmp.ne.s32.totalorder %s106, %s107
      %p119 = scmp.eq.s32.totalorder %s29, 1
      %p120 = por %p118, %p119
      %p122 = scmp.ne.s32.totalorder %s107, %s121
      %p123 = scmp.eq.s32.totalorder %s29, 0
      %p124 = por %p122, %p123
      %s126 = sadd.s32 %s125, 1
      %p129 = scmp.eq.s32.totalorder %s23, 1
      %p130 = scmp.ne.s32.totalorder %s125, %s127
      %p131 = scmp.eq.s32.totalorder %s23, 0
      %p132 = por %p130, %p131
      %p133 = scmp.ne.s32.totalorder %s125, %s127
      %p134 = scmp.eq.s32.totalorder %s28, 1
      %p135 = por %p133, %p134
      %p136 = scmp.ne.s32.totalorder %s127, %s128
      %p137 = scmp.eq.s32.totalorder %s28, 0
      %p138 = por %p136, %p137
      %p139 = scmp.ne.s32.totalorder %s127, %s128
      %p140 = scmp.eq.s32.totalorder %s29, 1
      %p141 = por %p139, %p140
      %p143 = scmp.ne.s32.totalorder %s128, %s142
      %p144 = scmp.eq.s32.totalorder %s29, 0
      %p145 = por %p143, %p144
      %s147 = sadd.s32 %s146, 1
      %p150 = scmp.eq.s32.totalorder %s23, 1
      %p151 = scmp.ne.s32.totalorder %s146, %s148
      %p152 = scmp.eq.s32.totalorder %s23, 0
      %p153 = por %p151, %p152
      %p154 = scmp.ne.s32.totalorder %s146, %s148
      %p155 = scmp.eq.s32.totalorder %s28, 1
      %p156 = por %p154, %p155
      %p157 = scmp.ne.s32.totalorder %s148, %s149
      %p158 = scmp.eq.s32.totalorder %s28, 0
      %p159 = por %p157, %p158
      %p160 = scmp.ne.s32.totalorder %s148, %s149
      %p161 = scmp.eq.s32.totalorder %s29, 1
      %p162 = por %p160, %p161
      %p164 = scmp.ne.s32.totalorder %s149, %s163
      %p165 = scmp.eq.s32.totalorder %s29, 0
      %p166 = por %p164, %p165
      %s168 = sadd.s32 %s167, 1
      %p171 = scmp.eq.s32.totalorder %s23, 1
      %p172 = scmp.ne.s32.totalorder %s167, %s169
      %p173 = scmp.eq.s32.totalorder %s23, 0
      %p174 = por %p172, %p173
      %p175 = scmp.ne.s32.totalorder %s167, %s169
      %p176 = scmp.eq.s32.totalorder %s28, 1
      %p177 = por %p175, %p176
      %p178 = scmp.ne.s32.totalorder %s169, %s170
      %p179 = scmp.eq.s32.totalorder %s28, 0
      %p180 = por %p178, %p179
      %p181 = scmp.ne.s32.totalorder %s169, %s170
      %p182 = scmp.eq.s32.totalorder %s29, 1
      %p183 = por %p181, %p182
      %p185 = scmp.ne.s32.totalorder %s170, %s184
      %p186 = scmp.eq.s32.totalorder %s29, 0
      %p187 = por %p185, %p186
      %s189 = sadd.s32 %s188, 1
      %p192 = scmp.eq.s32.totalorder %s23, 1
      %p193 = scmp.ne.s32.totalorder %s188, %s190
      %p194 = scmp.eq.s32.totalorder %s23, 0
      %p195 = por %p193, %p194
      %p196 = scmp.ne.s32.totalorder %s188, %s190
      %p197 = scmp.eq.s32.totalorder %s28, 1
      %p198 = por %p196, %p197
      %p199 = scmp.ne.s32.totalorder %s190, %s191
      %p200 = scmp.eq.s32.totalorder %s28, 0
      %p201 = por %p199, %p200
      %p202 = scmp.ne.s32.totalorder %s190, %s191
      %p203 = scmp.eq.s32.totalorder %s29, 1
      %p204 = por %p202, %p203
      %p206 = scmp.ne.s32.totalorder %s191, %s205
      %p207 = scmp.eq.s32.totalorder %s29, 0
      %p208 = por %p206, %p207
      %s210 = sadd.s32 %s209, 1
      %p213 = scmp.eq.s32.totalorder %s23, 1
      %p214 = scmp.ne.s32.totalorder %s209, %s211
      %p215 = scmp.eq.s32.totalorder %s23, 0
      %p216 = por %p214, %p215
      %p217 = scmp.ne.s32.totalorder %s209, %s211
      %p218 = scmp.eq.s32.totalorder %s28, 1
      %p219 = por %p217, %p218
      %p220 = scmp.ne.s32.totalorder %s211, %s212
      %p221 = scmp.eq.s32.totalorder %s28, 0
      %p222 = por %p220, %p221
      %p223 = scmp.ne.s32.totalorder %s211, %s212
      %p224 = scmp.eq.s32.totalorder %s29, 1
      %p225 = por %p223, %p224
      %p227 = scmp.ne.s32.totalorder %s212, %s226
      %p228 = scmp.eq.s32.totalorder %s29, 0
      %p229 = por %p227, %p228
      %s231 = sadd.s32 %s230, 1
      %p234 = scmp.eq.s32.totalorder %s23, 1
      %p235 = scmp.ne.s32.totalorder %s230, %s232
      %p236 = scmp.eq.s32.totalorder %s23, 0
      %p237 = por %p235, %p236
      %p238 = scmp.ne.s32.totalorder %s230, %s232
      %p239 = scmp.eq.s32.totalorder %s28, 1
      %p240 = por %p238, %p239
      %p241 = scmp.ne.s32.totalorder %s232, %s233
      %p242 = scmp.eq.s32.totalorder %s28, 0
      %p243 = por %p241, %p242
      %p244 = scmp.ne.s32.totalorder %s232, %s233
      %p245 = scmp.eq.s32.totalorder %s29, 1
      %p246 = por %p244, %p245
      %p248 = scmp.ne.s32.totalorder %s233, %s247
      %p249 = scmp.eq.s32.totalorder %s29, 0
      %p250 = por %p248, %p249
      %s252 = sadd.s32 %s251, 1
      %p255 = scmp.eq.s32.totalorder %s23, 1
      %p256 = scmp.ne.s32.totalorder %s251, %s253
      %p257 = scmp.eq.s32.totalorder %s23, 0
      %p258 = por %p256, %p257
      %p259 = scmp.ne.s32.totalorder %s251, %s253
      %p260 = scmp.eq.s32.totalorder %s28, 1
      %p261 = por %p259, %p260
      %p262 = scmp.ne.s32.totalorder %s253, %s254
      %p263 = scmp.eq.s32.totalorder %s28, 0
      %p264 = por %p262, %p263
      %p265 = scmp.ne.s32.totalorder %s253, %s254
      %p266 = scmp.eq.s32.totalorder %s29, 1
      %p267 = por %p265, %p266
      %p269 = scmp.ne.s32.totalorder %s254, %s268
      %p270 = scmp.eq.s32.totalorder %s29, 0
      %p271 = por %p269, %p270
      %s273 = sadd.s32 %s272, 1
      %p276 = scmp.eq.s32.totalorder %s23, 1
      %p277 = scmp.ne.s32.totalorder %s272, %s274
      %p278 = scmp.eq.s32.totalorder %s23, 0
      %p279 = por %p277, %p278
      %p280 = scmp.ne.s32.totalorder %s272, %s274
      %p281 = scmp.eq.s32.totalorder %s28, 1
      %p282 = por %p280, %p281
      %p283 = scmp.ne.s32.totalorder %s274, %s275
      %p284 = scmp.eq.s32.totalorder %s28, 0
      %p285 = por %p283, %p284
      %p286 = scmp.ne.s32.totalorder %s274, %s275
      %p287 = scmp.eq.s32.totalorder %s29, 1
      %p288 = por %p286, %p287
      %p290 = scmp.ne.s32.totalorder %s275, %s289
      %p291 = scmp.eq.s32.totalorder %s29, 0
      %p292 = por %p290, %p291
      %s294 = sadd.s32 %s293, 1
      %p297 = scmp.eq.s32.totalorder %s23, 1
      %p298 = scmp.ne.s32.totalorder %s293, %s295
      %p299 = scmp.eq.s32.totalorder %s23, 0
      %p300 = por %p298, %p299
      %p301 = scmp.ne.s32.totalorder %s293, %s295
      %p302 = scmp.eq.s32.totalorder %s28, 1
      %p303 = por %p301, %p302
      %p304 = scmp.ne.s32.totalorder %s295, %s296
      %p305 = scmp.eq.s32.totalorder %s28, 0
      %p306 = por %p304, %p305
      %p307 = scmp.ne.s32.totalorder %s295, %s296
      %p308 = scmp.eq.s32.totalorder %s29, 1
      %p309 = por %p307, %p308
      %p311 = scmp.ne.s32.totalorder %s296, %s310
      %p312 = scmp.eq.s32.totalorder %s29, 0
      %p313 = por %p311, %p312
      %s315 = sadd.s32 %s314, 1
      %p318 = scmp.eq.s32.totalorder %s23, 1
      %p319 = scmp.ne.s32.totalorder %s314, %s316
      %p320 = scmp.eq.s32.totalorder %s23, 0
      %p321 = por %p319, %p320
      %p322 = scmp.ne.s32.totalorder %s314, %s316
      %p323 = scmp.eq.s32.totalorder %s28, 1
      %p324 = por %p322, %p323
      %p325 = scmp.ne.s32.totalorder %s316, %s317
      %p326 = scmp.eq.s32.totalorder %s28, 0
      %p327 = por %p325, %p326
      %p328 = scmp.ne.s32.totalorder %s316, %s317
      %p329 = scmp.eq.s32.totalorder %s29, 1
      %p330 = por %p328, %p329
      %p332 = scmp.ne.s32.totalorder %s317, %s331
      %p333 = scmp.eq.s32.totalorder %s29, 0
      %p334 = por %p332, %p333
      %s335 = ssub.s32 %s23, %s30
      %p336 = scmp.eq.s32.totalorder %s335, 0
      %s338 = sadd.s32 %s337, 1
      %s339 = scalar_select %p336, %s337, %s338
      %p342 = pneg %p336
      %p343 = scmp.eq.s32.totalorder %s23, 1
      %p344 = por %p342, %p343
      %p345 = scmp.ne.s32.totalorder %s337, %s340
      %p346 = scmp.eq.s32.totalorder %s23, 0
      %p347 = por %p345, %p346
      %p348 = scmp.ne.s32.totalorder %s337, %s340
      %p349 = scmp.eq.s32.totalorder %s28, 1
      %p350 = por %p348, %p349
      %p351 = scmp.ne.s32.totalorder %s340, %s341
      %p352 = scmp.eq.s32.totalorder %s28, 0
      %p353 = por %p351, %p352
      %p354 = scmp.ne.s32.totalorder %s340, %s341
      %p355 = scmp.eq.s32.totalorder %s29, 1
      %p356 = por %p354, %p355
      %p358 = scmp.ne.s32.totalorder %s341, %s357
      %p359 = scmp.eq.s32.totalorder %s29, 0
      %p360 = por %p358, %p359
      %p361 = scmp.le.s32.totalorder 1, %s23
      %p362 = scmp.lt.s32.totalorder %s23, 3
      %p363 = pnand %p361, %p362
      %p364 = pneg %p363
      // Predicated region
      $region9: #{tpu_custom_call.1} parent=5 // pred_check
        _
      $region10: #{tpu_custom_call.1} parent=5 // pred_check_branch
        %366 = sbr.rel (%p363) target = $region12
      $region11: #{tpu_custom_call.1} parent=5 // pred_region
        %s367 = ssub.s32 %s23, 1
        // Predicated region
        $region13: #{tpu_custom_call.1} parent=11 // pred_check
          %p368 = pneg %p96
        $region14: #{tpu_custom_call.1} parent=11 // pred_check_branch
          %370 = sbr.rel (%p368) target = $region16
        $region15: #{tpu_custom_call.1} parent=11 // pred_region
          _
        $region16: #{tpu_custom_call.1} parent=11 // pred_fallthru
          _
        // Predicated region
        $region17: #{tpu_custom_call.1} parent=11 // pred_check
          %p371 = pneg %p117
        $region18: #{tpu_custom_call.1} parent=11 // pred_check_branch
          %373 = sbr.rel (%p371) target = $region20
        $region19: #{tpu_custom_call.1} parent=11 // pred_region
          _
        $region20: #{tpu_custom_call.1} parent=11 // pred_fallthru
          _
        // Predicated region
        $region21: #{tpu_custom_call.1} parent=11 // pred_check
          %p374 = pneg %p138
        $region22: #{tpu_custom_call.1} parent=11 // pred_check_branch
          %376 = sbr.rel (%p374) target = $region24
        $region23: #{tpu_custom_call.1} parent=11 // pred_region
          _
        $region24: #{tpu_custom_call.1} parent=11 // pred_fallthru
          _
        // Predicated region
        $region25: #{tpu_custom_call.1} parent=11 // pred_check
          %p377 = pneg %p159
        $region26: #{tpu_custom_call.1} parent=11 // pred_check_branch
          %379 = sbr.rel (%p377) target = $region28
        $region27: #{tpu_custom_call.1} parent=11 // pred_region
          _
        $region28: #{tpu_custom_call.1} parent=11 // pred_fallthru
          _
        // Predicated region
        $region29: #{tpu_custom_call.1} parent=11 // pred_check
          %p380 = pneg %p180
        $region30: #{tpu_custom_call.1} parent=11 // pred_check_branch
          %382 = sbr.rel (%p380) target = $region32
        $region31: #{tpu_custom_call.1} parent=11 // pred_region
          _
        $region32: #{tpu_custom_call.1} parent=11 // pred_fallthru
          _
        // Predicated region
        $region33: #{tpu_custom_call.1} parent=11 // pred_check
          %p383 = pneg %p201
        $region34: #{tpu_custom_call.1} parent=11 // pred_check_branch
          %385 = sbr.rel (%p383) target = $region36
        $region35: #{tpu_custom_call.1} parent=11 // pred_region
          _
        $region36: #{tpu_custom_call.1} parent=11 // pred_fallthru
          _
        // Predicated region
        $region37: #{tpu_custom_call.1} parent=11 // pred_check
          %p386 = pneg %p222
        $region38: #{tpu_custom_call.1} parent=11 // pred_check_branch
          %388 = sbr.rel (%p386) target = $region40
        $region39: #{tpu_custom_call.1} parent=11 // pred_region
          _
        $region40: #{tpu_custom_call.1} parent=11 // pred_fallthru
          _
        // Predicated region
        $region41: #{tpu_custom_call.1} parent=11 // pred_check
          %p389 = pneg %p243
        $region42: #{tpu_custom_call.1} parent=11 // pred_check_branch
          %391 = sbr.rel (%p389) target = $region44
        $region43: #{tpu_custom_call.1} parent=11 // pred_region
          _
        $region44: #{tpu_custom_call.1} parent=11 // pred_fallthru
          _
        // Predicated region
        $region45: #{tpu_custom_call.1} parent=11 // pred_check
          %p392 = pneg %p264
        $region46: #{tpu_custom_call.1} parent=11 // pred_check_branch
          %394 = sbr.rel (%p392) target = $region48
        $region47: #{tpu_custom_call.1} parent=11 // pred_region
          _
        $region48: #{tpu_custom_call.1} parent=11 // pred_fallthru
          _
        // Predicated region
        $region49: #{tpu_custom_call.1} parent=11 // pred_check
          %p395 = pneg %p285
        $region50: #{tpu_custom_call.1} parent=11 // pred_check_branch
          %397 = sbr.rel (%p395) target = $region52
        $region51: #{tpu_custom_call.1} parent=11 // pred_region
          _
        $region52: #{tpu_custom_call.1} parent=11 // pred_fallthru
          _
        // Predicated region
        $region53: #{tpu_custom_call.1} parent=11 // pred_check
          %p398 = pneg %p306
        $region54: #{tpu_custom_call.1} parent=11 // pred_check_branch
          %400 = sbr.rel (%p398) target = $region56
        $region55: #{tpu_custom_call.1} parent=11 // pred_region
          _
        $region56: #{tpu_custom_call.1} parent=11 // pred_fallthru
          _
        // Predicated region
        $region57: #{tpu_custom_call.1} parent=11 // pred_check
          %p401 = pneg %p327
        $region58: #{tpu_custom_call.1} parent=11 // pred_check_branch
          %403 = sbr.rel (%p401) target = $region60
        $region59: #{tpu_custom_call.1} parent=11 // pred_region
          _
        $region60: #{tpu_custom_call.1} parent=11 // pred_fallthru
          _
      $region12: #{tpu_custom_call.1} parent=5 // pred_fallthru
        _
      %p404 = scmp.lt.s32.totalorder %s23, 2
      // Predicated region
      $region61: #{tpu_custom_call.1} parent=5 // pred_check
        %p405 = pneg %p404
      $region62: #{tpu_custom_call.1} parent=5 // pred_check_branch
        %407 = sbr.rel (%p405) target = $region64
      $region63: #{tpu_custom_call.1} parent=5 // pred_region
        // Predicated region
        $region65: #{tpu_custom_call.1} parent=63 // pred_check
          %p408 = pneg %p43
        $region66: #{tpu_custom_call.1} parent=63 // pred_check_branch
          %410 = sbr.rel (%p408) target = $region68
        $region67: #{tpu_custom_call.1} parent=63 // pred_region
          %p411 = scmp.lt.s32.totalorder %s23, 1
          %s412 = scalar_select %p411, %s23, 1
          %s413 = smul.addr %s412, 8
          %s414 = scalar_lea.vmem %s0, %s413
        $region68: #{tpu_custom_call.1} parent=63 // pred_fallthru
          _
        // Predicated region
        $region69: #{tpu_custom_call.1} parent=63 // pred_check
          %p415 = pneg %p69
        $region70: #{tpu_custom_call.1} parent=63 // pred_check_branch
          %417 = sbr.rel (%p415) target = $region72
        $region71: #{tpu_custom_call.1} parent=63 // pred_region
          %p418 = scmp.lt.s32.totalorder %s23, 1
          %s419 = scalar_select %p418, %s23, 1
          %s420 = scalar_lea.vmem %s1, %s419
        $region72: #{tpu_custom_call.1} parent=63 // pred_fallthru
          _
      $region64: #{tpu_custom_call.1} parent=5 // pred_fallthru
        _
      %p421 = scmp.le.s32.totalorder 1, %s23
      %p422 = scmp.lt.s32.totalorder %s23, 3
      %p423 = pnand %p421, %p422
      %p424 = pneg %p423
      // Predicated region
      $region73: #{tpu_custom_call.1} parent=5 // pred_check
        _
      $region74: #{tpu_custom_call.1} parent=5 // pred_check_branch
        %426 = sbr.rel (%p423) target = $region76
      $region75: #{tpu_custom_call.1} parent=5 // pred_region
        %s427 = ssub.s32 %s23, 1
        %p428 = scmp.lt.s32.totalorder %s28, 1
        %s429 = scalar_select %p428, %s28, 1
        %s430 = smul.addr %s429, 8
        %s431 = scalar_lea.vmem %s0, %s430
        %p432 = pneg %p49
        %p433 = pneg %p46
        %p434 = scmp.lt.s32.totalorder %s28, 1
        %s435 = scalar_select %p434, %s28, 1
        %s436 = scalar_lea.vmem %s1, %s435
        %p437 = pneg %p75
        %p438 = pneg %p72
        %p439 = pneg %p96
        %p440 = pneg %p93
        %p441 = pneg %p117
        %p442 = pneg %p114
        %p443 = pneg %p138
        %p444 = pneg %p135
        %p445 = pneg %p159
        %p446 = pneg %p156
        %p447 = pneg %p180
        %p448 = pneg %p177
        %p449 = pneg %p201
        %p450 = pneg %p198
        %p451 = pneg %p222
        %p452 = pneg %p219
        %p453 = pneg %p243
        %p454 = pneg %p240
        %p455 = pneg %p264
        %p456 = pneg %p261
        %p457 = pneg %p285
        %p458 = pneg %p282
        %p459 = pneg %p306
        %p460 = pneg %p303
        %p461 = pneg %p327
        %p462 = pneg %p324
        %p463 = pneg %p353
        %p464 = pneg %p350
        %s465 = sand.u32 %s340, 1
        %s466 = scalar_lea.sflag [#allocation4], %s465
        %s467 = sand.u32 %s340, 1
        %s468 = smul.addr %s467, 8
        %s469 = scalar_lea.vmem [#allocation3], %s468
        %p470 = scmp.lt.s32.totalorder %s28, 1
        %s471 = scalar_select %p470, %s28, 1
        %s472 = smul.addr %s471, 8
        %s473 = scalar_lea.vmem %s0, %s472
        %p474 = scmp.lt.s32.totalorder %s28, 1
        %s475 = scalar_select %p474, %s28, 1
        %s476 = scalar_lea.vmem %s1, %s475
        %v478 = vld [vmem:[%s473] sm:$0xff]
        %v479 = vld [vmem:[%s476] sm:$0x1]
        %v480 = vld [vmem:[%s6] sm:$0x1]
        %v481 = vld [vmem:[%s7] sm:$0x1]
        %vm482 = vcmask 261120
        %v483 = vsel %vm482, %v478, 0.0
        %484 = vadd.xlane.f32.xlu0 %v483
        %v485 = vpop.xlane.xlu0 %484
        %v486 = vrcp.pop 32.0
        %v487 = vmul.f32 %v485, %v486
        %v488 = vsub.f32 %v478, %v487
        %v489 = vmul.f32 %v488, %v488
        %v490 = vsel %vm482, %v489, 0.0
        %491 = vadd.xlane.f32.xlu0 %v490
        %v492 = vpop.xlane.xlu0 %491
        %v493 = vmul.f32 %v492, 0.032258064
        %v495 = vlaneseq
        %v496 = vshrl.u32 %v495, 7
        %v497 = vsub.s32 0, %v496
        %v498 = vrot.slane %v480, %v497
        %v500 = vmul.f32 %v498, %v488
        %v501 = vrsqrt.pop %v493
        %v502 = vmul.f32 %v493, %v501
        %vm503 = vcmp.eq.f32.partialorder %v493, inf
        %v504 = vsel %vm503, %v493, %v502
        %vm505 = vcmp.eq.f32.partialorder %v493, 0.0
        %v506 = vand.u32 %v493, 2147483648
        %v507 = vsel %vm505, %v506, %v504
        %v508 = vadd.f32 %v507, 1e-06
        %v509 = vrcp.pop %v508
        %v510 = vmul.f32 %v500, %v509
        %v512 = vlaneseq
        %v513 = vshrl.u32 %v512, 7
        %v514 = vsub.s32 0, %v513
        %v515 = vrot.slane %v481, %v514
        %v517 = vadd.f32 %v510, %v515
        %v518 = vpack.c.bf16 %v517, %v517
        %v519 = vld [vmem:[%s2] sm:$0xf]
        %v520 = vld [vmem:[%s2 + $0x4] sm:$0xf]
        %v521 = vld [vmem:[%s2 + $0x8] sm:$0xf]
        %v522 = vld [vmem:[%s2 + $0xc] sm:$0xf]
        %v523 = vld [vmem:[%s3] sm:$0x1]
        %v525 = vlaneseq
        %v526 = vshrl.u32 %v525, 7
        %v527 = vsub.s32 0, %v526
        %v528 = vrot.slane %v523, %v527
        %v534 = vunpack.c.l.b16 %v519
        %v535 = vunpack.c.l.b16 %v520
        %v536 = vunpack.c.l.b16 %v521
        %v537 = vunpack.c.l.b16 %v522
        %v538 = vpack.c.b16 %v535, %v534
        %v539 = vpack.c.b16 %v537, %v536
        %v543 = vsel %vm482, %v518, 0
        %545 = vmatprep.subr.bf16.mxu0 0
        %546 = vmatpush1.bf16.msra.mxu0 %v538
        %547 = vmatprep.subr.bf16.mxu0 0
        %548 = vmatpush1.bf16.msra.mxu0 %v539
        %549 = vmatprep.subr.bf16.mxu0 0
        %550 = vmatpush1.bf16.msra.mxu0 0
        %551 = vmatprep.subr.bf16.mxu0 0
        %552 = vmatpush1.bf16.msra.mxu0 0
        %553 = vmatprep.subr.bf16.mxu0 0
        %554 = vmatpush1.bf16.msra.mxu0 0
        %555 = vmatprep.subr.bf16.mxu0 0
        %556 = vmatpush1.bf16.msra.mxu0 0
        %557 = vmatprep.subr.bf16.mxu0 0
        %558 = vmatpush1.bf16.msra.mxu0 0
        %559 = vmatprep.subr.bf16.mxu0 0
        %560 = vmatpush1.bf16.msra.mxu0 0
        %561 = vmatprep.subr.bf16.mxu0 0
        %562 = vmatpush1.bf16.msra.mxu0 0
        %563 = vmatprep.subr.bf16.mxu0 0
        %564 = vmatpush1.bf16.msra.mxu0 0
        %565 = vmatprep.subr.bf16.mxu0 0
        %566 = vmatpush1.bf16.msra.mxu0 0
        %567 = vmatprep.subr.bf16.mxu0 0
        %568 = vmatpush1.bf16.msra.mxu0 0
        %569 = vmatprep.subr.bf16.mxu0 0
        %570 = vmatpush1.bf16.msra.mxu0 0
        %571 = vmatprep.subr.bf16.mxu0 0
        %572 = vmatpush1.bf16.msra.mxu0 0
        %573 = vmatprep.subr.bf16.mxu0 0
        %574 = vmatpush1.bf16.msra.mxu0 0
        %575 = vmatprep.subr.bf16.mxu0 0
        %576 = vmatpush1.bf16.msra.mxu0 0
        %577 = vmatprep.mubr.bf16.mxu0 0
        %578 = vmatmul.mubr.bf16.gmra.mrb[0].mxu0 %v543
        %v579 = vpop.f32.mrb[0].mxu0
        %v580 = vadd.f32 %v528, %v579
        %v581 = vpop.f32.mrb[0].mxu0
        %v582 = vpop.f32.mrb[0].mxu0
        %v583 = vpop.f32.mrb[0].mxu0
        %584 = vdwg.mxu0
        %585 = vst.msk [vmem:[#allocation2] sm:$0xff] %vm482, %v580
        %587 = vrot.lane.b32.xlu0 %v580, 120
        %v588 = vpop.permute.xlu0 %587
        %589 = vrot.lane.b32.xlu0 %v580, 112
        %v590 = vpop.permute.xlu0 %589
        %591 = vrot.lane.b32.xlu0 %v580, 104
        %v592 = vpop.permute.xlu0 %591
        %593 = vrot.lane.b32.xlu0 %v580, 96
        %v594 = vpop.permute.xlu0 %593
        %595 = vrot.lane.b32.xlu0 %v588, 96
        %v596 = vpop.permute.xlu0 %595
        %597 = vrot.lane.b32.xlu0 %v590, 96
        %v598 = vpop.permute.xlu0 %597
        %599 = vrot.lane.b32.xlu0 %v592, 96
        %v600 = vpop.permute.xlu0 %599
        %v605 = vcombine.low %v594, %v598
        %v606 = vcombine.high %v594, %v598
        %v608 = vunpack.c.l.s4 1983009808
        %v609 = vunpack.c.0.s8 %v608
        %v610 = vlaneseq
        %v611 = vshrl.u32 %v610, 7
        %v612 = vsub.s32 %v609, %v611
        %v613 = vrot.slane %v605, %v612
        %v615 = vunpack.c.l.s4 1983009808
        %v616 = vunpack.c.0.s8 %v615
        %v617 = vlaneseq
        %v618 = vshrl.u32 %v617, 7
        %v619 = vsub.s32 %v616, %v618
        %v620 = vrot.slane %v606, %v619
        %v621 = vcombine.low %v596, %v600
        %v622 = vcombine.high %v596, %v600
        %v624 = vunpack.c.l.s4 1983009808
        %v625 = vunpack.c.0.s8 %v624
        %v626 = vlaneseq
        %v627 = vshrl.u32 %v626, 7
        %v628 = vsub.s32 %v625, %v627
        %v629 = vrot.slane %v621, %v628
        %v631 = vunpack.c.l.s4 1983009808
        %v632 = vunpack.c.0.s8 %v631
        %v633 = vlaneseq
        %v634 = vshrl.u32 %v633, 7
        %v635 = vsub.s32 %v632, %v634
        %v636 = vrot.slane %v622, %v635
        %v637 = vcombine.low %v613, %v629
        %v638 = vcombine.high %v613, %v629
        %v640 = vunpack.c.l.s4 1934713408
        %v641 = vunpack.c.0.s8 %v640
        %v642 = vlaneseq
        %v643 = vshrl.u32 %v642, 7
        %v644 = vsub.s32 %v641, %v643
        %v645 = vrot.slane %v637, %v644
        %v647 = vunpack.c.l.s4 1934713408
        %v648 = vunpack.c.0.s8 %v647
        %v649 = vlaneseq
        %v650 = vshrl.u32 %v649, 7
        %v651 = vsub.s32 %v648, %v650
        %v652 = vrot.slane %v638, %v651
        %v653 = vcombine.low %v620, %v636
        %v654 = vcombine.high %v620, %v636
        %v656 = vunpack.c.l.s4 1934713408
        %v657 = vunpack.c.0.s8 %v656
        %v658 = vlaneseq
        %v659 = vshrl.u32 %v658, 7
        %v660 = vsub.s32 %v657, %v659
        %v661 = vrot.slane %v653, %v660
        %v663 = vunpack.c.l.s4 1934713408
        %v664 = vunpack.c.0.s8 %v663
        %v665 = vlaneseq
        %v666 = vshrl.u32 %v665, 7
        %v667 = vsub.s32 %v664, %v666
        %v668 = vrot.slane %v654, %v667
        %v669 = vcombine.high %v645, 0.0
        %v670 = vcombine.high %v652, 0.0
        %v671 = vcombine.high %v661, 0.0
        %v672 = vcombine.high %v668, 0.0
        %v673 = vcombine.low %v645, %v652
        %v675 = vunpack.c.l.s4 1983009808
        %v676 = vunpack.c.0.s8 %v675
        %v677 = vlaneseq
        %v678 = vshrl.u32 %v677, 7
        %v679 = vsub.s32 %v676, %v678
        %v680 = vrot.slane %v673, %v679
        %v681 = vcombine.low %v669, %v670
        %v683 = vunpack.c.l.s4 1983009808
        %v684 = vunpack.c.0.s8 %v683
        %v685 = vlaneseq
        %v686 = vshrl.u32 %v685, 7
        %v687 = vsub.s32 %v684, %v686
        %v688 = vrot.slane %v681, %v687
        %v689 = vcombine.low %v661, %v668
        %v691 = vunpack.c.l.s4 1983009808
        %v692 = vunpack.c.0.s8 %v691
        %v693 = vlaneseq
        %v694 = vshrl.u32 %v693, 7
        %v695 = vsub.s32 %v692, %v694
        %v696 = vrot.slane %v689, %v695
        %v697 = vcombine.low %v671, %v672
        %v699 = vunpack.c.l.s4 1983009808
        %v700 = vunpack.c.0.s8 %v699
        %v701 = vlaneseq
        %v702 = vshrl.u32 %v701, 7
        %v703 = vsub.s32 %v700, %v702
        %v704 = vrot.slane %v697, %v703
        %v705 = vcombine.low %v680, %v688
        %v706 = vcombine.high %v680, %v688
        %v708 = vunpack.c.l.s4 1934713408
        %v709 = vunpack.c.0.s8 %v708
        %v710 = vlaneseq
        %v711 = vshrl.u32 %v710, 7
        %v712 = vsub.s32 %v709, %v711
        %v713 = vrot.slane %v705, %v712
        %v715 = vunpack.c.l.s4 1934713408
        %v716 = vunpack.c.0.s8 %v715
        %v717 = vlaneseq
        %v718 = vshrl.u32 %v717, 7
        %v719 = vsub.s32 %v716, %v718
        %v720 = vrot.slane %v706, %v719
        %v721 = vcombine.low %v696, %v704
        %v722 = vcombine.high %v696, %v704
        %v724 = vunpack.c.l.s4 1934713408
        %v725 = vunpack.c.0.s8 %v724
        %v726 = vlaneseq
        %v727 = vshrl.u32 %v726, 7
        %v728 = vsub.s32 %v725, %v727
        %v729 = vrot.slane %v721, %v728
        %v731 = vunpack.c.l.s4 1934713408
        %v732 = vunpack.c.0.s8 %v731
        %v733 = vlaneseq
        %v734 = vshrl.u32 %v733, 7
        %v735 = vsub.s32 %v732, %v734
        %v736 = vrot.slane %v722, %v735
        %v737 = vcombine.low %v713, %v729
        %v738 = vcombine.high %v713, %v729
        %v739 = vcombine.low %v720, %v736
        %v740 = vcombine.high %v720, %v736
        %v741 = vpack.c.bf16 %v737, %v737
        %v742 = vpack.c.bf16 %v738, %v738
        %v743 = vpack.c.bf16 %v739, %v739
        %v744 = vpack.c.bf16 %v740, %v740
        %745 = vrot.lane.b32.xlu0 %v580, 64
        %v746 = vpop.permute.xlu0 %745
        %747 = vrot.lane.b32.xlu0 %v588, 64
        %v748 = vpop.permute.xlu0 %747
        %749 = vrot.lane.b32.xlu0 %v590, 64
        %v750 = vpop.permute.xlu0 %749
        %751 = vrot.lane.b32.xlu0 %v592, 64
        %v752 = vpop.permute.xlu0 %751
        %v757 = vcombine.low %v746, %v750
        %v758 = vcombine.high %v746, %v750
        %v760 = vunpack.c.l.s4 1983009808
        %v761 = vunpack.c.0.s8 %v760
        %v762 = vlaneseq
        %v763 = vshrl.u32 %v762, 7
        %v764 = vsub.s32 %v761, %v763
        %v765 = vrot.slane %v757, %v764
        %v767 = vunpack.c.l.s4 1983009808
        %v768 = vunpack.c.0.s8 %v767
        %v769 = vlaneseq
        %v770 = vshrl.u32 %v769, 7
        %v771 = vsub.s32 %v768, %v770
        %v772 = vrot.slane %v758, %v771
        %v773 = vcombine.low %v748, %v752
        %v774 = vcombine.high %v748, %v752
        %v776 = vunpack.c.l.s4 1983009808
        %v777 = vunpack.c.0.s8 %v776
        %v778 = vlaneseq
        %v779 = vshrl.u32 %v778, 7
        %v780 = vsub.s32 %v777, %v779
        %v781 = vrot.slane %v773, %v780
        %v783 = vunpack.c.l.s4 1983009808
        %v784 = vunpack.c.0.s8 %v783
        %v785 = vlaneseq
        %v786 = vshrl.u32 %v785, 7
        %v787 = vsub.s32 %v784, %v786
        %v788 = vrot.slane %v774, %v787
        %v789 = vcombine.low %v765, %v781
        %v790 = vcombine.high %v765, %v781
        %v792 = vunpack.c.l.s4 1934713408
        %v793 = vunpack.c.0.s8 %v792
        %v794 = vlaneseq
        %v795 = vshrl.u32 %v794, 7
        %v796 = vsub.s32 %v793, %v795
        %v797 = vrot.slane %v789, %v796
        %v799 = vunpack.c.l.s4 1934713408
        %v800 = vunpack.c.0.s8 %v799
        %v801 = vlaneseq
        %v802 = vshrl.u32 %v801, 7
        %v803 = vsub.s32 %v800, %v802
        %v804 = vrot.slane %v790, %v803
        %v805 = vcombine.low %v772, %v788
        %v806 = vcombine.high %v772, %v788
        %v808 = vunpack.c.l.s4 1934713408
        %v809 = vunpack.c.0.s8 %v808
        %v810 = vlaneseq
        %v811 = vshrl.u32 %v810, 7
        %v812 = vsub.s32 %v809, %v811
        %v813 = vrot.slane %v805, %v812
        %v815 = vunpack.c.l.s4 1934713408
        %v816 = vunpack.c.0.s8 %v815
        %v817 = vlaneseq
        %v818 = vshrl.u32 %v817, 7
        %v819 = vsub.s32 %v816, %v818
        %v820 = vrot.slane %v806, %v819
        %v821 = vcombine.high %v797, 0.0
        %v822 = vcombine.high %v804, 0.0
        %v823 = vcombine.high %v813, 0.0
        %v824 = vcombine.high %v820, 0.0
        %v825 = vcombine.low %v797, %v804
        %v827 = vunpack.c.l.s4 1983009808
        %v828 = vunpack.c.0.s8 %v827
        %v829 = vlaneseq
        %v830 = vshrl.u32 %v829, 7
        %v831 = vsub.s32 %v828, %v830
        %v832 = vrot.slane %v825, %v831
        %v833 = vcombine.low %v821, %v822
        %v835 = vunpack.c.l.s4 1983009808
        %v836 = vunpack.c.0.s8 %v835
        %v837 = vlaneseq
        %v838 = vshrl.u32 %v837, 7
        %v839 = vsub.s32 %v836, %v838
        %v840 = vrot.slane %v833, %v839
        %v841 = vcombine.low %v813, %v820
        %v843 = vunpack.c.l.s4 1983009808
        %v844 = vunpack.c.0.s8 %v843
        %v845 = vlaneseq
        %v846 = vshrl.u32 %v845, 7
        %v847 = vsub.s32 %v844, %v846
        %v848 = vrot.slane %v841, %v847
        %v849 = vcombine.low %v823, %v824
        %v851 = vunpack.c.l.s4 1983009808
        %v852 = vunpack.c.0.s8 %v851
        %v853 = vlaneseq
        %v854 = vshrl.u32 %v853, 7
        %v855 = vsub.s32 %v852, %v854
        %v856 = vrot.slane %v849, %v855
        %v857 = vcombine.low %v832, %v840
        %v858 = vcombine.high %v832, %v840
        %v860 = vunpack.c.l.s4 1934713408
        %v861 = vunpack.c.0.s8 %v860
        %v862 = vlaneseq
        %v863 = vshrl.u32 %v862, 7
        %v864 = vsub.s32 %v861, %v863
        %v865 = vrot.slane %v857, %v864
        %v867 = vunpack.c.l.s4 1934713408
        %v868 = vunpack.c.0.s8 %v867
        %v869 = vlaneseq
        %v870 = vshrl.u32 %v869, 7
        %v871 = vsub.s32 %v868, %v870
        %v872 = vrot.slane %v858, %v871
        %v873 = vcombine.low %v848, %v856
        %v874 = vcombine.high %v848, %v856
        %v876 = vunpack.c.l.s4 1934713408
        %v877 = vunpack.c.0.s8 %v876
        %v878 = vlaneseq
        %v879 = vshrl.u32 %v878, 7
        %v880 = vsub.s32 %v877, %v879
        %v881 = vrot.slane %v873, %v880
        %v883 = vunpack.c.l.s4 1934713408
        %v884 = vunpack.c.0.s8 %v883
        %v885 = vlaneseq
        %v886 = vshrl.u32 %v885, 7
        %v887 = vsub.s32 %v884, %v886
        %v888 = vrot.slane %v874, %v887
        %v889 = vcombine.low %v865, %v881
        %v890 = vcombine.high %v865, %v881
        %v891 = vcombine.low %v872, %v888
        %v892 = vcombine.high %v872, %v888
        %v893 = vpack.c.bf16 %v889, %v889
        %v894 = vpack.c.bf16 %v890, %v890
        %v895 = vpack.c.bf16 %v891, %v891
        %v896 = vpack.c.bf16 %v892, %v892
        %v897 = vld [vmem:[%s4] sm:$0xf]
        %v898 = vld [vmem:[%s4 + $0x4] sm:$0xf]
        %v899 = vld [vmem:[%s4 + $0x8] sm:$0xf]
        %v900 = vld [vmem:[%s4 + $0xc] sm:$0xf]
        %v901 = vld [vmem:[%s5] sm:$0x1]
        %v902 = vld [vmem:[%s8] sm:$0x1]
        %v903 = vld [vmem:[%s9] sm:$0x1]
        %v904 = vld [vmem:[%s10] sm:$0xf]
        %v905 = vld [vmem:[%s10 + $0x4] sm:$0xf]
        %v906 = vld [vmem:[%s10 + $0x8] sm:$0xf]
        %v907 = vld [vmem:[%s10 + $0xc] sm:$0xf]
        %v908 = vld [vmem:[%s11] sm:$0x1]
        %v909 = vld [vmem:[%s12] sm:$0xf]
        %v910 = vld [vmem:[%s12 + $0x4] sm:$0xf]
        %v911 = vld [vmem:[%s12 + $0x8] sm:$0xf]
        %v912 = vld [vmem:[%s12 + $0xc] sm:$0xf]
        %v913 = vld [vmem:[%s12 + $0x10] sm:$0xf]
        %v914 = vld [vmem:[%s12 + $0x14] sm:$0xf]
        %v915 = vld [vmem:[%s12 + $0x18] sm:$0xf]
        %v916 = vld [vmem:[%s12 + $0x1c] sm:$0xf]
        %v917 = vld [vmem:[%s12 + $0x20] sm:$0xf]
        %v918 = vld [vmem:[%s12 + $0x24] sm:$0xf]
        %v919 = vld [vmem:[%s12 + $0x28] sm:$0xf]
        %v920 = vld [vmem:[%s12 + $0x2c] sm:$0xf]
        %v921 = vld [vmem:[%s12 + $0x30] sm:$0xf]
        %v922 = vld [vmem:[%s12 + $0x34] sm:$0xf]
        %v923 = vld [vmem:[%s12 + $0x38] sm:$0xf]
        %v924 = vld [vmem:[%s12 + $0x3c] sm:$0xf]
        %v925 = vld [vmem:[%s13] sm:$0x1]
        %v926 = vld [vmem:[%s473] sm:$0xff]
        %v927 = vld [vmem:[#allocation2] sm:$0xff]
        %929 = vrot.lane.b32.xlu0 %v927, 120
        %v930 = vpop.permute.xlu0 %929
        %932 = vrot.lane.b32.xlu0 %v927, 112
        %v933 = vpop.permute.xlu0 %932
        %935 = vrot.lane.b32.xlu0 %v927, 104
        %v936 = vpop.permute.xlu0 %935
        %v938 = vcombine.low %v927, %v933
        %v939 = vcombine.high %v927, %v933
        %v941 = vunpack.c.l.s4 1983009808
        %v942 = vunpack.c.0.s8 %v941
        %v943 = vlaneseq
        %v944 = vshrl.u32 %v943, 7
        %v945 = vsub.s32 %v942, %v944
        %v946 = vrot.slane %v938, %v945
        %v948 = vunpack.c.l.s4 1983009808
        %v949 = vunpack.c.0.s8 %v948
        %v950 = vlaneseq
        %v951 = vshrl.u32 %v950, 7
        %v952 = vsub.s32 %v949, %v951
        %v953 = vrot.slane %v939, %v952
        %v954 = vcombine.low %v930, %v936
        %v955 = vcombine.high %v930, %v936
        %v957 = vunpack.c.l.s4 1983009808
        %v958 = vunpack.c.0.s8 %v957
        %v959 = vlaneseq
        %v960 = vshrl.u32 %v959, 7
        %v961 = vsub.s32 %v958, %v960
        %v962 = vrot.slane %v954, %v961
        %v964 = vunpack.c.l.s4 1983009808
        %v965 = vunpack.c.0.s8 %v964
        %v966 = vlaneseq
        %v967 = vshrl.u32 %v966, 7
        %v968 = vsub.s32 %v965, %v967
        %v969 = vrot.slane %v955, %v968
        %v970 = vcombine.low %v946, %v962
        %v971 = vcombine.high %v946, %v962
        %v973 = vunpack.c.l.s4 1934713408
        %v974 = vunpack.c.0.s8 %v973
        %v975 = vlaneseq
        %v976 = vshrl.u32 %v975, 7
        %v977 = vsub.s32 %v974, %v976
        %v978 = vrot.slane %v970, %v977
        %v980 = vunpack.c.l.s4 1934713408
        %v981 = vunpack.c.0.s8 %v980
        %v982 = vlaneseq
        %v983 = vshrl.u32 %v982, 7
        %v984 = vsub.s32 %v981, %v983
        %v985 = vrot.slane %v971, %v984
        %v986 = vcombine.low %v953, %v969
        %v987 = vcombine.high %v953, %v969
        %v989 = vunpack.c.l.s4 1934713408
        %v990 = vunpack.c.0.s8 %v989
        %v991 = vlaneseq
        %v992 = vshrl.u32 %v991, 7
        %v993 = vsub.s32 %v990, %v992
        %v994 = vrot.slane %v986, %v993
        %v996 = vunpack.c.l.s4 1934713408
        %v997 = vunpack.c.0.s8 %v996
        %v998 = vlaneseq
        %v999 = vshrl.u32 %v998, 7
        %v1000 = vsub.s32 %v997, %v999
        %v1001 = vrot.slane %v987, %v1000
        %v1002 = vcombine.high %v978, 0.0
        %v1003 = vcombine.high %v985, 0.0
        %v1004 = vcombine.high %v994, 0.0
        %v1005 = vcombine.high %v1001, 0.0
        %v1006 = vcombine.low %v978, %v985
        %v1008 = vunpack.c.l.s4 1983009808
        %v1009 = vunpack.c.0.s8 %v1008
        %v1010 = vlaneseq
        %v1011 = vshrl.u32 %v1010, 7
        %v1012 = vsub.s32 %v1009, %v1011
        %v1013 = vrot.slane %v1006, %v1012
        %v1014 = vcombine.low %v1002, %v1003
        %v1016 = vunpack.c.l.s4 1983009808
        %v1017 = vunpack.c.0.s8 %v1016
        %v1018 = vlaneseq
        %v1019 = vshrl.u32 %v1018, 7
        %v1020 = vsub.s32 %v1017, %v1019
        %v1021 = vrot.slane %v1014, %v1020
        %v1022 = vcombine.low %v994, %v1001
        %v1024 = vunpack.c.l.s4 1983009808
        %v1025 = vunpack.c.0.s8 %v1024
        %v1026 = vlaneseq
        %v1027 = vshrl.u32 %v1026, 7
        %v1028 = vsub.s32 %v1025, %v1027
        %v1029 = vrot.slane %v1022, %v1028
        %v1030 = vcombine.low %v1004, %v1005
        %v1032 = vunpack.c.l.s4 1983009808
        %v1033 = vunpack.c.0.s8 %v1032
        %v1034 = vlaneseq
        %v1035 = vshrl.u32 %v1034, 7
        %v1036 = vsub.s32 %v1033, %v1035
        %v1037 = vrot.slane %v1030, %v1036
        %v1038 = vcombine.low %v1013, %v1021
        %v1039 = vcombine.high %v1013, %v1021
        %v1041 = vunpack.c.l.s4 1934713408
        %v1042 = vunpack.c.0.s8 %v1041
        %v1043 = vlaneseq
        %v1044 = vshrl.u32 %v1043, 7
        %v1045 = vsub.s32 %v1042, %v1044
        %v1046 = vrot.slane %v1038, %v1045
        %v1048 = vunpack.c.l.s4 1934713408
        %v1049 = vunpack.c.0.s8 %v1048
        %v1050 = vlaneseq
        %v1051 = vshrl.u32 %v1050, 7
        %v1052 = vsub.s32 %v1049, %v1051
        %v1053 = vrot.slane %v1039, %v1052
        %v1054 = vcombine.low %v1029, %v1037
        %v1055 = vcombine.high %v1029, %v1037
        %v1057 = vunpack.c.l.s4 1934713408
        %v1058 = vunpack.c.0.s8 %v1057
        %v1059 = vlaneseq
        %v1060 = vshrl.u32 %v1059, 7
        %v1061 = vsub.s32 %v1058, %v1060
        %v1062 = vrot.slane %v1054, %v1061
        %v1064 = vunpack.c.l.s4 1934713408
        %v1065 = vunpack.c.0.s8 %v1064
        %v1066 = vlaneseq
        %v1067 = vshrl.u32 %v1066, 7
        %v1068 = vsub.s32 %v1065, %v1067
        %v1069 = vrot.slane %v1055, %v1068
        %v1070 = vcombine.low %v1046, %v1062
        %v1071 = vcombine.high %v1046, %v1062
        %v1072 = vcombine.low %v1053, %v1069
        %v1073 = vcombine.high %v1053, %v1069
        %v1074 = vpack.c.bf16 %v1070, %v1070
        %v1075 = vpack.c.bf16 %v1071, %v1071
        %v1076 = vpack.c.bf16 %v1072, %v1072
        %v1077 = vpack.c.bf16 %v1073, %v1073
        %v1079 = vlaneseq
        %v1080 = vshrl.u32 %v1079, 7
        %v1081 = vsub.s32 0, %v1080
        %v1082 = vrot.slane %v479, %v1081
        %vm1084 = vcmask 64512
        %v1086 = vsel %vm1084, %v1074, 0
        %v1089 = vsel %vm1084, %v741, 0
        %1091 = vmatprep.subr.bf16.mxu0 0
        %1092 = vmatpush1.bf16.xpose.msra.mxu0 %v1089
        %1093 = vmatprep.subr.bf16.mxu0 0
        %1094 = vmatpush1.bf16.xpose.msra.mxu0 0
        %1095 = vmatprep.subr.bf16.mxu0 0
        %1096 = vmatpush1.bf16.xpose.msra.mxu0 0
        %1097 = vmatprep.subr.bf16.mxu0 0
        %1098 = vmatpush1.bf16.xpose.msra.mxu0 0
        %1099 = vmatprep.subr.bf16.mxu0 0
        %1100 = vmatpush1.bf16.xpose.msra.mxu0 0
        %1101 = vmatprep.subr.bf16.mxu0 0
        %1102 = vmatpush1.bf16.xpose.msra.mxu0 0
        %1103 = vmatprep.subr.bf16.mxu0 0
        %1104 = vmatpush1.bf16.xpose.msra.mxu0 0
        %1105 = vmatprep.subr.bf16.mxu0 0
        %1106 = vmatpush1.bf16.xpose.msra.mxu0 0
        %1107 = vmatprep.subr.bf16.mxu0 0
        %1108 = vmatpush1.bf16.xpose.msra.mxu0 0
        %1109 = vmatprep.subr.bf16.mxu0 0
        %1110 = vmatpush1.bf16.xpose.msra.mxu0 0
        %1111 = vmatprep.subr.bf16.mxu0 0
        %1112 = vmatpush1.bf16.xpose.msra.mxu0 0
        %1113 = vmatprep.subr.bf16.mxu0 0
        %1114 = vmatpush1.bf16.xpose.msra.mxu0 0
        %1115 = vmatprep.subr.bf16.mxu0 0
        %1116 = vmatpush1.bf16.xpose.msra.mxu0 0
        %1117 = vmatprep.subr.bf16.mxu0 0
        %1118 = vmatpush1.bf16.xpose.msra.mxu0 0
        %1119 = vmatprep.subr.bf16.mxu0 0
        %1120 = vmatpush1.bf16.xpose.msra.mxu0 0
        %1121 = vmatprep.subr.bf16.mxu0 0
        %1122 = vmatpush1.bf16.xpose.msra.mxu0 0
        %1123 = vmatprep.mubr.bf16.mxu0 0
        %1124 = vmatmul.mubr.bf16.gmra.mrb[0].mxu0 %v1086
        %v1125 = vpop.f32.mrb[0].mxu0
        %v1126 = vadd.f32 %v1082, %v1125
        %v1127 = vpop.f32.mrb[0].mxu0
        %v1128 = vpop.f32.mrb[0].mxu0
        %v1129 = vpop.f32.mrb[0].mxu0
        %1130 = vdwg.mxu0
        %v1132 = vsel %vm1084, %v1075, 0
        %v1135 = vsel %vm1084, %v742, 0
        %1137 = vmatprep.subr.bf16.mxu0 0
        %1138 = vmatpush1.bf16.xpose.msra.mxu0 %v1135
        %1139 = vmatprep.subr.bf16.mxu0 0
        %1140 = vmatpush1.bf16.xpose.msra.mxu0 0
        %1141 = vmatprep.subr.bf16.mxu0 0
        %1142 = vmatpush1.bf16.xpose.msra.mxu0 0
        %1143 = vmatprep.subr.bf16.mxu0 0
        %1144 = vmatpush1.bf16.xpose.msra.mxu0 0
        %1145 = vmatprep.subr.bf16.mxu0 0
        %1146 = vmatpush1.bf16.xpose.msra.mxu0 0
        %1147 = vmatprep.subr.bf16.mxu0 0
        %1148 = vmatpush1.bf16.xpose.msra.mxu0 0
        %1149 = vmatprep.subr.bf16.mxu0 0
        %1150 = vmatpush1.bf16.xpose.msra.mxu0 0
        %1151 = vmatprep.subr.bf16.mxu0 0
        %1152 = vmatpush1.bf16.xpose.msra.mxu0 0
        %1153 = vmatprep.subr.bf16.mxu0 0
        %1154 = vmatpush1.bf16.xpose.msra.mxu0 0
        %1155 = vmatprep.subr.bf16.mxu0 0
        %1156 = vmatpush1.bf16.xpose.msra.mxu0 0
        %1157 = vmatprep.subr.bf16.mxu0 0
        %1158 = vmatpush1.bf16.xpose.msra.mxu0 0
        %1159 = vmatprep.subr.bf16.mxu0 0
        %1160 = vmatpush1.bf16.xpose.msra.mxu0 0
        %1161 = vmatprep.subr.bf16.mxu0 0
        %1162 = vmatpush1.bf16.xpose.msra.mxu0 0
        %1163 = vmatprep.subr.bf16.mxu0 0
        %1164 = vmatpush1.bf16.xpose.msra.mxu0 0
        %1165 = vmatprep.subr.bf16.mxu0 0
        %1166 = vmatpush1.bf16.xpose.msra.mxu0 0
        %1167 = vmatprep.subr.bf16.mxu0 0
        %1168 = vmatpush1.bf16.xpose.msra.mxu0 0
        %1169 = vmatprep.mubr.bf16.mxu0 0
        %1170 = vmatmul.mubr.bf16.gmra.mrb[0].mxu0 %v1132
        %v1171 = vpop.f32.mrb[0].mxu0
        %v1172 = vadd.f32 %v1082, %v1171
        %v1173 = vpop.f32.mrb[0].mxu0
        %v1174 = vpop.f32.mrb[0].mxu0
        %v1175 = vpop.f32.mrb[0].mxu0
        %1176 = vdwg.mxu0
        %v1178 = vsel %vm1084, %v1076, 0
        %v1181 = vsel %vm1084, %v743, 0
        %1183 = vmatprep.subr.bf16.mxu0 0
        %1184 = vmatpush1.bf16.xpose.msra.mxu0 %v1181
        %1185 = vmatprep.subr.bf16.mxu0 0
        %1186 = vmatpush1.bf16.xpose.msra.mxu0 0
        %1187 = vmatprep.subr.bf16.mxu0 0
        %1188 = vmatpush1.bf16.xpose.msra.mxu0 0
        %1189 = vmatprep.subr.bf16.mxu0 0
        %1190 = vmatpush1.bf16.xpose.msra.mxu0 0
        %1191 = vmatprep.subr.bf16.mxu0 0
        %1192 = vmatpush1.bf16.xpose.msra.mxu0 0
        %1193 = vmatprep.subr.bf16.mxu0 0
        %1194 = vmatpush1.bf16.xpose.msra.mxu0 0
        %1195 = vmatprep.subr.bf16.mxu0 0
        %1196 = vmatpush1.bf16.xpose.msra.mxu0 0
        %1197 = vmatprep.subr.bf16.mxu0 0
        %1198 = vmatpush1.bf16.xpose.msra.mxu0 0
        %1199 = vmatprep.subr.bf16.mxu0 0
        %1200 = vmatpush1.bf16.xpose.msra.mxu0 0
        %1201 = vmatprep.subr.bf16.mxu0 0
        %1202 = vmatpush1.bf16.xpose.msra.mxu0 0
        %1203 = vmatprep.subr.bf16.mxu0 0
        %1204 = vmatpush1.bf16.xpose.msra.mxu0 0
        %1205 = vmatprep.subr.bf16.mxu0 0
        %1206 = vmatpush1.bf16.xpose.msra.mxu0 0
        %1207 = vmatprep.subr.bf16.mxu0 0
        %1208 = vmatpush1.bf16.xpose.msra.mxu0 0
        %1209 = vmatprep.subr.bf16.mxu0 0
        %1210 = vmatpush1.bf16.xpose.msra.mxu0 0
        %1211 = vmatprep.subr.bf16.mxu0 0
        %1212 = vmatpush1.bf16.xpose.msra.mxu0 0
        %1213 = vmatprep.subr.bf16.mxu0 0
        %1214 = vmatpush1.bf16.xpose.msra.mxu0 0
        %1215 = vmatprep.mubr.bf16.mxu0 0
        %1216 = vmatmul.mubr.bf16.gmra.mrb[0].mxu0 %v1178
        %v1217 = vpop.f32.mrb[0].mxu0
        %v1218 = vadd.f32 %v1082, %v1217
        %v1219 = vpop.f32.mrb[0].mxu0
        %v1220 = vpop.f32.mrb[0].mxu0
        %v1221 = vpop.f32.mrb[0].mxu0
        %1222 = vdwg.mxu0
        %v1224 = vsel %vm1084, %v1077, 0
        %v1227 = vsel %vm1084, %v744, 0
        %1229 = vmatprep.subr.bf16.mxu0 0
        %1230 = vmatpush1.bf16.xpose.msra.mxu0 %v1227
        %1231 = vmatprep.subr.bf16.mxu0 0
        %1232 = vmatpush1.bf16.xpose.msra.mxu0 0
        %1233 = vmatprep.subr.bf16.mxu0 0
        %1234 = vmatpush1.bf16.xpose.msra.mxu0 0
        %1235 = vmatprep.subr.bf16.mxu0 0
        %1236 = vmatpush1.bf16.xpose.msra.mxu0 0
        %1237 = vmatprep.subr.bf16.mxu0 0
        %1238 = vmatpush1.bf16.xpose.msra.mxu0 0
        %1239 = vmatprep.subr.bf16.mxu0 0
        %1240 = vmatpush1.bf16.xpose.msra.mxu0 0
        %1241 = vmatprep.subr.bf16.mxu0 0
        %1242 = vmatpush1.bf16.xpose.msra.mxu0 0
        %1243 = vmatprep.subr.bf16.mxu0 0
        %1244 = vmatpush1.bf16.xpose.msra.mxu0 0
        %1245 = vmatprep.subr.bf16.mxu0 0
        %1246 = vmatpush1.bf16.xpose.msra.mxu0 0
        %1247 = vmatprep.subr.bf16.mxu0 0
        %1248 = vmatpush1.bf16.xpose.msra.mxu0 0
        %1249 = vmatprep.subr.bf16.mxu0 0
        %1250 = vmatpush1.bf16.xpose.msra.mxu0 0
        %1251 = vmatprep.subr.bf16.mxu0 0
        %1252 = vmatpush1.bf16.xpose.msra.mxu0 0
        %1253 = vmatprep.subr.bf16.mxu0 0
        %1254 = vmatpush1.bf16.xpose.msra.mxu0 0
        %1255 = vmatprep.subr.bf16.mxu0 0
        %1256 = vmatpush1.bf16.xpose.msra.mxu0 0
        %1257 = vmatprep.subr.bf16.mxu0 0
        %1258 = vmatpush1.bf16.xpose.msra.mxu0 0
        %1259 = vmatprep.subr.bf16.mxu0 0
        %1260 = vmatpush1.bf16.xpose.msra.mxu0 0
        %1261 = vmatprep.mubr.bf16.mxu0 0
        %1262 = vmatmul.mubr.bf16.gmra.mrb[0].mxu0 %v1224
        %v1263 = vpop.f32.mrb[0].mxu0
        %v1264 = vadd.f32 %v1082, %v1263
        %v1265 = vpop.f32.mrb[0].mxu0
        %v1266 = vpop.f32.mrb[0].mxu0
        %v1267 = vpop.f32.mrb[0].mxu0
        %1268 = vdwg.mxu0
        %v1269 = vsel %vm1084, %v1126, -inf
        %1270 = vmax.xlane.f32.xlu0 %v1269
        %v1271 = vpop.xlane.xlu0 %1270
        %v1272 = vsel %vm1084, %v1172, -inf
        %1273 = vmax.xlane.f32.xlu0 %v1272
        %v1274 = vpop.xlane.xlu0 %1273
        %v1275 = vsel %vm1084, %v1218, -inf
        %1276 = vmax.xlane.f32.xlu0 %v1275
        %v1277 = vpop.xlane.xlu0 %1276
        %v1278 = vsel %vm1084, %v1264, -inf
        %1279 = vmax.xlane.f32.xlu0 %v1278
        %v1280 = vpop.xlane.xlu0 %1279
        %v1281 = vsub.f32 %v1126, %v1271
        %v1282 = vsub.f32 %v1172, %v1274
        %v1283 = vsub.f32 %v1218, %v1277
        %v1284 = vsub.f32 %v1264, %v1280
        %v1285 = vmul.f32 %v1281, 1.442695
        %v1286 = vpow.pop %v1285
        %v1287 = vmul.f32 %v1282, 1.442695
        %v1288 = vpow.pop %v1287
        %v1289 = vmul.f32 %v1283, 1.442695
        %v1290 = vpow.pop %v1289
        %v1291 = vmul.f32 %v1284, 1.442695
        %v1292 = vpow.pop %v1291
        %v1293 = vsel %vm1084, %v1286, 0.0
        %1294 = vadd.xlane.f32.xlu0 %v1293
        %v1295 = vpop.xlane.xlu0 %1294
        %v1296 = vsel %vm1084, %v1288, 0.0
        %1297 = vadd.xlane.f32.xlu0 %v1296
        %v1298 = vpop.xlane.xlu0 %1297
        %v1299 = vsel %vm1084, %v1290, 0.0
        %1300 = vadd.xlane.f32.xlu0 %v1299
        %v1301 = vpop.xlane.xlu0 %1300
        %v1302 = vsel %vm1084, %v1292, 0.0
        %1303 = vadd.xlane.f32.xlu0 %v1302
        %v1304 = vpop.xlane.xlu0 %1303
        %v1305 = vpack.c.bf16 %v1286, %v1286
        %v1306 = vpack.c.bf16 %v1288, %v1288
        %v1307 = vpack.c.bf16 %v1290, %v1290
        %v1308 = vpack.c.bf16 %v1292, %v1292
        %v1310 = vsel %vm1084, %v1305, 0
        %vm1312 = vcmask 1043456
        %v1314 = vsel %vm1312, %v893, 0
        %1316 = vmatprep.subr.bf16.mxu0 0
        %1317 = vmatpush1.bf16.msra.mxu0 %v1314
        %1318 = vmatprep.subr.bf16.mxu0 0
        %1319 = vmatpush1.bf16.msra.mxu0 0
        %1320 = vmatprep.subr.bf16.mxu0 0
        %1321 = vmatpush1.bf16.msra.mxu0 0
        %1322 = vmatprep.subr.bf16.mxu0 0
        %1323 = vmatpush1.bf16.msra.mxu0 0
        %1324 = vmatprep.subr.bf16.mxu0 0
        %1325 = vmatpush1.bf16.msra.mxu0 0
        %1326 = vmatprep.subr.bf16.mxu0 0
        %1327 = vmatpush1.bf16.msra.mxu0 0
        %1328 = vmatprep.subr.bf16.mxu0 0
        %1329 = vmatpush1.bf16.msra.mxu0 0
        %1330 = vmatprep.subr.bf16.mxu0 0
        %1331 = vmatpush1.bf16.msra.mxu0 0
        %1332 = vmatprep.subr.bf16.mxu0 0
        %1333 = vmatpush1.bf16.msra.mxu0 0
        %1334 = vmatprep.subr.bf16.mxu0 0
        %1335 = vmatpush1.bf16.msra.mxu0 0
        %1336 = vmatprep.subr.bf16.mxu0 0
        %1337 = vmatpush1.bf16.msra.mxu0 0
        %1338 = vmatprep.subr.bf16.mxu0 0
        %1339 = vmatpush1.bf16.msra.mxu0 0
        %1340 = vmatprep.subr.bf16.mxu0 0
        %1341 = vmatpush1.bf16.msra.mxu0 0
        %1342 = vmatprep.subr.bf16.mxu0 0
        %1343 = vmatpush1.bf16.msra.mxu0 0
        %1344 = vmatprep.subr.bf16.mxu0 0
        %1345 = vmatpush1.bf16.msra.mxu0 0
        %1346 = vmatprep.subr.bf16.mxu0 0
        %1347 = vmatpush1.bf16.msra.mxu0 0
        %1348 = vmatprep.mubr.bf16.mxu0 0
        %1349 = vmatmul.mubr.bf16.gmra.mrb[0].mxu0 %v1310
        %v1350 = vpop.f32.mrb[0].mxu0
        %v1351 = vadd.f32 0.0, %v1350
        %v1352 = vpop.f32.mrb[0].mxu0
        %v1353 = vpop.f32.mrb[0].mxu0
        %v1354 = vpop.f32.mrb[0].mxu0
        %1355 = vdwg.mxu0
        %v1357 = vsel %vm1084, %v1306, 0
        %v1360 = vsel %vm1312, %v894, 0
        %1362 = vmatprep.subr.bf16.mxu0 0
        %1363 = vmatpush1.bf16.msra.mxu0 %v1360
        %1364 = vmatprep.subr.bf16.mxu0 0
        %1365 = vmatpush1.bf16.msra.mxu0 0
        %1366 = vmatprep.subr.bf16.mxu0 0
        %1367 = vmatpush1.bf16.msra.mxu0 0
        %1368 = vmatprep.subr.bf16.mxu0 0
        %1369 = vmatpush1.bf16.msra.mxu0 0
        %1370 = vmatprep.subr.bf16.mxu0 0
        %1371 = vmatpush1.bf16.msra.mxu0 0
        %1372 = vmatprep.subr.bf16.mxu0 0
        %1373 = vmatpush1.bf16.msra.mxu0 0
        %1374 = vmatprep.subr.bf16.mxu0 0
        %1375 = vmatpush1.bf16.msra.mxu0 0
        %1376 = vmatprep.subr.bf16.mxu0 0
        %1377 = vmatpush1.bf16.msra.mxu0 0
        %1378 = vmatprep.subr.bf16.mxu0 0
        %1379 = vmatpush1.bf16.msra.mxu0 0
        %1380 = vmatprep.subr.bf16.mxu0 0
        %1381 = vmatpush1.bf16.msra.mxu0 0
        %1382 = vmatprep.subr.bf16.mxu0 0
        %1383 = vmatpush1.bf16.msra.mxu0 0
        %1384 = vmatprep.subr.bf16.mxu0 0
        %1385 = vmatpush1.bf16.msra.mxu0 0
        %1386 = vmatprep.subr.bf16.mxu0 0
        %1387 = vmatpush1.bf16.msra.mxu0 0
        %1388 = vmatprep.subr.bf16.mxu0 0
        %1389 = vmatpush1.bf16.msra.mxu0 0
        %1390 = vmatprep.subr.bf16.mxu0 0
        %1391 = vmatpush1.bf16.msra.mxu0 0
        %1392 = vmatprep.subr.bf16.mxu0 0
        %1393 = vmatpush1.bf16.msra.mxu0 0
        %1394 = vmatprep.mubr.bf16.mxu0 0
        %1395 = vmatmul.mubr.bf16.gmra.mrb[0].mxu0 %v1357
        %v1396 = vpop.f32.mrb[0].mxu0
        %v1397 = vadd.f32 0.0, %v1396
        %v1398 = vpop.f32.mrb[0].mxu0
        %v1399 = vpop.f32.mrb[0].mxu0
        %v1400 = vpop.f32.mrb[0].mxu0
        %1401 = vdwg.mxu0
        %v1403 = vsel %vm1084, %v1307, 0
        %v1406 = vsel %vm1312, %v895, 0
        %1408 = vmatprep.subr.bf16.mxu0 0
        %1409 = vmatpush1.bf16.msra.mxu0 %v1406
        %1410 = vmatprep.subr.bf16.mxu0 0
        %1411 = vmatpush1.bf16.msra.mxu0 0
        %1412 = vmatprep.subr.bf16.mxu0 0
        %1413 = vmatpush1.bf16.msra.mxu0 0
        %1414 = vmatprep.subr.bf16.mxu0 0
        %1415 = vmatpush1.bf16.msra.mxu0 0
        %1416 = vmatprep.subr.bf16.mxu0 0
        %1417 = vmatpush1.bf16.msra.mxu0 0
        %1418 = vmatprep.subr.bf16.mxu0 0
        %1419 = vmatpush1.bf16.msra.mxu0 0
        %1420 = vmatprep.subr.bf16.mxu0 0
        %1421 = vmatpush1.bf16.msra.mxu0 0
        %1422 = vmatprep.subr.bf16.mxu0 0
        %1423 = vmatpush1.bf16.msra.mxu0 0
        %1424 = vmatprep.subr.bf16.mxu0 0
        %1425 = vmatpush1.bf16.msra.mxu0 0
        %1426 = vmatprep.subr.bf16.mxu0 0
        %1427 = vmatpush1.bf16.msra.mxu0 0
        %1428 = vmatprep.subr.bf16.mxu0 0
        %1429 = vmatpush1.bf16.msra.mxu0 0
        %1430 = vmatprep.subr.bf16.mxu0 0
        %1431 = vmatpush1.bf16.msra.mxu0 0
        %1432 = vmatprep.subr.bf16.mxu0 0
        %1433 = vmatpush1.bf16.msra.mxu0 0
        %1434 = vmatprep.subr.bf16.mxu0 0
        %1435 = vmatpush1.bf16.msra.mxu0 0
        %1436 = vmatprep.subr.bf16.mxu0 0
        %1437 = vmatpush1.bf16.msra.mxu0 0
        %1438 = vmatprep.subr.bf16.mxu0 0
        %1439 = vmatpush1.bf16.msra.mxu0 0
        %1440 = vmatprep.mubr.bf16.mxu0 0
        %1441 = vmatmul.mubr.bf16.gmra.mrb[0].mxu0 %v1403
        %v1442 = vpop.f32.mrb[0].mxu0
        %v1443 = vadd.f32 0.0, %v1442
        %v1444 = vpop.f32.mrb[0].mxu0
        %v1445 = vpop.f32.mrb[0].mxu0
        %v1446 = vpop.f32.mrb[0].mxu0
        %1447 = vdwg.mxu0
        %v1449 = vsel %vm1084, %v1308, 0
        %v1452 = vsel %vm1312, %v896, 0
        %1454 = vmatprep.subr.bf16.mxu0 0
        %1455 = vmatpush1.bf16.msra.mxu0 %v1452
        %1456 = vmatprep.subr.bf16.mxu0 0
        %1457 = vmatpush1.bf16.msra.mxu0 0
        %1458 = vmatprep.subr.bf16.mxu0 0
        %1459 = vmatpush1.bf16.msra.mxu0 0
        %1460 = vmatprep.subr.bf16.mxu0 0
        %1461 = vmatpush1.bf16.msra.mxu0 0
        %1462 = vmatprep.subr.bf16.mxu0 0
        %1463 = vmatpush1.bf16.msra.mxu0 0
        %1464 = vmatprep.subr.bf16.mxu0 0
        %1465 = vmatpush1.bf16.msra.mxu0 0
        %1466 = vmatprep.subr.bf16.mxu0 0
        %1467 = vmatpush1.bf16.msra.mxu0 0
        %1468 = vmatprep.subr.bf16.mxu0 0
        %1469 = vmatpush1.bf16.msra.mxu0 0
        %1470 = vmatprep.subr.bf16.mxu0 0
        %1471 = vmatpush1.bf16.msra.mxu0 0
        %1472 = vmatprep.subr.bf16.mxu0 0
        %1473 = vmatpush1.bf16.msra.mxu0 0
        %1474 = vmatprep.subr.bf16.mxu0 0
        %1475 = vmatpush1.bf16.msra.mxu0 0
        %1476 = vmatprep.subr.bf16.mxu0 0
        %1477 = vmatpush1.bf16.msra.mxu0 0
        %1478 = vmatprep.subr.bf16.mxu0 0
        %1479 = vmatpush1.bf16.msra.mxu0 0
        %1480 = vmatprep.subr.bf16.mxu0 0
        %1481 = vmatpush1.bf16.msra.mxu0 0
        %1482 = vmatprep.subr.bf16.mxu0 0
        %1483 = vmatpush1.bf16.msra.mxu0 0
        %1484 = vmatprep.subr.bf16.mxu0 0
        %1485 = vmatpush1.bf16.msra.mxu0 0
        %1486 = vmatprep.mubr.bf16.mxu0 0
        %1487 = vmatmul.mubr.bf16.gmra.mrb[0].mxu0 %v1449
        %v1488 = vpop.f32.mrb[0].mxu0
        %v1489 = vadd.f32 0.0, %v1488
        %v1490 = vpop.f32.mrb[0].mxu0
        %v1491 = vpop.f32.mrb[0].mxu0
        %v1492 = vpop.f32.mrb[0].mxu0
        %1493 = vdwg.mxu0
        %v1494 = vrcp.pop %v1295
        %v1495 = vrcp.pop %v1298
        %v1496 = vrcp.pop %v1301
        %v1497 = vrcp.pop %v1304
        %v1498 = vmul.f32 %v1351, %v1494
        %v1499 = vmul.f32 %v1397, %v1495
        %v1500 = vmul.f32 %v1443, %v1496
        %v1501 = vmul.f32 %v1489, %v1497
        %v1502 = vcombine.low %v1498, %v1500
        %v1503 = vcombine.high %v1498, %v1500
        %v1505 = vunpack.c.l.s4 1983009808
        %v1506 = vunpack.c.0.s8 %v1505
        %v1507 = vlaneseq
        %v1508 = vshrl.u32 %v1507, 7
        %v1509 = vsub.s32 %v1506, %v1508
        %v1510 = vrot.slane %v1502, %v1509
        %v1512 = vunpack.c.l.s4 1983009808
        %v1513 = vunpack.c.0.s8 %v1512
        %v1514 = vlaneseq
        %v1515 = vshrl.u32 %v1514, 7
        %v1516 = vsub.s32 %v1513, %v1515
        %v1517 = vrot.slane %v1503, %v1516
        %v1518 = vcombine.low %v1499, %v1501
        %v1519 = vcombine.high %v1499, %v1501
        %v1521 = vunpack.c.l.s4 1983009808
        %v1522 = vunpack.c.0.s8 %v1521
        %v1523 = vlaneseq
        %v1524 = vshrl.u32 %v1523, 7
        %v1525 = vsub.s32 %v1522, %v1524
        %v1526 = vrot.slane %v1518, %v1525
        %v1528 = vunpack.c.l.s4 1983009808
        %v1529 = vunpack.c.0.s8 %v1528
        %v1530 = vlaneseq
        %v1531 = vshrl.u32 %v1530, 7
        %v1532 = vsub.s32 %v1529, %v1531
        %v1533 = vrot.slane %v1519, %v1532
        %v1534 = vcombine.low %v1510, %v1526
        %v1535 = vcombine.high %v1510, %v1526
        %v1537 = vunpack.c.l.s4 1934713408
        %v1538 = vunpack.c.0.s8 %v1537
        %v1539 = vlaneseq
        %v1540 = vshrl.u32 %v1539, 7
        %v1541 = vsub.s32 %v1538, %v1540
        %v1542 = vrot.slane %v1534, %v1541
        %v1544 = vunpack.c.l.s4 1934713408
        %v1545 = vunpack.c.0.s8 %v1544
        %v1546 = vlaneseq
        %v1547 = vshrl.u32 %v1546, 7
        %v1548 = vsub.s32 %v1545, %v1547
        %v1549 = vrot.slane %v1535, %v1548
        %v1550 = vcombine.low %v1517, %v1533
        %v1551 = vcombine.high %v1517, %v1533
        %v1553 = vunpack.c.l.s4 1934713408
        %v1554 = vunpack.c.0.s8 %v1553
        %v1555 = vlaneseq
        %v1556 = vshrl.u32 %v1555, 7
        %v1557 = vsub.s32 %v1554, %v1556
        %v1558 = vrot.slane %v1550, %v1557
        %v1560 = vunpack.c.l.s4 1934713408
        %v1561 = vunpack.c.0.s8 %v1560
        %v1562 = vlaneseq
        %v1563 = vshrl.u32 %v1562, 7
        %v1564 = vsub.s32 %v1561, %v1563
        %v1565 = vrot.slane %v1551, %v1564
        %v1566 = vcombine.high %v1542, 0.0
        %v1567 = vcombine.high %v1549, 0.0
        %v1568 = vcombine.high %v1558, 0.0
        %v1569 = vcombine.high %v1565, 0.0
        %v1570 = vcombine.low %v1542, %v1549
        %v1572 = vunpack.c.l.s4 1983009808
        %v1573 = vunpack.c.0.s8 %v1572
        %v1574 = vlaneseq
        %v1575 = vshrl.u32 %v1574, 7
        %v1576 = vsub.s32 %v1573, %v1575
        %v1577 = vrot.slane %v1570, %v1576
        %v1578 = vcombine.low %v1566, %v1567
        %v1580 = vunpack.c.l.s4 1983009808
        %v1581 = vunpack.c.0.s8 %v1580
        %v1582 = vlaneseq
        %v1583 = vshrl.u32 %v1582, 7
        %v1584 = vsub.s32 %v1581, %v1583
        %v1585 = vrot.slane %v1578, %v1584
        %v1586 = vcombine.low %v1558, %v1565
        %v1588 = vunpack.c.l.s4 1983009808
        %v1589 = vunpack.c.0.s8 %v1588
        %v1590 = vlaneseq
        %v1591 = vshrl.u32 %v1590, 7
        %v1592 = vsub.s32 %v1589, %v1591
        %v1593 = vrot.slane %v1586, %v1592
        %v1594 = vcombine.low %v1568, %v1569
        %v1596 = vunpack.c.l.s4 1983009808
        %v1597 = vunpack.c.0.s8 %v1596
        %v1598 = vlaneseq
        %v1599 = vshrl.u32 %v1598, 7
        %v1600 = vsub.s32 %v1597, %v1599
        %v1601 = vrot.slane %v1594, %v1600
        %v1602 = vcombine.low %v1577, %v1585
        %v1603 = vcombine.high %v1577, %v1585
        %v1605 = vunpack.c.l.s4 1934713408
        %v1606 = vunpack.c.0.s8 %v1605
        %v1607 = vlaneseq
        %v1608 = vshrl.u32 %v1607, 7
        %v1609 = vsub.s32 %v1606, %v1608
        %v1610 = vrot.slane %v1602, %v1609
        %v1612 = vunpack.c.l.s4 1934713408
        %v1613 = vunpack.c.0.s8 %v1612
        %v1614 = vlaneseq
        %v1615 = vshrl.u32 %v1614, 7
        %v1616 = vsub.s32 %v1613, %v1615
        %v1617 = vrot.slane %v1603, %v1616
        %v1618 = vcombine.low %v1593, %v1601
        %v1619 = vcombine.high %v1593, %v1601
        %v1621 = vunpack.c.l.s4 1934713408
        %v1622 = vunpack.c.0.s8 %v1621
        %v1623 = vlaneseq
        %v1624 = vshrl.u32 %v1623, 7
        %v1625 = vsub.s32 %v1622, %v1624
        %v1626 = vrot.slane %v1618, %v1625
        %v1628 = vunpack.c.l.s4 1934713408
        %v1629 = vunpack.c.0.s8 %v1628
        %v1630 = vlaneseq
        %v1631 = vshrl.u32 %v1630, 7
        %v1632 = vsub.s32 %v1629, %v1631
        %v1633 = vrot.slane %v1619, %v1632
        %v1634 = vcombine.low %v1610, %v1626
        %v1635 = vcombine.high %v1610, %v1626
        %v1636 = vcombine.low %v1617, %v1633
        %v1637 = vcombine.high %v1617, %v1633
        %1639 = vrot.lane.b32.xlu0 %v1635, 8
        %v1640 = vpop.permute.xlu0 %1639
        %1643 = vrot.lane.b32.xlu0 %v1636, 16
        %v1644 = vpop.permute.xlu0 %1643
        %1647 = vrot.lane.b32.xlu0 %v1637, 24
        %v1648 = vpop.permute.xlu0 %1647
        %v1650 = vsel %vm1084, %v1634, %v1640
        %vm1651 = vcmask 130048
        %v1652 = vsel %vm1651, %v1650, %v1644
        %vm1653 = vcmask 195584
        %v1654 = vsel %vm1653, %v1652, %v1648
        %v1655 = vpack.c.bf16 %v1654, %v1654
        %v1657 = vlaneseq
        %v1658 = vshrl.u32 %v1657, 7
        %v1659 = vsub.s32 0, %v1658
        %v1660 = vrot.slane %v901, %v1659
        %v1666 = vunpack.c.l.b16 %v897
        %v1667 = vunpack.c.l.b16 %v898
        %v1668 = vunpack.c.l.b16 %v899
        %v1669 = vunpack.c.l.b16 %v900
        %v1670 = vpack.c.b16 %v1667, %v1666
        %v1671 = vpack.c.b16 %v1669, %v1668
        %v1675 = vsel %vm482, %v1655, 0
        %1677 = vmatprep.subr.bf16.mxu0 0
        %1678 = vmatpush1.bf16.msra.mxu0 %v1670
        %1679 = vmatprep.subr.bf16.mxu0 0
        %1680 = vmatpush1.bf16.msra.mxu0 %v1671
        %1681 = vmatprep.subr.bf16.mxu0 0
        %1682 = vmatpush1.bf16.msra.mxu0 0
        %1683 = vmatprep.subr.bf16.mxu0 0
        %1684 = vmatpush1.bf16.msra.mxu0 0
        %1685 = vmatprep.subr.bf16.mxu0 0
        %1686 = vmatpush1.bf16.msra.mxu0 0
        %1687 = vmatprep.subr.bf16.mxu0 0
        %1688 = vmatpush1.bf16.msra.mxu0 0
        %1689 = vmatprep.subr.bf16.mxu0 0
        %1690 = vmatpush1.bf16.msra.mxu0 0
        %1691 = vmatprep.subr.bf16.mxu0 0
        %1692 = vmatpush1.bf16.msra.mxu0 0
        %1693 = vmatprep.subr.bf16.mxu0 0
        %1694 = vmatpush1.bf16.msra.mxu0 0
        %1695 = vmatprep.subr.bf16.mxu0 0
        %1696 = vmatpush1.bf16.msra.mxu0 0
        %1697 = vmatprep.subr.bf16.mxu0 0
        %1698 = vmatpush1.bf16.msra.mxu0 0
        %1699 = vmatprep.subr.bf16.mxu0 0
        %1700 = vmatpush1.bf16.msra.mxu0 0
        %1701 = vmatprep.subr.bf16.mxu0 0
        %1702 = vmatpush1.bf16.msra.mxu0 0
        %1703 = vmatprep.subr.bf16.mxu0 0
        %1704 = vmatpush1.bf16.msra.mxu0 0
        %1705 = vmatprep.subr.bf16.mxu0 0
        %1706 = vmatpush1.bf16.msra.mxu0 0
        %1707 = vmatprep.subr.bf16.mxu0 0
        %1708 = vmatpush1.bf16.msra.mxu0 0
        %1709 = vmatprep.mubr.bf16.mxu0 0
        %1710 = vmatmul.mubr.bf16.gmra.mrb[0].mxu0 %v1675
        %v1711 = vpop.f32.mrb[0].mxu0
        %v1712 = vadd.f32 %v1660, %v1711
        %v1713 = vpop.f32.mrb[0].mxu0
        %v1714 = vpop.f32.mrb[0].mxu0
        %v1715 = vpop.f32.mrb[0].mxu0
        %1716 = vdwg.mxu0
        %v1717 = vadd.f32 %v926, %v1712
        %v1718 = vsel %vm482, %v1717, 0.0
        %1719 = vadd.xlane.f32.xlu0 %v1718
        %v1720 = vpop.xlane.xlu0 %1719
        %v1721 = vmul.f32 %v1720, %v486
        %v1722 = vsub.f32 %v1717, %v1721
        %v1723 = vmul.f32 %v1722, %v1722
        %v1724 = vsel %vm482, %v1723, 0.0
        %1725 = vadd.xlane.f32.xlu0 %v1724
        %v1726 = vpop.xlane.xlu0 %1725
        %v1727 = vmul.f32 %v1726, 0.032258064
        %v1729 = vlaneseq
        %v1730 = vshrl.u32 %v1729, 7
        %v1731 = vsub.s32 0, %v1730
        %v1732 = vrot.slane %v902, %v1731
        %v1734 = vmul.f32 %v1732, %v1722
        %v1735 = vrsqrt.pop %v1727
        %v1736 = vmul.f32 %v1727, %v1735
        %vm1737 = vcmp.eq.f32.partialorder %v1727, inf
        %v1738 = vsel %vm1737, %v1727, %v1736
        %vm1739 = vcmp.eq.f32.partialorder %v1727, 0.0
        %v1740 = vand.u32 %v1727, 2147483648
        %v1741 = vsel %vm1739, %v1740, %v1738
        %v1742 = vadd.f32 %v1741, 1e-06
        %v1743 = vrcp.pop %v1742
        %v1744 = vmul.f32 %v1734, %v1743
        %v1746 = vlaneseq
        %v1747 = vshrl.u32 %v1746, 7
        %v1748 = vsub.s32 0, %v1747
        %v1749 = vrot.slane %v903, %v1748
        %v1751 = vadd.f32 %v1744, %v1749
        %v1752 = vpack.c.bf16 %v1751, %v1751
        %v1754 = vlaneseq
        %v1755 = vshrl.u32 %v1754, 7
        %v1756 = vsub.s32 0, %v1755
        %v1757 = vrot.slane %v908, %v1756
        %v1763 = vunpack.c.l.b16 %v904
        %v1764 = vunpack.c.l.b16 %v905
        %v1765 = vunpack.c.l.b16 %v906
        %v1766 = vunpack.c.l.b16 %v907
        %v1767 = vpack.c.b16 %v1764, %v1763
        %v1768 = vpack.c.b16 %v1766, %v1765
        %v1772 = vsel %vm482, %v1752, 0
        %1774 = vmatprep.subr.bf16.mxu0 0
        %1775 = vmatpush1.bf16.msra.mxu0 %v1767
        %1776 = vmatprep.subr.bf16.mxu0 0
        %1777 = vmatpush1.bf16.msra.mxu0 %v1768
        %1778 = vmatprep.subr.bf16.mxu0 0
        %1779 = vmatpush1.bf16.msra.mxu0 0
        %1780 = vmatprep.subr.bf16.mxu0 0
        %1781 = vmatpush1.bf16.msra.mxu0 0
        %1782 = vmatprep.subr.bf16.mxu0 0
        %1783 = vmatpush1.bf16.msra.mxu0 0
        %1784 = vmatprep.subr.bf16.mxu0 0
        %1785 = vmatpush1.bf16.msra.mxu0 0
        %1786 = vmatprep.subr.bf16.mxu0 0
        %1787 = vmatpush1.bf16.msra.mxu0 0
        %1788 = vmatprep.subr.bf16.mxu0 0
        %1789 = vmatpush1.bf16.msra.mxu0 0
        %1790 = vmatprep.subr.bf16.mxu0 0
        %1791 = vmatpush1.bf16.msra.mxu0 0
        %1792 = vmatprep.subr.bf16.mxu0 0
        %1793 = vmatpush1.bf16.msra.mxu0 0
        %1794 = vmatprep.subr.bf16.mxu0 0
        %1795 = vmatpush1.bf16.msra.mxu0 0
        %1796 = vmatprep.subr.bf16.mxu0 0
        %1797 = vmatpush1.bf16.msra.mxu0 0
        %1798 = vmatprep.subr.bf16.mxu0 0
        %1799 = vmatpush1.bf16.msra.mxu0 0
        %1800 = vmatprep.subr.bf16.mxu0 0
        %1801 = vmatpush1.bf16.msra.mxu0 0
        %1802 = vmatprep.subr.bf16.mxu0 0
        %1803 = vmatpush1.bf16.msra.mxu0 0
        %1804 = vmatprep.subr.bf16.mxu0 0
        %1805 = vmatpush1.bf16.msra.mxu0 0
        %1806 = vmatprep.mubr.bf16.mxu0 0
        %1807 = vmatmul.mubr.bf16.gmra.mrb[0].mxu0 %v1772
        %v1808 = vpop.f32.mrb[0].mxu0
        %v1809 = vadd.f32 %v1757, %v1808
        %v1810 = vpop.f32.mrb[0].mxu0
        %v1811 = vpop.f32.mrb[0].mxu0
        %v1812 = vpop.f32.mrb[0].mxu0
        %1813 = vdwg.mxu0
        %v1814 = vmul.f32 %v1809, 0.5
        %v1815 = vmul.f32 %v1809, 0.044715
        %v1816 = vmul.f32 %v1815, %v1809
        %v1817 = vmul.f32 %v1816, %v1809
        %v1818 = vadd.f32 %v1809, %v1817
        %v1819 = vmul.f32 %v1818, 0.7978846
        %v1820 = vtanh.pop %v1819
        %v1821 = vadd.f32 %v1820, 1.0
        %v1822 = vmul.f32 %v1814, %v1821
        %v1823 = vpack.c.bf16 %v1822, %v1822
        %v1825 = vlaneseq
        %v1826 = vshrl.u32 %v1825, 7
        %v1827 = vsub.s32 0, %v1826
        %v1828 = vrot.slane %v925, %v1827
        %v1846 = vunpack.c.l.b16 %v909
        %v1847 = vunpack.c.l.b16 %v910
        %v1848 = vunpack.c.l.b16 %v911
        %v1849 = vunpack.c.l.b16 %v912
        %v1850 = vunpack.c.l.b16 %v913
        %v1851 = vunpack.c.l.b16 %v914
        %v1852 = vunpack.c.l.b16 %v915
        %v1853 = vunpack.c.l.b16 %v916
        %v1854 = vunpack.c.l.b16 %v917
        %v1855 = vunpack.c.l.b16 %v918
        %v1856 = vunpack.c.l.b16 %v919
        %v1857 = vunpack.c.l.b16 %v920
        %v1858 = vunpack.c.l.b16 %v921
        %v1859 = vunpack.c.l.b16 %v922
        %v1860 = vunpack.c.l.b16 %v923
        %v1861 = vunpack.c.l.b16 %v924
        %v1862 = vpack.c.b16 %v1847, %v1846
        %v1863 = vpack.c.b16 %v1849, %v1848
        %v1864 = vpack.c.b16 %v1851, %v1850
        %v1865 = vpack.c.b16 %v1853, %v1852
        %v1866 = vpack.c.b16 %v1855, %v1854
        %v1867 = vpack.c.b16 %v1857, %v1856
        %v1868 = vpack.c.b16 %v1859, %v1858
        %v1869 = vpack.c.b16 %v1861, %v1860
        %1878 = vmatprep.subr.bf16.mxu0 0
        %1879 = vmatpush1.bf16.msra.mxu0 %v1862
        %1880 = vmatprep.subr.bf16.mxu0 0
        %1881 = vmatpush1.bf16.msra.mxu0 %v1863
        %1882 = vmatprep.subr.bf16.mxu0 0
        %1883 = vmatpush1.bf16.msra.mxu0 %v1864
        %1884 = vmatprep.subr.bf16.mxu0 0
        %1885 = vmatpush1.bf16.msra.mxu0 %v1865
        %1886 = vmatprep.subr.bf16.mxu0 0
        %1887 = vmatpush1.bf16.msra.mxu0 %v1866
        %1888 = vmatprep.subr.bf16.mxu0 0
        %1889 = vmatpush1.bf16.msra.mxu0 %v1867
        %1890 = vmatprep.subr.bf16.mxu0 0
        %1891 = vmatpush1.bf16.msra.mxu0 %v1868
        %1892 = vmatprep.subr.bf16.mxu0 0
        %1893 = vmatpush1.bf16.msra.mxu0 %v1869
        %1894 = vmatprep.subr.bf16.mxu0 0
        %1895 = vmatpush1.bf16.msra.mxu0 0
        %1896 = vmatprep.subr.bf16.mxu0 0
        %1897 = vmatpush1.bf16.msra.mxu0 0
        %1898 = vmatprep.subr.bf16.mxu0 0
        %1899 = vmatpush1.bf16.msra.mxu0 0
        %1900 = vmatprep.subr.bf16.mxu0 0
        %1901 = vmatpush1.bf16.msra.mxu0 0
        %1902 = vmatprep.subr.bf16.mxu0 0
        %1903 = vmatpush1.bf16.msra.mxu0 0
        %1904 = vmatprep.subr.bf16.mxu0 0
        %1905 = vmatpush1.bf16.msra.mxu0 0
        %1906 = vmatprep.subr.bf16.mxu0 0
        %1907 = vmatpush1.bf16.msra.mxu0 0
        %1908 = vmatprep.subr.bf16.mxu0 0
        %1909 = vmatpush1.bf16.msra.mxu0 0
        %1910 = vmatprep.mubr.bf16.mxu0 0
        %1911 = vmatmul.mubr.bf16.gmra.mrb[0].mxu0 %v1823
        %v1912 = vpop.f32.mrb[0].mxu0
        %v1913 = vadd.f32 %v1828, %v1912
        %v1914 = vpop.f32.mrb[0].mxu0
        %v1915 = vpop.f32.mrb[0].mxu0
        %v1916 = vpop.f32.mrb[0].mxu0
        %1917 = vdwg.mxu0
        %v1918 = vadd.f32 %v1717, %v1913
        %1919 = vst.msk [vmem:[%s469] sm:$0xff] %vm482, %v1918
        %s1920 = sand.u32 %s340, 1
        %s1921 = scalar_lea.sflag [#allocation4], %s1920
        %s1922 = sand.u32 %s340, 1
        %s1923 = smul.addr %s1922, 8
        %s1924 = scalar_lea.vmem [#allocation3], %s1923
        // Predicated region
        $region77: #{tpu_custom_call.1} parent=75 // pred_check
          %p1925 = pneg %p350
        $region78: #{tpu_custom_call.1} parent=75 // pred_check_branch
          %1927 = sbr.rel (%p1925) target = $region80
        $region79: #{tpu_custom_call.1} parent=75 // pred_region
          %s1929 = ssub.s32 128, 128
          %1930 = vsyncadd %s1921, %s1929
          %s1931 = smul.addr %s28, 128
          %s1932 = scalar_lea.hbm %s14, %s1931
          %s1934 = sshll.u32 %s1924, 4
          %s1935 = int_to_ptr.vmem [resolvable:$true] %s1934
          %1937 = dma.vmem_to_hbm [thread:$0]  %s1935, 128, %s1932, %s1921
        $region80: #{tpu_custom_call.1} parent=75 // pred_fallthru
          _
      $region76: #{tpu_custom_call.1} parent=5 // pred_fallthru
        _
      %p1938 = scmp.le.s32.totalorder 2, %s23
      // Predicated region
      $region81: #{tpu_custom_call.1} parent=5 // pred_check
        %p1939 = pneg %p1938
      $region82: #{tpu_custom_call.1} parent=5 // pred_check_branch
        %1941 = sbr.rel (%p1939) target = $region84
      $region83: #{tpu_custom_call.1} parent=5 // pred_region
        %s1942 = ssub.s32 %s23, 2
        // Predicated region
        $region85: #{tpu_custom_call.1} parent=83 // pred_check
          %p1943 = pneg %p356
        $region86: #{tpu_custom_call.1} parent=83 // pred_check_branch
          %1945 = sbr.rel (%p1943) target = $region88
        $region87: #{tpu_custom_call.1} parent=83 // pred_region
          %s1946 = sand.u32 %s341, 1
          %s1947 = scalar_lea.sflag [#allocation4], %s1946
          %s1948 = sand.u32 %s341, 1
          %s1949 = smul.addr %s1948, 8
          %s1950 = scalar_lea.vmem [#allocation3], %s1949
          %1951 = dma.done %s1947, 128
        $region88: #{tpu_custom_call.1} parent=83 // pred_fallthru
          _
      $region84: #{tpu_custom_call.1} parent=5 // pred_fallthru
        _
    $region6: #{tpu_custom_call.1} parent=1 // loop_footer
      %s27 = sadd.s32 1, %s23
    $region7: #{tpu_custom_call.1} parent=1 // loop_footer_branch
      %22 = sbr.rel target = $region3
    $region8: #{tpu_custom_call.1} parent=1 // loop_exit
      _
    %1952 = vsyncpa [#allocation4], 1
    %s1953 = scalar_lea.sflag [#allocation4], 1
    %1954 = vsyncpa %s1953, 1

// kernel: tpu_custom_call.1
$region0: #{tpu_custom_call.1}
  #allocation0 [shape = 'u32[]', space=smem, size = 0x4, offset = 0x4, fixed_abs, tag = 'smem constant byte address 0x4 - core index']
  #allocation1 [shape = 'u32[144,128]{1,0:T(1,128)}', space=vmem, size = 0x12000, scoped, tag = 'internal scratch']
  #allocation2 [shape = 'f32[8,32]{1,0:T(8,128)}', space=vmem, size = 0x1000, scoped, tag = 'scratch operand']
  %s0 = inlined_call_operand.vmem [shape: f32[2,8,32], index: 0, kind: input, shape index: {}]
  %s1 = inlined_call_operand.vmem [shape: f32[2,1,8], index: 1, kind: input, shape index: {}]
  %s2 = inlined_call_operand.vmem [shape: bf16[32,96], index: 2, kind: input, shape index: {}]
  %s3 = inlined_call_operand.vmem [shape: f32[1,96], index: 3, kind: input, shape index: {}]
  %s4 = inlined_call_operand.vmem [shape: bf16[32,32], index: 4, kind: input, shape index: {}]
  %s5 = inlined_call_operand.vmem [shape: f32[1,32], index: 5, kind: input, shape index: {}]
  %s6 = inlined_call_operand.vmem [shape: f32[1,32], index: 6, kind: input, shape index: {}]
  %s7 = inlined_call_operand.vmem [shape: f32[1,32], index: 7, kind: input, shape index: {}]
  %s8 = inlined_call_operand.vmem [shape: f32[1,32], index: 8, kind: input, shape index: {}]
  %s9 = inlined_call_operand.vmem [shape: f32[1,32], index: 9, kind: input, shape index: {}]
  %s10 = inlined_call_operand.vmem [shape: bf16[32,128], index: 10, kind: input, shape index: {}]
  %s11 = inlined_call_operand.vmem [shape: f32[1,128], index: 11, kind: input, shape index: {}]
  %s12 = inlined_call_operand.vmem [shape: bf16[128,32], index: 12, kind: input, shape index: {}]
  %s13 = inlined_call_operand.vmem [shape: f32[1,32], index: 13, kind: input, shape index: {}]
  %s14 = inlined_call_operand.hbm [shape: f32[2,8,32], index: 14, kind: output, shape index: {}]
  %s15 = sld [smem:[#allocation0]]
  $region89: #{tpu_custom_call.1} parent=0
    _
  %s17 = ssub.s32 1, %s15
  %s18 = scalar_select 0, %s17, %s15
  $region1: #{tpu_custom_call.1} parent=0
    #allocation3 [shape = 'u8[8192]{0}', space=vmem, size = 0x2000, scoped, tag = 'output window, operand 0']
    #allocation4 [shape = 's32[2]{0}', space=sflag, size = 0x8, scoped, tag = 'scoped memory for tpu_custom_call.1']
    %19 = vsyncpa [#allocation4], 0
    %s20 = scalar_lea.sflag [#allocation4], 1
    %21 = vsyncpa %s20, 0
    loop: start=0, step=1, limit=4
    $region2: #{tpu_custom_call.1} parent=1 // loop_pre_header
      _
    $region3: #{tpu_custom_call.1} parent=1 // loop_header
      %s23 = sphi 0, %s27
      %p24 = scmp.ge.s32.totalorder %s23, 4
      %s33 = sphi 0, %s35
      %s36 = sphi 0, %s33
      %s37 = sphi 0, %s36
      %s53 = sphi 0, %s37
      %s59 = sphi 0, %s61
      %s62 = sphi 0, %s59
      %s63 = sphi 0, %s62
      %s79 = sphi 0, %s63
      %s83 = sphi 0, %s83
      %s85 = sphi 0, %s83
      %s86 = sphi 0, %s85
      %s100 = sphi 0, %s86
      %s104 = sphi 0, %s104
      %s106 = sphi 0, %s104
      %s107 = sphi 0, %s106
      %s121 = sphi 0, %s107
      %s125 = sphi 0, %s125
      %s127 = sphi 0, %s125
      %s128 = sphi 0, %s127
      %s142 = sphi 0, %s128
      %s146 = sphi 0, %s146
      %s148 = sphi 0, %s146
      %s149 = sphi 0, %s148
      %s163 = sphi 0, %s149
      %s167 = sphi 0, %s167
      %s169 = sphi 0, %s167
      %s170 = sphi 0, %s169
      %s184 = sphi 0, %s170
      %s188 = sphi 0, %s188
      %s190 = sphi 0, %s188
      %s191 = sphi 0, %s190
      %s205 = sphi 0, %s191
      %s209 = sphi 0, %s209
      %s211 = sphi 0, %s209
      %s212 = sphi 0, %s211
      %s226 = sphi 0, %s212
      %s230 = sphi 0, %s230
      %s232 = sphi 0, %s230
      %s233 = sphi 0, %s232
      %s247 = sphi 0, %s233
      %s251 = sphi 0, %s251
      %s253 = sphi 0, %s251
      %s254 = sphi 0, %s253
      %s268 = sphi 0, %s254
      %s272 = sphi 0, %s272
      %s274 = sphi 0, %s272
      %s275 = sphi 0, %s274
      %s289 = sphi 0, %s275
      %s293 = sphi 0, %s293
      %s295 = sphi 0, %s293
      %s296 = sphi 0, %s295
      %s310 = sphi 0, %s296
      %s314 = sphi 0, %s314
      %s316 = sphi 0, %s314
      %s317 = sphi 0, %s316
      %s331 = sphi 0, %s317
      %s337 = sphi 0, %s339
      %s340 = sphi 0, %s337
      %s341 = sphi 0, %s340
      %s357 = sphi 0, %s341
    $region4: #{tpu_custom_call.1} parent=1 // loop_header_branch
      %26 = sbr.rel (%p24) target = $region8
    $region5: #{tpu_custom_call.1} parent=1 // loop_body
      %s28 = ssub.s32 %s23, 1
      %s29 = ssub.s32 %s23, 2
      %s30 = sadd.s32 %s23, 1
      %s31 = ssub.s32 %s23, %s30
      %p32 = scmp.eq.s32.totalorder %s31, 0
      %s34 = sadd.s32 %s33, 1
      %s35 = scalar_select %p32, %s33, %s34
      %p38 = pneg %p32
      %p39 = scmp.eq.s32.totalorder %s23, 1
      %p40 = por %p38, %p39
      %p41 = scmp.ne.s32.totalorder %s33, %s36
      %p42 = scmp.eq.s32.totalorder %s23, 0
      %p43 = por %p41, %p42
      %p44 = scmp.ne.s32.totalorder %s33, %s36
      %p45 = scmp.eq.s32.totalorder %s28, 1
      %p46 = por %p44, %p45
      %p47 = scmp.ne.s32.totalorder %s36, %s37
      %p48 = scmp.eq.s32.totalorder %s28, 0
      %p49 = por %p47, %p48
      %p50 = scmp.ne.s32.totalorder %s36, %s37
      %p51 = scmp.eq.s32.totalorder %s29, 1
      %p52 = por %p50, %p51
      %p54 = scmp.ne.s32.totalorder %s37, %s53
      %p55 = scmp.eq.s32.totalorder %s29, 0
      %p56 = por %p54, %p55
      %s57 = ssub.s32 %s23, %s30
      %p58 = scmp.eq.s32.totalorder %s57, 0
      %s60 = sadd.s32 %s59, 1
      %s61 = scalar_select %p58, %s59, %s60
      %p64 = pneg %p58
      %p65 = scmp.eq.s32.totalorder %s23, 1
      %p66 = por %p64, %p65
      %p67 = scmp.ne.s32.totalorder %s59, %s62
      %p68 = scmp.eq.s32.totalorder %s23, 0
      %p69 = por %p67, %p68
      %p70 = scmp.ne.s32.totalorder %s59, %s62
      %p71 = scmp.eq.s32.totalorder %s28, 1
      %p72 = por %p70, %p71
      %p73 = scmp.ne.s32.totalorder %s62, %s63
      %p74 = scmp.eq.s32.totalorder %s28, 0
      %p75 = por %p73, %p74
      %p76 = scmp.ne.s32.totalorder %s62, %s63
      %p77 = scmp.eq.s32.totalorder %s29, 1
      %p78 = por %p76, %p77
      %p80 = scmp.ne.s32.totalorder %s63, %s79
      %p81 = scmp.eq.s32.totalorder %s29, 0
      %p82 = por %p80, %p81
      %s84 = sadd.s32 %s83, 1
      %p87 = scmp.eq.s32.totalorder %s23, 1
      %p88 = scmp.ne.s32.totalorder %s83, %s85
      %p89 = scmp.eq.s32.totalorder %s23, 0
      %p90 = por %p88, %p89
      %p91 = scmp.ne.s32.totalorder %s83, %s85
      %p92 = scmp.eq.s32.totalorder %s28, 1
      %p93 = por %p91, %p92
      %p94 = scmp.ne.s32.totalorder %s85, %s86
      %p95 = scmp.eq.s32.totalorder %s28, 0
      %p96 = por %p94, %p95
      %p97 = scmp.ne.s32.totalorder %s85, %s86
      %p98 = scmp.eq.s32.totalorder %s29, 1
      %p99 = por %p97, %p98
      %p101 = scmp.ne.s32.totalorder %s86, %s100
      %p102 = scmp.eq.s32.totalorder %s29, 0
      %p103 = por %p101, %p102
      %s105 = sadd.s32 %s104, 1
      %p108 = scmp.eq.s32.totalorder %s23, 1
      %p109 = scmp.ne.s32.totalorder %s104, %s106
      %p110 = scmp.eq.s32.totalorder %s23, 0
      %p111 = por %p109, %p110
      %p112 = scmp.ne.s32.totalorder %s104, %s106
      %p113 = scmp.eq.s32.totalorder %s28, 1
      %p114 = por %p112, %p113
      %p115 = scmp.ne.s32.totalorder %s106, %s107
      %p116 = scmp.eq.s32.totalorder %s28, 0
      %p117 = por %p115, %p116
      %p118 = scmp.ne.s32.totalorder %s106, %s107
      %p119 = scmp.eq.s32.totalorder %s29, 1
      %p120 = por %p118, %p119
      %p122 = scmp.ne.s32.totalorder %s107, %s121
      %p123 = scmp.eq.s32.totalorder %s29, 0
      %p124 = por %p122, %p123
      %s126 = sadd.s32 %s125, 1
      %p129 = scmp.eq.s32.totalorder %s23, 1
      %p130 = scmp.ne.s32.totalorder %s125, %s127
      %p131 = scmp.eq.s32.totalorder %s23, 0
      %p132 = por %p130, %p131
      %p133 = scmp.ne.s32.totalorder %s125, %s127
      %p134 = scmp.eq.s32.totalorder %s28, 1
      %p135 = por %p133, %p134
      %p136 = scmp.ne.s32.totalorder %s127, %s128
      %p137 = scmp.eq.s32.totalorder %s28, 0
      %p138 = por %p136, %p137
      %p139 = scmp.ne.s32.totalorder %s127, %s128
      %p140 = scmp.eq.s32.totalorder %s29, 1
      %p141 = por %p139, %p140
      %p143 = scmp.ne.s32.totalorder %s128, %s142
      %p144 = scmp.eq.s32.totalorder %s29, 0
      %p145 = por %p143, %p144
      %s147 = sadd.s32 %s146, 1
      %p150 = scmp.eq.s32.totalorder %s23, 1
      %p151 = scmp.ne.s32.totalorder %s146, %s148
      %p152 = scmp.eq.s32.totalorder %s23, 0
      %p153 = por %p151, %p152
      %p154 = scmp.ne.s32.totalorder %s146, %s148
      %p155 = scmp.eq.s32.totalorder %s28, 1
      %p156 = por %p154, %p155
      %p157 = scmp.ne.s32.totalorder %s148, %s149
      %p158 = scmp.eq.s32.totalorder %s28, 0
      %p159 = por %p157, %p158
      %p160 = scmp.ne.s32.totalorder %s148, %s149
      %p161 = scmp.eq.s32.totalorder %s29, 1
      %p162 = por %p160, %p161
      %p164 = scmp.ne.s32.totalorder %s149, %s163
      %p165 = scmp.eq.s32.totalorder %s29, 0
      %p166 = por %p164, %p165
      %s168 = sadd.s32 %s167, 1
      %p171 = scmp.eq.s32.totalorder %s23, 1
      %p172 = scmp.ne.s32.totalorder %s167, %s169
      %p173 = scmp.eq.s32.totalorder %s23, 0
      %p174 = por %p172, %p173
      %p175 = scmp.ne.s32.totalorder %s167, %s169
      %p176 = scmp.eq.s32.totalorder %s28, 1
      %p177 = por %p175, %p176
      %p178 = scmp.ne.s32.totalorder %s169, %s170
      %p179 = scmp.eq.s32.totalorder %s28, 0
      %p180 = por %p178, %p179
      %p181 = scmp.ne.s32.totalorder %s169, %s170
      %p182 = scmp.eq.s32.totalorder %s29, 1
      %p183 = por %p181, %p182
      %p185 = scmp.ne.s32.totalorder %s170, %s184
      %p186 = scmp.eq.s32.totalorder %s29, 0
      %p187 = por %p185, %p186
      %s189 = sadd.s32 %s188, 1
      %p192 = scmp.eq.s32.totalorder %s23, 1
      %p193 = scmp.ne.s32.totalorder %s188, %s190
      %p194 = scmp.eq.s32.totalorder %s23, 0
      %p195 = por %p193, %p194
      %p196 = scmp.ne.s32.totalorder %s188, %s190
      %p197 = scmp.eq.s32.totalorder %s28, 1
      %p198 = por %p196, %p197
      %p199 = scmp.ne.s32.totalorder %s190, %s191
      %p200 = scmp.eq.s32.totalorder %s28, 0
      %p201 = por %p199, %p200
      %p202 = scmp.ne.s32.totalorder %s190, %s191
      %p203 = scmp.eq.s32.totalorder %s29, 1
      %p204 = por %p202, %p203
      %p206 = scmp.ne.s32.totalorder %s191, %s205
      %p207 = scmp.eq.s32.totalorder %s29, 0
      %p208 = por %p206, %p207
      %s210 = sadd.s32 %s209, 1
      %p213 = scmp.eq.s32.totalorder %s23, 1
      %p214 = scmp.ne.s32.totalorder %s209, %s211
      %p215 = scmp.eq.s32.totalorder %s23, 0
      %p216 = por %p214, %p215
      %p217 = scmp.ne.s32.totalorder %s209, %s211
      %p218 = scmp.eq.s32.totalorder %s28, 1
      %p219 = por %p217, %p218
      %p220 = scmp.ne.s32.totalorder %s211, %s212
      %p221 = scmp.eq.s32.totalorder %s28, 0
      %p222 = por %p220, %p221
      %p223 = scmp.ne.s32.totalorder %s211, %s212
      %p224 = scmp.eq.s32.totalorder %s29, 1
      %p225 = por %p223, %p224
      %p227 = scmp.ne.s32.totalorder %s212, %s226
      %p228 = scmp.eq.s32.totalorder %s29, 0
      %p229 = por %p227, %p228
      %s231 = sadd.s32 %s230, 1
      %p234 = scmp.eq.s32.totalorder %s23, 1
      %p235 = scmp.ne.s32.totalorder %s230, %s232
      %p236 = scmp.eq.s32.totalorder %s23, 0
      %p237 = por %p235, %p236
      %p238 = scmp.ne.s32.totalorder %s230, %s232
      %p239 = scmp.eq.s32.totalorder %s28, 1
      %p240 = por %p238, %p239
      %p241 = scmp.ne.s32.totalorder %s232, %s233
      %p242 = scmp.eq.s32.totalorder %s28, 0
      %p243 = por %p241, %p242
      %p244 = scmp.ne.s32.totalorder %s232, %s233
      %p245 = scmp.eq.s32.totalorder %s29, 1
      %p246 = por %p244, %p245
      %p248 = scmp.ne.s32.totalorder %s233, %s247
      %p249 = scmp.eq.s32.totalorder %s29, 0
      %p250 = por %p248, %p249
      %s252 = sadd.s32 %s251, 1
      %p255 = scmp.eq.s32.totalorder %s23, 1
      %p256 = scmp.ne.s32.totalorder %s251, %s253
      %p257 = scmp.eq.s32.totalorder %s23, 0
      %p258 = por %p256, %p257
      %p259 = scmp.ne.s32.totalorder %s251, %s253
      %p260 = scmp.eq.s32.totalorder %s28, 1
      %p261 = por %p259, %p260
      %p262 = scmp.ne.s32.totalorder %s253, %s254
      %p263 = scmp.eq.s32.totalorder %s28, 0
      %p264 = por %p262, %p263
      %p265 = scmp.ne.s32.totalorder %s253, %s254
      %p266 = scmp.eq.s32.totalorder %s29, 1
      %p267 = por %p265, %p266
      %p269 = scmp.ne.s32.totalorder %s254, %s268
      %p270 = scmp.eq.s32.totalorder %s29, 0
      %p271 = por %p269, %p270
      %s273 = sadd.s32 %s272, 1
      %p276 = scmp.eq.s32.totalorder %s23, 1
      %p277 = scmp.ne.s32.totalorder %s272, %s274
      %p278 = scmp.eq.s32.totalorder %s23, 0
      %p279 = por %p277, %p278
      %p280 = scmp.ne.s32.totalorder %s272, %s274
      %p281 = scmp.eq.s32.totalorder %s28, 1
      %p282 = por %p280, %p281
      %p283 = scmp.ne.s32.totalorder %s274, %s275
      %p284 = scmp.eq.s32.totalorder %s28, 0
      %p285 = por %p283, %p284
      %p286 = scmp.ne.s32.totalorder %s274, %s275
      %p287 = scmp.eq.s32.totalorder %s29, 1
      %p288 = por %p286, %p287
      %p290 = scmp.ne.s32.totalorder %s275, %s289
      %p291 = scmp.eq.s32.totalorder %s29, 0
      %p292 = por %p290, %p291
      %s294 = sadd.s32 %s293, 1
      %p297 = scmp.eq.s32.totalorder %s23, 1
      %p298 = scmp.ne.s32.totalorder %s293, %s295
      %p299 = scmp.eq.s32.totalorder %s23, 0
      %p300 = por %p298, %p299
      %p301 = scmp.ne.s32.totalorder %s293, %s295
      %p302 = scmp.eq.s32.totalorder %s28, 1
      %p303 = por %p301, %p302
      %p304 = scmp.ne.s32.totalorder %s295, %s296
      %p305 = scmp.eq.s32.totalorder %s28, 0
      %p306 = por %p304, %p305
      %p307 = scmp.ne.s32.totalorder %s295, %s296
      %p308 = scmp.eq.s32.totalorder %s29, 1
      %p309 = por %p307, %p308
      %p311 = scmp.ne.s32.totalorder %s296, %s310
      %p312 = scmp.eq.s32.totalorder %s29, 0
      %p313 = por %p311, %p312
      %s315 = sadd.s32 %s314, 1
      %p318 = scmp.eq.s32.totalorder %s23, 1
      %p319 = scmp.ne.s32.totalorder %s314, %s316
      %p320 = scmp.eq.s32.totalorder %s23, 0
      %p321 = por %p319, %p320
      %p322 = scmp.ne.s32.totalorder %s314, %s316
      %p323 = scmp.eq.s32.totalorder %s28, 1
      %p324 = por %p322, %p323
      %p325 = scmp.ne.s32.totalorder %s316, %s317
      %p326 = scmp.eq.s32.totalorder %s28, 0
      %p327 = por %p325, %p326
      %p328 = scmp.ne.s32.totalorder %s316, %s317
      %p329 = scmp.eq.s32.totalorder %s29, 1
      %p330 = por %p328, %p329
      %p332 = scmp.ne.s32.totalorder %s317, %s331
      %p333 = scmp.eq.s32.totalorder %s29, 0
      %p334 = por %p332, %p333
      %s335 = ssub.s32 %s23, %s30
      %p336 = scmp.eq.s32.totalorder %s335, 0
      %s338 = sadd.s32 %s337, 1
      %s339 = scalar_select %p336, %s337, %s338
      %p342 = pneg %p336
      %p343 = scmp.eq.s32.totalorder %s23, 1
      %p344 = por %p342, %p343
      %p345 = scmp.ne.s32.totalorder %s337, %s340
      %p346 = scmp.eq.s32.totalorder %s23, 0
      %p347 = por %p345, %p346
      %p348 = scmp.ne.s32.totalorder %s337, %s340
      %p349 = scmp.eq.s32.totalorder %s28, 1
      %p350 = por %p348, %p349
      %p351 = scmp.ne.s32.totalorder %s340, %s341
      %p352 = scmp.eq.s32.totalorder %s28, 0
      %p353 = por %p351, %p352
      %p354 = scmp.ne.s32.totalorder %s340, %s341
      %p355 = scmp.eq.s32.totalorder %s29, 1
      %p356 = por %p354, %p355
      %p358 = scmp.ne.s32.totalorder %s341, %s357
      %p359 = scmp.eq.s32.totalorder %s29, 0
      %p360 = por %p358, %p359
      %p361 = scmp.le.s32.totalorder 1, %s23
      %p362 = scmp.lt.s32.totalorder %s23, 3
      %p363 = pnand %p361, %p362
      %p364 = pneg %p363
      // Predicated region
      $region9: #{tpu_custom_call.1} parent=5 // pred_check
        _
      $region10: #{tpu_custom_call.1} parent=5 // pred_check_branch
        %366 = sbr.rel (%p363) target = $region12
      $region11: #{tpu_custom_call.1} parent=5 // pred_region
        %s367 = ssub.s32 %s23, 1
        // Predicated region
        $region13: #{tpu_custom_call.1} parent=11 // pred_check
          %p368 = pneg %p96
        $region14: #{tpu_custom_call.1} parent=11 // pred_check_branch
          %370 = sbr.rel (%p368) target = $region16
        $region15: #{tpu_custom_call.1} parent=11 // pred_region
          _
        $region16: #{tpu_custom_call.1} parent=11 // pred_fallthru
          _
        // Predicated region
        $region17: #{tpu_custom_call.1} parent=11 // pred_check
          %p371 = pneg %p117
        $region18: #{tpu_custom_call.1} parent=11 // pred_check_branch
          %373 = sbr.rel (%p371) target = $region20
        $region19: #{tpu_custom_call.1} parent=11 // pred_region
          _
        $region20: #{tpu_custom_call.1} parent=11 // pred_fallthru
          _
        // Predicated region
        $region21: #{tpu_custom_call.1} parent=11 // pred_check
          %p374 = pneg %p138
        $region22: #{tpu_custom_call.1} parent=11 // pred_check_branch
          %376 = sbr.rel (%p374) target = $region24
        $region23: #{tpu_custom_call.1} parent=11 // pred_region
          _
        $region24: #{tpu_custom_call.1} parent=11 // pred_fallthru
          _
        // Predicated region
        $region25: #{tpu_custom_call.1} parent=11 // pred_check
          %p377 = pneg %p159
        $region26: #{tpu_custom_call.1} parent=11 // pred_check_branch
          %379 = sbr.rel (%p377) target = $region28
        $region27: #{tpu_custom_call.1} parent=11 // pred_region
          _
        $region28: #{tpu_custom_call.1} parent=11 // pred_fallthru
          _
        // Predicated region
        $region29: #{tpu_custom_call.1} parent=11 // pred_check
          %p380 = pneg %p180
        $region30: #{tpu_custom_call.1} parent=11 // pred_check_branch
          %382 = sbr.rel (%p380) target = $region32
        $region31: #{tpu_custom_call.1} parent=11 // pred_region
          _
        $region32: #{tpu_custom_call.1} parent=11 // pred_fallthru
          _
        // Predicated region
        $region33: #{tpu_custom_call.1} parent=11 // pred_check
          %p383 = pneg %p201
        $region34: #{tpu_custom_call.1} parent=11 // pred_check_branch
          %385 = sbr.rel (%p383) target = $region36
        $region35: #{tpu_custom_call.1} parent=11 // pred_region
          _
        $region36: #{tpu_custom_call.1} parent=11 // pred_fallthru
          _
        // Predicated region
        $region37: #{tpu_custom_call.1} parent=11 // pred_check
          %p386 = pneg %p222
        $region38: #{tpu_custom_call.1} parent=11 // pred_check_branch
          %388 = sbr.rel (%p386) target = $region40
        $region39: #{tpu_custom_call.1} parent=11 // pred_region
          _
        $region40: #{tpu_custom_call.1} parent=11 // pred_fallthru
          _
        // Predicated region
        $region41: #{tpu_custom_call.1} parent=11 // pred_check
          %p389 = pneg %p243
        $region42: #{tpu_custom_call.1} parent=11 // pred_check_branch
          %391 = sbr.rel (%p389) target = $region44
        $region43: #{tpu_custom_call.1} parent=11 // pred_region
          _
        $region44: #{tpu_custom_call.1} parent=11 // pred_fallthru
          _
        // Predicated region
        $region45: #{tpu_custom_call.1} parent=11 // pred_check
          %p392 = pneg %p264
        $region46: #{tpu_custom_call.1} parent=11 // pred_check_branch
          %394 = sbr.rel (%p392) target = $region48
        $region47: #{tpu_custom_call.1} parent=11 // pred_region
          _
        $region48: #{tpu_custom_call.1} parent=11 // pred_fallthru
          _
        // Predicated region
        $region49: #{tpu_custom_call.1} parent=11 // pred_check
          %p395 = pneg %p285
        $region50: #{tpu_custom_call.1} parent=11 // pred_check_branch
          %397 = sbr.rel (%p395) target = $region52
        $region51: #{tpu_custom_call.1} parent=11 // pred_region
          _
        $region52: #{tpu_custom_call.1} parent=11 // pred_fallthru
          _
        // Predicated region
        $region53: #{tpu_custom_call.1} parent=11 // pred_check
          %p398 = pneg %p306
        $region54: #{tpu_custom_call.1} parent=11 // pred_check_branch
          %400 = sbr.rel (%p398) target = $region56
        $region55: #{tpu_custom_call.1} parent=11 // pred_region
          _
        $region56: #{tpu_custom_call.1} parent=11 // pred_fallthru
          _
        // Predicated region
        $region57: #{tpu_custom_call.1} parent=11 // pred_check
          %p401 = pneg %p327
        $region58: #{tpu_custom_call.1} parent=11 // pred_check_branch
          %403 = sbr.rel (%p401) target = $region60
        $region59: #{tpu_custom_call.1} parent=11 // pred_region
          _
        $region60: #{tpu_custom_call.1} parent=11 // pred_fallthru
          _
      $region12: #{tpu_custom_call.1} parent=5 // pred_fallthru
        _
      %p404 = scmp.lt.s32.totalorder %s23, 2
      // Predicated region
      $region61: #{tpu_custom_call.1} parent=5 // pred_check
        %p405 = pneg %p404
      $region62: #{tpu_custom_call.1} parent=5 // pred_check_branch
        %407 = sbr.rel (%p405) target = $region64
      $region63: #{tpu_custom_call.1} parent=5 // pred_region
        // Predicated region
        $region65: #{tpu_custom_call.1} parent=63 // pred_check
          %p408 = pneg %p43
        $region66: #{tpu_custom_call.1} parent=63 // pred_check_branch
          %410 = sbr.rel (%p408) target = $region68
        $region67: #{tpu_custom_call.1} parent=63 // pred_region
          %p411 = scmp.lt.s32.totalorder %s23, 1
          %s412 = scalar_select %p411, %s23, 1
          %s413 = smul.addr %s412, 8
          %s414 = scalar_lea.vmem %s0, %s413
        $region68: #{tpu_custom_call.1} parent=63 // pred_fallthru
          _
        // Predicated region
        $region69: #{tpu_custom_call.1} parent=63 // pred_check
          %p415 = pneg %p69
        $region70: #{tpu_custom_call.1} parent=63 // pred_check_branch
          %417 = sbr.rel (%p415) target = $region72
        $region71: #{tpu_custom_call.1} parent=63 // pred_region
          %p418 = scmp.lt.s32.totalorder %s23, 1
          %s419 = scalar_select %p418, %s23, 1
          %s420 = scalar_lea.vmem %s1, %s419
        $region72: #{tpu_custom_call.1} parent=63 // pred_fallthru
          _
      $region64: #{tpu_custom_call.1} parent=5 // pred_fallthru
        _
      %p421 = scmp.le.s32.totalorder 1, %s23
      %p422 = scmp.lt.s32.totalorder %s23, 3
      %p423 = pnand %p421, %p422
      %p424 = pneg %p423
      // Predicated region
      $region73: #{tpu_custom_call.1} parent=5 // pred_check
        _
      $region74: #{tpu_custom_call.1} parent=5 // pred_check_branch
        %426 = sbr.rel (%p423) target = $region76
      $region75: #{tpu_custom_call.1} parent=5 // pred_region
        %s427 = ssub.s32 %s23, 1
        %p428 = scmp.lt.s32.totalorder %s28, 1
        %s429 = scalar_select %p428, %s28, 1
        %s430 = smul.addr %s429, 8
        %s431 = scalar_lea.vmem %s0, %s430
        %p432 = pneg %p49
        %p433 = pneg %p46
        %p434 = scmp.lt.s32.totalorder %s28, 1
        %s435 = scalar_select %p434, %s28, 1
        %s436 = scalar_lea.vmem %s1, %s435
        %p437 = pneg %p75
        %p438 = pneg %p72
        %p439 = pneg %p96
        %p440 = pneg %p93
        %p441 = pneg %p117
        %p442 = pneg %p114
        %p443 = pneg %p138
        %p444 = pneg %p135
        %p445 = pneg %p159
        %p446 = pneg %p156
        %p447 = pneg %p180
        %p448 = pneg %p177
        %p449 = pneg %p201
        %p450 = pneg %p198
        %p451 = pneg %p222
        %p452 = pneg %p219
        %p453 = pneg %p243
        %p454 = pneg %p240
        %p455 = pneg %p264
        %p456 = pneg %p261
        %p457 = pneg %p285
        %p458 = pneg %p282
        %p459 = pneg %p306
        %p460 = pneg %p303
        %p461 = pneg %p327
        %p462 = pneg %p324
        %p463 = pneg %p353
        %p464 = pneg %p350
        %s465 = sand.u32 %s340, 1
        %s466 = scalar_lea.sflag [#allocation4], %s465
        %s467 = sand.u32 %s340, 1
        %s468 = smul.addr %s467, 8
        %s469 = scalar_lea.vmem [#allocation3], %s468
        %p470 = scmp.lt.s32.totalorder %s28, 1
        %s471 = scalar_select %p470, %s28, 1
        %s472 = smul.addr %s471, 8
        %s473 = scalar_lea.vmem %s0, %s472
        %p474 = scmp.lt.s32.totalorder %s28, 1
        %s475 = scalar_select %p474, %s28, 1
        %s476 = scalar_lea.vmem %s1, %s475
        %v478 = vld [vmem:[%s473] sm:$0xff]
        %v479 = vld [vmem:[%s476] sm:$0x1]
        %v480 = vld [vmem:[%s6] sm:$0x1]
        %v481 = vld [vmem:[%s7] sm:$0x1]
        %vm482 = vcmask 261120
        %v483 = vsel %vm482, %v478, 0.0
        %484 = vadd.xlane.f32.xlu0 %v483
        %v485 = vpop.xlane.xlu0 %484
        %v486 = vrcp.pop 32.0
        %v487 = vmul.f32 %v485, %v486
        %v488 = vsub.f32 %v478, %v487
        %v489 = vmul.f32 %v488, %v488
        %v490 = vsel %vm482, %v489, 0.0
        %491 = vadd.xlane.f32.xlu0 %v490
        %v492 = vpop.xlane.xlu0 %491
        %v493 = vmul.f32 %v492, 0.032258064
        %v495 = vlaneseq
        %v496 = vshrl.u32 %v495, 7
        %v497 = vsub.s32 0, %v496
        %v498 = vrot.slane %v480, %v497
        %v500 = vmul.f32 %v498, %v488
        %v501 = vrsqrt.pop %v493
        %v502 = vmul.f32 %v493, %v501
        %vm503 = vcmp.eq.f32.partialorder %v493, inf
        %v504 = vsel %vm503, %v493, %v502
        %vm505 = vcmp.eq.f32.partialorder %v493, 0.0
        %v506 = vand.u32 %v493, 2147483648
        %v507 = vsel %vm505, %v506, %v504
        %v508 = vadd.f32 %v507, 1e-06
        %v509 = vrcp.pop %v508
        %v510 = vmul.f32 %v500, %v509
        %v512 = vlaneseq
        %v513 = vshrl.u32 %v512, 7
        %v514 = vsub.s32 0, %v513
        %v515 = vrot.slane %v481, %v514
        %v517 = vadd.f32 %v510, %v515
        %v518 = vpack.c.bf16 %v517, %v517
        %v519 = vld [vmem:[%s2] sm:$0xf]
        %v520 = vld [vmem:[%s2 + $0x4] sm:$0xf]
        %v521 = vld [vmem:[%s2 + $0x8] sm:$0xf]
        %v522 = vld [vmem:[%s2 + $0xc] sm:$0xf]
        %v523 = vld [vmem:[%s3] sm:$0x1]
        %v525 = vlaneseq
        %v526 = vshrl.u32 %v525, 7
        %v527 = vsub.s32 0, %v526
        %v528 = vrot.slane %v523, %v527
        %v534 = vunpack.c.l.b16 %v519
        %v535 = vunpack.c.l.b16 %v520
        %v536 = vunpack.c.l.b16 %v521
        %v537 = vunpack.c.l.b16 %v522
        %v538 = vpack.c.b16 %v535, %v534
        %v539 = vpack.c.b16 %v537, %v536
        %v543 = vsel %vm482, %v518, 0
        %545 = vmatprep.subr.bf16.mxu0 0
        %546 = vmatpush1.bf16.msra.mxu0 %v538
        %547 = vmatprep.subr.bf16.mxu0 0
        %548 = vmatpush1.bf16.msra.mxu0 %v539
        %549 = vmatprep.subr.bf16.mxu0 0
        %550 = vmatpush1.bf16.msra.mxu0 0
        %551 = vmatprep.subr.bf16.mxu0 0
        %552 = vmatpush1.bf16.msra.mxu0 0
        %553 = vmatprep.subr.bf16.mxu0 0
        %554 = vmatpush1.bf16.msra.mxu0 0
        %555 = vmatprep.subr.bf16.mxu0 0
        %556 = vmatpush1.bf16.msra.mxu0 0
        %557 = vmatprep.subr.bf16.mxu0 0
        %558 = vmatpush1.bf16.msra.mxu0 0
        %559 = vmatprep.subr.bf16.mxu0 0
        %560 = vmatpush1.bf16.msra.mxu0 0
        %561 = vmatprep.subr.bf16.mxu0 0
        %562 = vmatpush1.bf16.msra.mxu0 0
        %563 = vmatprep.subr.bf16.mxu0 0
        %564 = vmatpush1.bf16.msra.mxu0 0
        %565 = vmatprep.subr.bf16.mxu0 0
        %566 = vmatpush1.bf16.msra.mxu0 0
        %567 = vmatprep.subr.bf16.mxu0 0
        %568 = vmatpush1.bf16.msra.mxu0 0
        %569 = vmatprep.subr.bf16.mxu0 0
        %570 = vmatpush1.bf16.msra.mxu0 0
        %571 = vmatprep.subr.bf16.mxu0 0
        %572 = vmatpush1.bf16.msra.mxu0 0
        %573 = vmatprep.subr.bf16.mxu0 0
        %574 = vmatpush1.bf16.msra.mxu0 0
        %575 = vmatprep.subr.bf16.mxu0 0
        %576 = vmatpush1.bf16.msra.mxu0 0
        %577 = vmatprep.mubr.bf16.mxu0 0
        %578 = vmatmul.mubr.bf16.gmra.mrb[0].mxu0 %v543
        %v579 = vpop.f32.mrb[0].mxu0
        %v580 = vadd.f32 %v528, %v579
        %v581 = vpop.f32.mrb[0].mxu0
        %v582 = vpop.f32.mrb[0].mxu0
        %v583 = vpop.f32.mrb[0].mxu0
        %584 = vdwg.mxu0
        %585 = vst.msk [vmem:[#allocation2] sm:$0xff] %vm482, %v580
        %587 = vrot.lane.b32.xlu0 %v580, 120
        %v588 = vpop.permute.xlu0 %587
        %589 = vrot.lane.b32.xlu0 %v580, 112
        %v590 = vpop.permute.xlu0 %589
        %591 = vrot.lane.b32.xlu0 %v580, 104
        %v592 = vpop.permute.xlu0 %591
        %593 = vrot.lane.b32.xlu0 %v580, 96
        %v594 = vpop.permute.xlu0 %593
        %595 = vrot.lane.b32.xlu0 %v588, 96
        %v596 = vpop.permute.xlu0 %595
        %597 = vrot.lane.b32.xlu0 %v590, 96
        %v598 = vpop.permute.xlu0 %597
        %599 = vrot.lane.b32.xlu0 %v592, 96
        %v600 = vpop.permute.xlu0 %599
        %v605 = vcombine.low %v594, %v598
        %v606 = vcombine.high %v594, %v598
        %v608 = vunpack.c.l.s4 1983009808
        %v609 = vunpack.c.0.s8 %v608
        %v610 = vlaneseq
        %v611 = vshrl.u32 %v610, 7
        %v612 = vsub.s32 %v609, %v611
        %v613 = vrot.slane %v605, %v612
        %v615 = vunpack.c.l.s4 1983009808
        %v616 = vunpack.c.0.s8 %v615
        %v617 = vlaneseq
        %v618 = vshrl.u32 %v617, 7
        %v619 = vsub.s32 %v616, %v618
        %v620 = vrot.slane %v606, %v619
        %v621 = vcombine.low %v596, %v600
        %v622 = vcombine.high %v596, %v600
        %v624 = vunpack.c.l.s4 1983009808
        %v625 = vunpack.c.0.s8 %v624
        %v626 = vlaneseq
        %v627 = vshrl.u32 %v626, 7
        %v628 = vsub.s32 %v625, %v627
        %v629 = vrot.slane %v621, %v628
        %v631 = vunpack.c.l.s4 1983009808
        %v632 = vunpack.c.0.s8 %v631
        %v633 = vlaneseq
        %v634 = vshrl.u32 %v633, 7
        %v635 = vsub.s32 %v632, %v634
        %v636 = vrot.slane %v622, %v635
        %v637 = vcombine.low %v613, %v629
        %v638 = vcombine.high %v613, %v629
        %v640 = vunpack.c.l.s4 1934713408
        %v641 = vunpack.c.0.s8 %v640
        %v642 = vlaneseq
        %v643 = vshrl.u32 %v642, 7
        %v644 = vsub.s32 %v641, %v643
        %v645 = vrot.slane %v637, %v644
        %v647 = vunpack.c.l.s4 1934713408
        %v648 = vunpack.c.0.s8 %v647
        %v649 = vlaneseq
        %v650 = vshrl.u32 %v649, 7
        %v651 = vsub.s32 %v648, %v650
        %v652 = vrot.slane %v638, %v651
        %v653 = vcombine.low %v620, %v636
        %v654 = vcombine.high %v620, %v636
        %v656 = vunpack.c.l.s4 1934713408
        %v657 = vunpack.c.0.s8 %v656
        %v658 = vlaneseq
        %v659 = vshrl.u32 %v658, 7
        %v660 = vsub.s32 %v657, %v659
        %v661 = vrot.slane %v653, %v660
        %v663 = vunpack.c.l.s4 1934713408
        %v664 = vunpack.c.0.s8 %v663
        %v665 = vlaneseq
        %v666 = vshrl.u32 %v665, 7
        %v667 = vsub.s32 %v664, %v666
        %v668 = vrot.slane %v654, %v667
        %v669 = vcombine.high %v645, 0.0
        %v670 = vcombine.high %v652, 0.0
        %v671 = vcombine.high %v661, 0.0
        %v672 = vcombine.high %v668, 0.0
        %v673 = vcombine.low %v645, %v652
        %v675 = vunpack.c.l.s4 1983009808
        %v676 = vunpack.c.0.s8 %v675
        %v677 = vlaneseq
        %v678 = vshrl.u32 %v677, 7
        %v679 = vsub.s32 %v676, %v678
        %v680 = vrot.slane %v673, %v679
        %v681 = vcombine.low %v669, %v670
        %v683 = vunpack.c.l.s4 1983009808
        %v684 = vunpack.c.0.s8 %v683
        %v685 = vlaneseq
        %v686 = vshrl.u32 %v685, 7
        %v687 = vsub.s32 %v684, %v686
        %v688 = vrot.slane %v681, %v687
        %v689 = vcombine.low %v661, %v668
        %v691 = vunpack.c.l.s4 1983009808
        %v692 = vunpack.c.0.s8 %v691
        %v693 = vlaneseq
        %v694 = vshrl.u32 %v693, 7
        %v695 = vsub.s32 %v692, %v694
        %v696 = vrot.slane %v689, %v695
        %v697 = vcombine.low %v671, %v672
        %v699 = vunpack.c.l.s4 1983009808
        %v700 = vunpack.c.0.s8 %v699
        %v701 = vlaneseq
        %v702 = vshrl.u32 %v701, 7
        %v703 = vsub.s32 %v700, %v702
        %v704 = vrot.slane %v697, %v703
        %v705 = vcombine.low %v680, %v688
        %v706 = vcombine.high %v680, %v688
        %v708 = vunpack.c.l.s4 1934713408
        %v709 = vunpack.c.0.s8 %v708
        %v710 = vlaneseq
        %v711 = vshrl.u32 %v710, 7
        %v712 = vsub.s32 %v709, %v711
        %v713 = vrot.slane %v705, %v712
        %v715 = vunpack.c.l.s4 1934713408
        %v716 = vunpack.c.0.s8 %v715
        %v717 = vlaneseq
        %v718 = vshrl.u32 %v717, 7
        %v719 = vsub.s32 %v716, %v718
        %v720 = vrot.slane %v706, %v719
        %v721 = vcombine.low %v696, %v704
        %v722 = vcombine.high %v696, %v704
        %v724 = vunpack.c.l.s4 1934713408
        %v725 = vunpack.c.0.s8 %v724
        %v726 = vlaneseq
        %v727 = vshrl.u32 %v726, 7
        %v728 = vsub.s32 %v725, %v727
        %v729 = vrot.slane %v721, %v728
        %v731 = vunpack.c.l.s4 1934713408
        %v732 = vunpack.c.0.s8 %v731
        %v733 = vlaneseq
        %v734 = vshrl.u32 %v733, 7
        %v735 = vsub.s32 %v732, %v734
        %v736 = vrot.slane %v722, %v735
        %v737 = vcombine.low %v713, %v729
        %v738 = vcombine.high %v713, %v729
        %v739 = vcombine.low %v720, %v736
        %v740 = vcombine.high %v720, %v736
        %v741 = vpack.c.bf16 %v737, %v737
        %v742 = vpack.c.bf16 %v738, %v738
        %v743 = vpack.c.bf16 %v739, %v739
        %v744 = vpack.c.bf16 %v740, %v740
        %745 = vrot.lane.b32.xlu0 %v580, 64
        %v746 = vpop.permute.xlu0 %745
        %747 = vrot.lane.b32.xlu0 %v588, 64
        %v748 = vpop.permute.xlu0 %747
        %749 = vrot.lane.b32.xlu0 %v590, 64
        %v750 = vpop.permute.xlu0 %749
        %751 = vrot.lane.b32.xlu0 %v592, 64
        %v752 = vpop.permute.xlu0 %751
        %v757 = vcombine.low %v746, %v750
        %v758 = vcombine.high %v746, %v750
        %v760 = vunpack.c.l.s4 1983009808
        %v761 = vunpack.c.0.s8 %v760
        %v762 = vlaneseq
        %v763 = vshrl.u32 %v762, 7
        %v764 = vsub.s32 %v761, %v763
        %v765 = vrot.slane %v757, %v764
        %v767 = vunpack.c.l.s4 1983009808
        %v768 = vunpack.c.0.s8 %v767
        %v769 = vlaneseq
        %v770 = vshrl.u32 %v769, 7
        %v771 = vsub.s32 %v768, %v770
        %v772 = vrot.slane %v758, %v771
        %v773 = vcombine.low %v748, %v752
        %v774 = vcombine.high %v748, %v752
        %v776 = vunpack.c.l.s4 1983009808
        %v777 = vunpack.c.0.s8 %v776
        %v778 = vlaneseq
        %v779 = vshrl.u32 %v778, 7
        %v780 = vsub.s32 %v777, %v779
        %v781 = vrot.slane %v773, %v780
        %v783 = vunpack.c.l.s4 1983009808
        %v784 = vunpack.c.0.s8 %v783
        %v785 = vlaneseq
        %v786 = vshrl.u32 %v785, 7
        %v787 = vsub.s32 %v784, %v786
        %v788 = vrot.slane %v774, %v787
        %v789 = vcombine.low %v765, %v781
        %v790 = vcombine.high %v765, %v781
        %v792 = vunpack.c.l.s4 1934713408
        %v793 = vunpack.c.0.s8 %v792
        %v794 = vlaneseq
        %v795 = vshrl.u32 %v794, 7
        %v796 = vsub.s32 %v793, %v795
        %v797 = vrot.slane %v789, %v796
        %v799 = vunpack.c.l.s4 1934713408
        %v800 = vunpack.c.0.s8 %v799
        %v801 = vlaneseq
        %v802 = vshrl.u32 %v801, 7
        %v803 = vsub.s32 %v800, %v802
        %v804 = vrot.slane %v790, %v803
        %v805 = vcombine.low %v772, %v788
        %v806 = vcombine.high %v772, %v788
        %v808 = vunpack.c.l.s4 1934713408
        %v809 = vunpack.c.0.s8 %v808
        %v810 = vlaneseq
        %v811 = vshrl.u32 %v810, 7
        %v812 = vsub.s32 %v809, %v811
        %v813 = vrot.slane %v805, %v812
        %v815 = vunpack.c.l.s4 1934713408
        %v816 = vunpack.c.0.s8 %v815
        %v817 = vlaneseq
        %v818 = vshrl.u32 %v817, 7
        %v819 = vsub.s32 %v816, %v818
        %v820 = vrot.slane %v806, %v819
        %v821 = vcombine.high %v797, 0.0
        %v822 = vcombine.high %v804, 0.0
        %v823 = vcombine.high %v813, 0.0
        %v824 = vcombine.high %v820, 0.0
        %v825 = vcombine.low %v797, %v804
        %v827 = vunpack.c.l.s4 1983009808
        %v828 = vunpack.c.0.s8 %v827
        %v829 = vlaneseq
        %v830 = vshrl.u32 %v829, 7
        %v831 = vsub.s32 %v828, %v830
        %v832 = vrot.slane %v825, %v831
        %v833 = vcombine.low %v821, %v822
        %v835 = vunpack.c.l.s4 1983009808
        %v836 = vunpack.c.0.s8 %v835
        %v837 = vlaneseq
        %v838 = vshrl.u32 %v837, 7
        %v839 = vsub.s32 %v836, %v838
        %v840 = vrot.slane %v833, %v839
        %v841 = vcombine.low %v813, %v820
        %v843 = vunpack.c.l.s4 1983009808
        %v844 = vunpack.c.0.s8 %v843
        %v845 = vlaneseq
        %v846 = vshrl.u32 %v845, 7
        %v847 = vsub.s32 %v844, %v846
        %v848 = vrot.slane %v841, %v847
        %v849 = vcombine.low %v823, %v824
        %v851 = vunpack.c.l.s4 1983009808
        %v852 = vunpack.c.0.s8 %v851
        %v853 = vlaneseq
        %v854 = vshrl.u32 %v853, 7
        %v855 = vsub.s32 %v852, %v854
        %v856 = vrot.slane %v849, %v855
        %v857 = vcombine.low %v832, %v840
        %v858 = vcombine.high %v832, %v840
        %v860 = vunpack.c.l.s4 1934713408
        %v861 = vunpack.c.0.s8 %v860
        %v862 = vlaneseq
        %v863 = vshrl.u32 %v862, 7
        %v864 = vsub.s32 %v861, %v863
        %v865 = vrot.slane %v857, %v864
        %v867 = vunpack.c.l.s4 1934713408
        %v868 = vunpack.c.0.s8 %v867
        %v869 = vlaneseq
        %v870 = vshrl.u32 %v869, 7
        %v871 = vsub.s32 %v868, %v870
        %v872 = vrot.slane %v858, %v871
        %v873 = vcombine.low %v848, %v856
        %v874 = vcombine.high %v848, %v856
        %v876 = vunpack.c.l.s4 1934713408
        %v877 = vunpack.c.0.s8 %v876
        %v878 = vlaneseq
        %v879 = vshrl.u32 %v878, 7
        %v880 = vsub.s32 %v877, %v879
        %v881 = vrot.slane %v873, %v880
        %v883 = vunpack.c.l.s4 1934713408
        %v884 = vunpack.c.0.s8 %v883
        %v885 = vlaneseq
        %v886 = vshrl.u32 %v885, 7
        %v887 = vsub.s32 %v884, %v886
        %v888 = vrot.slane %v874, %v887
        %v889 = vcombine.low %v865, %v881
        %v890 = vcombine.high %v865, %v881
        %v891 = vcombine.low %v872, %v888
        %v892 = vcombine.high %v872, %v888
        %v893 = vpack.c.bf16 %v889, %v889
        %v894 = vpack.c.bf16 %v890, %v890
        %v895 = vpack.c.bf16 %v891, %v891
        %v896 = vpack.c.bf16 %v892, %v892
        %v897 = vld [vmem:[%s4] sm:$0xf]
        %v898 = vld [vmem:[%s4 + $0x4] sm:$0xf]
        %v899 = vld [vmem:[%s4 + $0x8] sm:$0xf]
        %v900 = vld [vmem:[%s4 + $0xc] sm:$0xf]
        %v901 = vld [vmem:[%s5] sm:$0x1]
        %v902 = vld [vmem:[%s8] sm:$0x1]
        %v903 = vld [vmem:[%s9] sm:$0x1]
        %v904 = vld [vmem:[%s10] sm:$0xf]
        %v905 = vld [vmem:[%s10 + $0x4] sm:$0xf]
        %v906 = vld [vmem:[%s10 + $0x8] sm:$0xf]
        %v907 = vld [vmem:[%s10 + $0xc] sm:$0xf]
        %v908 = vld [vmem:[%s11] sm:$0x1]
        %v909 = vld [vmem:[%s12] sm:$0xf]
        %v910 = vld [vmem:[%s12 + $0x4] sm:$0xf]
        %v911 = vld [vmem:[%s12 + $0x8] sm:$0xf]
        %v912 = vld [vmem:[%s12 + $0xc] sm:$0xf]
        %v913 = vld [vmem:[%s12 + $0x10] sm:$0xf]
        %v914 = vld [vmem:[%s12 + $0x14] sm:$0xf]
        %v915 = vld [vmem:[%s12 + $0x18] sm:$0xf]
        %v916 = vld [vmem:[%s12 + $0x1c] sm:$0xf]
        %v917 = vld [vmem:[%s12 + $0x20] sm:$0xf]
        %v918 = vld [vmem:[%s12 + $0x24] sm:$0xf]
        %v919 = vld [vmem:[%s12 + $0x28] sm:$0xf]
        %v920 = vld [vmem:[%s12 + $0x2c] sm:$0xf]
        %v921 = vld [vmem:[%s12 + $0x30] sm:$0xf]
        %v922 = vld [vmem:[%s12 + $0x34] sm:$0xf]
        %v923 = vld [vmem:[%s12 + $0x38] sm:$0xf]
        %v924 = vld [vmem:[%s12 + $0x3c] sm:$0xf]
        %v925 = vld [vmem:[%s13] sm:$0x1]
        %v926 = vld [vmem:[%s473] sm:$0xff]
        %v927 = vld [vmem:[#allocation2] sm:$0xff]
        %929 = vrot.lane.b32.xlu0 %v927, 120
        %v930 = vpop.permute.xlu0 %929
        %932 = vrot.lane.b32.xlu0 %v927, 112
        %v933 = vpop.permute.xlu0 %932
        %935 = vrot.lane.b32.xlu0 %v927, 104
        %v936 = vpop.permute.xlu0 %935
        %v938 = vcombine.low %v927, %v933
        %v939 = vcombine.high %v927, %v933
        %v941 = vunpack.c.l.s4 1983009808
        %v942 = vunpack.c.0.s8 %v941
        %v943 = vlaneseq
        %v944 = vshrl.u32 %v943, 7
        %v945 = vsub.s32 %v942, %v944
        %v946 = vrot.slane %v938, %v945
        %v948 = vunpack.c.l.s4 1983009808
        %v949 = vunpack.c.0.s8 %v948
        %v950 = vlaneseq
        %v951 = vshrl.u32 %v950, 7
        %v952 = vsub.s32 %v949, %v951
        %v953 = vrot.slane %v939, %v952
        %v954 = vcombine.low %v930, %v936
        %v955 = vcombine.high %v930, %v936
        %v957 = vunpack.c.l.s4 1983009808
        %v958 = vunpack.c.0.s8 %v957
        %v959 = vlaneseq
        %v960 = vshrl.u32 %v959, 7
        %v961 = vsub.s32 %v958, %v960
        %v962 = vrot.slane %v954, %v961
        %v964 = vunpack.c.l.s4 1983009808
        %v965 = vunpack.c.0.s8 %v964
        %v966 = vlaneseq
        %v967 = vshrl.u32 %v966, 7
        %v968 = vsub.s32 %v965, %v967
        %v969 = vrot.slane %v955, %v968
        %v970 = vcombine.low %v946, %v962
        %v971 = vcombine.high %v946, %v962
        %v973 = vunpack.c.l.s4 1934713408
        %v974 = vunpack.c.0.s8 %v973
        %v975 = vlaneseq
        %v976 = vshrl.u32 %v975, 7
        %v977 = vsub.s32 %v974, %v976
        %v978 = vrot.slane %v970, %v977
        %v980 = vunpack.c.l.s4 1934713408
        %v981 = vunpack.c.0.s8 %v980
        %v982 = vlaneseq
        %v983 = vshrl.u32 %v982, 7
        %v984 = vsub.s32 %v981, %v983
        %v985 = vrot.slane %v971, %v984
        %v986 = vcombine.low %v953, %v969
        %v987 = vcombine.high %v953, %v969
        %v989 = vunpack.c.l.s4 1934713408
        %v990 = vunpack.c.0.s8 %v989
        %v991 = vlaneseq
        %v992 = vshrl.u32 %v991, 7
        %v993 = vsub.s32 %v990, %v992
        %v994 = vrot.slane %v986, %v993
        %v996 = vunpack.c.l.s4 1934713408
        %v997 = vunpack.c.0.s8 %v996
        %v998 = vlaneseq
        %v999 = vshrl.u32 %v998, 7
        %v1000 = vsub.s32 %v997, %v999
        %v1001 = vrot.slane %v987, %v1000
        %v1002 = vcombine.high %v978, 0.0
        %v1003 = vcombine.high %v985, 0.0
        %v1004 = vcombine.high %v994, 0.0
        %v1005 = vcombine.high %v1001, 0.0
        %v1006 = vcombine.low %v978, %v985
        %v1008 = vunpack.c.l.s4 1983009808
        %v1009 = vunpack.c.0.s8 %v1008
        %v1010 = vlaneseq
        %v1011 = vshrl.u32 %v1010, 7
        %v1012 = vsub.s32 %v1009, %v1011
        %v1013 = vrot.slane %v1006, %v1012
        %v1014 = vcombine.low %v1002, %v1003
        %v1016 = vunpack.c.l.s4 1983009808
        %v1017 = vunpack.c.0.s8 %v1016
        %v1018 = vlaneseq
        %v1019 = vshrl.u32 %v1018, 7
        %v1020 = vsub.s32 %v1017, %v1019
        %v1021 = vrot.slane %v1014, %v1020
        %v1022 = vcombine.low %v994, %v1001
        %v1024 = vunpack.c.l.s4 1983009808
        %v1025 = vunpack.c.0.s8 %v1024
        %v1026 = vlaneseq
        %v1027 = vshrl.u32 %v1026, 7
        %v1028 = vsub.s32 %v1025, %v1027
        %v1029 = vrot.slane %v1022, %v1028
        %v1030 = vcombine.low %v1004, %v1005
        %v1032 = vunpack.c.l.s4 1983009808
        %v1033 = vunpack.c.0.s8 %v1032
        %v1034 = vlaneseq
        %v1035 = vshrl.u32 %v1034, 7
        %v1036 = vsub.s32 %v1033, %v1035
        %v1037 = vrot.slane %v1030, %v1036
        %v1038 = vcombine.low %v1013, %v1021
        %v1039 = vcombine.high %v1013, %v1021
        %v1041 = vunpack.c.l.s4 1934713408
        %v1042 = vunpack.c.0.s8 %v1041
        %v1043 = vlaneseq
        %v1044 = vshrl.u32 %v1043, 7
        %v1045 = vsub.s32 %v1042, %v1044
        %v1046 = vrot.slane %v1038, %v1045
        %v1048 = vunpack.c.l.s4 1934713408
        %v1049 = vunpack.c.0.s8 %v1048
        %v1050 = vlaneseq
        %v1051 = vshrl.u32 %v1050, 7
        %v1052 = vsub.s32 %v1049, %v1051
        %v1053 = vrot.slane %v1039, %v1052
        %v1054 = vcombine.low %v1029, %v1037
        %v1055 = vcombine.high %v1029, %v1037
        %v1057 = vunpack.c.l.s4 1934713408
        %v1058 = vunpack.c.0.s8 %v1057
        %v1059 = vlaneseq
        %v1060 = vshrl.u32 %v1059, 7
        %v1061 = vsub.s32 %v1058, %v1060
        %v1062 = vrot.slane %v1054, %v1061
        %v1064 = vunpack.c.l.s4 1934713408
        %v1065 = vunpack.c.0.s8 %v1064
        %v1066 = vlaneseq
        %v1067 = vshrl.u32 %v1066, 7
        %v1068 = vsub.s32 %v1065, %v1067
        %v1069 = vrot.slane %v1055, %v1068
        %v1070 = vcombine.low %v1046, %v1062
        %v1071 = vcombine.high %v1046, %v1062
        %v1072 = vcombine.low %v1053, %v1069
        %v1073 = vcombine.high %v1053, %v1069
        %v1074 = vpack.c.bf16 %v1070, %v1070
        %v1075 = vpack.c.bf16 %v1071, %v1071
        %v1076 = vpack.c.bf16 %v1072, %v1072
        %v1077 = vpack.c.bf16 %v1073, %v1073
        %v1079 = vlaneseq
        %v1080 = vshrl.u32 %v1079, 7
        %v1081 = vsub.s32 0, %v1080
        %v1082 = vrot.slane %v479, %v1081
        %vm1084 = vcmask 64512
        %v1086 = vsel %vm1084, %v1074, 0
        %v1089 = vsel %vm1084, %v741, 0
        %1091 = vmatprep.subr.bf16.mxu0 0
        %1092 = vmatpush1.bf16.xpose.msra.mxu0 %v1089
        %1093 = vmatprep.subr.bf16.mxu0 0
        %1094 = vmatpush1.bf16.xpose.msra.mxu0 0
        %1095 = vmatprep.subr.bf16.mxu0 0
        %1096 = vmatpush1.bf16.xpose.msra.mxu0 0
        %1097 = vmatprep.subr.bf16.mxu0 0
        %1098 = vmatpush1.bf16.xpose.msra.mxu0 0
        %1099 = vmatprep.subr.bf16.mxu0 0
        %1100 = vmatpush1.bf16.xpose.msra.mxu0 0
        %1101 = vmatprep.subr.bf16.mxu0 0
        %1102 = vmatpush1.bf16.xpose.msra.mxu0 0
        %1103 = vmatprep.subr.bf16.mxu0 0
        %1104 = vmatpush1.bf16.xpose.msra.mxu0 0
        %1105 = vmatprep.subr.bf16.mxu0 0
        %1106 = vmatpush1.bf16.xpose.msra.mxu0 0
        %1107 = vmatprep.subr.bf16.mxu0 0
        %1108 = vmatpush1.bf16.xpose.msra.mxu0 0
        %1109 = vmatprep.subr.bf16.mxu0 0
        %1110 = vmatpush1.bf16.xpose.msra.mxu0 0
        %1111 = vmatprep.subr.bf16.mxu0 0
        %1112 = vmatpush1.bf16.xpose.msra.mxu0 0
        %1113 = vmatprep.subr.bf16.mxu0 0
        %1114 = vmatpush1.bf16.xpose.msra.mxu0 0
        %1115 = vmatprep.subr.bf16.mxu0 0
        %1116 = vmatpush1.bf16.xpose.msra.mxu0 0
        %1117 = vmatprep.subr.bf16.mxu0 0
        %1118 = vmatpush1.bf16.xpose.msra.mxu0 0
        %1119 = vmatprep.subr.bf16.mxu0 0
        %1120 = vmatpush1.bf16.xpose.msra.mxu0 0
        %1121 = vmatprep.subr.bf16.mxu0 0
        %1122 = vmatpush1.bf16.xpose.msra.mxu0 0
        %1123 = vmatprep.mubr.bf16.mxu0 0
        %1124 = vmatmul.mubr.bf16.gmra.mrb[0].mxu0 %v1086
        %v1125 = vpop.f32.mrb[0].mxu0
        %v1126 = vadd.f32 %v1082, %v1125
        %v1127 = vpop.f32.mrb[0].mxu0
        %v1128 = vpop.f32.mrb[0].mxu0
        %v1129 = vpop.f32.mrb[0].mxu0
        %1130 = vdwg.mxu0
        %v1132 = vsel %vm1084, %v1075, 0
        %v1135 = vsel %vm1084, %v742, 0
        %1137 = vmatprep.subr.bf16.mxu0 0
        %1138 = vmatpush1.bf16.xpose.msra.mxu0 %v1135
        %1139 = vmatprep.subr.bf16.mxu0 0
        %1140 = vmatpush1.bf16.xpose.msra.mxu0 0
        %1141 = vmatprep.subr.bf16.mxu0 0
        %1142 = vmatpush1.bf16.xpose.msra.mxu0 0
        %1143 = vmatprep.subr.bf16.mxu0 0
        %1144 = vmatpush1.bf16.xpose.msra.mxu0 0
        %1145 = vmatprep.subr.bf16.mxu0 0
        %1146 = vmatpush1.bf16.xpose.msra.mxu0 0
        %1147 = vmatprep.subr.bf16.mxu0 0
        %1148 = vmatpush1.bf16.xpose.msra.mxu0 0
        %1149 = vmatprep.subr.bf16.mxu0 0
        %1150 = vmatpush1.bf16.xpose.msra.mxu0 0
        %1151 = vmatprep.subr.bf16.mxu0 0
        %1152 = vmatpush1.bf16.xpose.msra.mxu0 0
        %1153 = vmatprep.subr.bf16.mxu0 0
        %1154 = vmatpush1.bf16.xpose.msra.mxu0 0
        %1155 = vmatprep.subr.bf16.mxu0 0
        %1156 = vmatpush1.bf16.xpose.msra.mxu0 0
        %1157 = vmatprep.subr.bf16.mxu0 0
        %1158 = vmatpush1.bf16.xpose.msra.mxu0 0
        %1159 = vmatprep.subr.bf16.mxu0 0
        %1160 = vmatpush1.bf16.xpose.msra.mxu0 0
        %1161 = vmatprep.subr.bf16.mxu0 0
        %1162 = vmatpush1.bf16.xpose.msra.mxu0 0
        %1163 = vmatprep.subr.bf16.mxu0 0
        %1164 = vmatpush1.bf16.xpose.msra.mxu0 0
        %1165 = vmatprep.subr.bf16.mxu0 0
        %1166 = vmatpush1.bf16.xpose.msra.mxu0 0
        %1167 = vmatprep.subr.bf16.mxu0 0
        %1168 = vmatpush1.bf16.xpose.msra.mxu0 0
        %1169 = vmatprep.mubr.bf16.mxu0 0
        %1170 = vmatmul.mubr.bf16.gmra.mrb[0].mxu0 %v1132
        %v1171 = vpop.f32.mrb[0].mxu0
        %v1172 = vadd.f32 %v1082, %v1171
        %v1173 = vpop.f32.mrb[0].mxu0
        %v1174 = vpop.f32.mrb[0].mxu0
        %v1175 = vpop.f32.mrb[0].mxu0
        %1176 = vdwg.mxu0
        %v1178 = vsel %vm1084, %v1076, 0
        %v1181 = vsel %vm1084, %v743, 0
        %1183 = vmatprep.subr.bf16.mxu0 0
        %1184 = vmatpush1.bf16.xpose.msra.mxu0 %v1181
        %1185 = vmatprep.subr.bf16.mxu0 0
        %1186 = vmatpush1.bf16.xpose.msra.mxu0 0
        %1187 = vmatprep.subr.bf16.mxu0 0
        %1188 = vmatpush1.bf16.xpose.msra.mxu0 0
        %1189 = vmatprep.subr.bf16.mxu0 0
        %1190 = vmatpush1.bf16.xpose.msra.mxu0 0
        %1191 = vmatprep.subr.bf16.mxu0 0
        %1192 = vmatpush1.bf16.xpose.msra.mxu0 0
        %1193 = vmatprep.subr.bf16.mxu0 0
        %1194 = vmatpush1.bf16.xpose.msra.mxu0 0
        %1195 = vmatprep.subr.bf16.mxu0 0
        %1196 = vmatpush1.bf16.xpose.msra.mxu0 0
        %1197 = vmatprep.subr.bf16.mxu0 0
        %1198 = vmatpush1.bf16.xpose.msra.mxu0 0
        %1199 = vmatprep.subr.bf16.mxu0 0
        %1200 = vmatpush1.bf16.xpose.msra.mxu0 0
        %1201 = vmatprep.subr.bf16.mxu0 0
        %1202 = vmatpush1.bf16.xpose.msra.mxu0 0
        %1203 = vmatprep.subr.bf16.mxu0 0
        %1204 = vmatpush1.bf16.xpose.msra.mxu0 0
        %1205 = vmatprep.subr.bf16.mxu0 0
        %1206 = vmatpush1.bf16.xpose.msra.mxu0 0
        %1207 = vmatprep.subr.bf16.mxu0 0
        %1208 = vmatpush1.bf16.xpose.msra.mxu0 0
        %1209 = vmatprep.subr.bf16.mxu0 0
        %1210 = vmatpush1.bf16.xpose.msra.mxu0 0
        %1211 = vmatprep.subr.bf16.mxu0 0
        %1212 = vmatpush1.bf16.xpose.msra.mxu0 0
        %1213 = vmatprep.subr.bf16.mxu0 0
        %1214 = vmatpush1.bf16.xpose.msra.mxu0 0
        %1215 = vmatprep.mubr.bf16.mxu0 0
        %1216 = vmatmul.mubr.bf16.gmra.mrb[0].mxu0 %v1178
        %v1217 = vpop.f32.mrb[0].mxu0
        %v1218 = vadd.f32 %v1082, %v1217
        %v1219 = vpop.f32.mrb[0].mxu0
        %v1220 = vpop.f32.mrb[0].mxu0
        %v1221 = vpop.f32.mrb[0].mxu0
        %1222 = vdwg.mxu0
        %v1224 = vsel %vm1084, %v1077, 0
        %v1227 = vsel %vm1084, %v744, 0
        %1229 = vmatprep.subr.bf16.mxu0 0
        %1230 = vmatpush1.bf16.xpose.msra.mxu0 %v1227
        %1231 = vmatprep.subr.bf16.mxu0 0
        %1232 = vmatpush1.bf16.xpose.msra.mxu0 0
        %1233 = vmatprep.subr.bf16.mxu0 0
        %1234 = vmatpush1.bf16.xpose.msra.mxu0 0
        %1235 = vmatprep.subr.bf16.mxu0 0
        %1236 = vmatpush1.bf16.xpose.msra.mxu0 0
        %1237 = vmatprep.subr.bf16.mxu0 0
        %1238 = vmatpush1.bf16.xpose.msra.mxu0 0
        %1239 = vmatprep.subr.bf16.mxu0 0
        %1240 = vmatpush1.bf16.xpose.msra.mxu0 0
        %1241 = vmatprep.subr.bf16.mxu0 0
        %1242 = vmatpush1.bf16.xpose.msra.mxu0 0
        %1243 = vmatprep.subr.bf16.mxu0 0
        %1244 = vmatpush1.bf16.xpose.msra.mxu0 0
        %1245 = vmatprep.subr.bf16.mxu0 0
        %1246 = vmatpush1.bf16.xpose.msra.mxu0 0
        %1247 = vmatprep.subr.bf16.mxu0 0
        %1248 = vmatpush1.bf16.xpose.msra.mxu0 0
        %1249 = vmatprep.subr.bf16.mxu0 0
        %1250 = vmatpush1.bf16.xpose.msra.mxu0 0
        %1251 = vmatprep.subr.bf16.mxu0 0
        %1252 = vmatpush1.bf16.xpose.msra.mxu0 0
        %1253 = vmatprep.subr.bf16.mxu0 0
        %1254 = vmatpush1.bf16.xpose.msra.mxu0 0
        %1255 = vmatprep.subr.bf16.mxu0 0
        %1256 = vmatpush1.bf16.xpose.msra.mxu0 0
        %1257 = vmatprep.subr.bf16.mxu0 0
        %1258 = vmatpush1.bf16.xpose.msra.mxu0 0
        %1259 = vmatprep.subr.bf16.mxu0 0
        %1260 = vmatpush1.bf16.xpose.msra.mxu0 0
        %1261 = vmatprep.mubr.bf16.mxu0 0
        %1262 = vmatmul.mubr.bf16.gmra.mrb[0].mxu0 %v1224
        %v1263 = vpop.f32.mrb[0].mxu0
        %v1264 = vadd.f32 %v1082, %v1263
        %v1265 = vpop.f32.mrb[0].mxu0
        %v1266 = vpop.f32.mrb[0].mxu0
        %v1267 = vpop.f32.mrb[0].mxu0
        %1268 = vdwg.mxu0
        %v1269 = vsel %vm1084, %v1126, -inf
        %1270 = vmax.xlane.f32.xlu0 %v1269
        %v1271 = vpop.xlane.xlu0 %1270
        %v1272 = vsel %vm1084, %v1172, -inf
        %1273 = vmax.xlane.f32.xlu0 %v1272
        %v1274 = vpop.xlane.xlu0 %1273
        %v1275 = vsel %vm1084, %v1218, -inf
        %1276 = vmax.xlane.f32.xlu0 %v1275
        %v1277 = vpop.xlane.xlu0 %1276
        %v1278 = vsel %vm1084, %v1264, -inf
        %1279 = vmax.xlane.f32.xlu0 %v1278
        %v1280 = vpop.xlane.xlu0 %1279
        %v1281 = vsub.f32 %v1126, %v1271
        %v1282 = vsub.f32 %v1172, %v1274
        %v1283 = vsub.f32 %v1218, %v1277
        %v1284 = vsub.f32 %v1264, %v1280
        %v1285 = vmul.f32 %v1281, 1.442695
        %v1286 = vpow.pop %v1285
        %v1287 = vmul.f32 %v1282, 1.442695
        %v1288 = vpow.pop %v1287
        %v1289 = vmul.f32 %v1283, 1.442695
        %v1290 = vpow.pop %v1289
        %v1291 = vmul.f32 %v1284, 1.442695
        %v1292 = vpow.pop %v1291
        %v1293 = vsel %vm1084, %v1286, 0.0
        %1294 = vadd.xlane.f32.xlu0 %v1293
        %v1295 = vpop.xlane.xlu0 %1294
        %v1296 = vsel %vm1084, %v1288, 0.0
        %1297 = vadd.xlane.f32.xlu0 %v1296
        %v1298 = vpop.xlane.xlu0 %1297
        %v1299 = vsel %vm1084, %v1290, 0.0
        %1300 = vadd.xlane.f32.xlu0 %v1299
        %v1301 = vpop.xlane.xlu0 %1300
        %v1302 = vsel %vm1084, %v1292, 0.0
        %1303 = vadd.xlane.f32.xlu0 %v1302
        %v1304 = vpop.xlane.xlu0 %1303
        %v1305 = vpack.c.bf16 %v1286, %v1286
        %v1306 = vpack.c.bf16 %v1288, %v1288
        %v1307 = vpack.c.bf16 %v1290, %v1290
        %v1308 = vpack.c.bf16 %v1292, %v1292
        %v1310 = vsel %vm1084, %v1305, 0
        %vm1312 = vcmask 1043456
        %v1314 = vsel %vm1312, %v893, 0
        %1316 = vmatprep.subr.bf16.mxu0 0
        %1317 = vmatpush1.bf16.msra.mxu0 %v1314
        %1318 = vmatprep.subr.bf16.mxu0 0
        %1319 = vmatpush1.bf16.msra.mxu0 0
        %1320 = vmatprep.subr.bf16.mxu0 0
        %1321 = vmatpush1.bf16.msra.mxu0 0
        %1322 = vmatprep.subr.bf16.mxu0 0
        %1323 = vmatpush1.bf16.msra.mxu0 0
        %1324 = vmatprep.subr.bf16.mxu0 0
        %1325 = vmatpush1.bf16.msra.mxu0 0
        %1326 = vmatprep.subr.bf16.mxu0 0
        %1327 = vmatpush1.bf16.msra.mxu0 0
        %1328 = vmatprep.subr.bf16.mxu0 0
        %1329 = vmatpush1.bf16.msra.mxu0 0
        %1330 = vmatprep.subr.bf16.mxu0 0
        %1331 = vmatpush1.bf16.msra.mxu0 0
        %1332 = vmatprep.subr.bf16.mxu0 0
        %1333 = vmatpush1.bf16.msra.mxu0 0
        %1334 = vmatprep.subr.bf16.mxu0 0
        %1335 = vmatpush1.bf16.msra.mxu0 0
        %1336 = vmatprep.subr.bf16.mxu0 0
        %1337 = vmatpush1.bf16.msra.mxu0 0
        %1338 = vmatprep.subr.bf16.mxu0 0
        %1339 = vmatpush1.bf16.msra.mxu0 0
        %1340 = vmatprep.subr.bf16.mxu0 0
        %1341 = vmatpush1.bf16.msra.mxu0 0
        %1342 = vmatprep.subr.bf16.mxu0 0
        %1343 = vmatpush1.bf16.msra.mxu0 0
        %1344 = vmatprep.subr.bf16.mxu0 0
        %1345 = vmatpush1.bf16.msra.mxu0 0
        %1346 = vmatprep.subr.bf16.mxu0 0
        %1347 = vmatpush1.bf16.msra.mxu0 0
        %1348 = vmatprep.mubr.bf16.mxu0 0
        %1349 = vmatmul.mubr.bf16.gmra.mrb[0].mxu0 %v1310
        %v1350 = vpop.f32.mrb[0].mxu0
        %v1351 = vadd.f32 0.0, %v1350
        %v1352 = vpop.f32.mrb[0].mxu0
        %v1353 = vpop.f32.mrb[0].mxu0
        %v1354 = vpop.f32.mrb[0].mxu0
        %1355 = vdwg.mxu0
        %v1357 = vsel %vm1084, %v1306, 0
        %v1360 = vsel %vm1312, %v894, 0
        %1362 = vmatprep.subr.bf16.mxu0 0
        %1363 = vmatpush1.bf16.msra.mxu0 %v1360
        %1364 = vmatprep.subr.bf16.mxu0 0
        %1365 = vmatpush1.bf16.msra.mxu0 0
        %1366 = vmatprep.subr.bf16.mxu0 0
        %1367 = vmatpush1.bf16.msra.mxu0 0
        %1368 = vmatprep.subr.bf16.mxu0 0
        %1369 = vmatpush1.bf16.msra.mxu0 0
        %1370 = vmatprep.subr.bf16.mxu0 0
        %1371 = vmatpush1.bf16.msra.mxu0 0
        %1372 = vmatprep.subr.bf16.mxu0 0
        %1373 = vmatpush1.bf16.msra.mxu0 0
        %1374 = vmatprep.subr.bf16.mxu0 0
        %1375 = vmatpush1.bf16.msra.mxu0 0
        %1376 = vmatprep.subr.bf16.mxu0 0
        %1377 = vmatpush1.bf16.msra.mxu0 0
        %1378 = vmatprep.subr.bf16.mxu0 0
        %1379 = vmatpush1.bf16.msra.mxu0 0
        %1380 = vmatprep.subr.bf16.mxu0 0
        %1381 = vmatpush1.bf16.msra.mxu0 0
        %1382 = vmatprep.subr.bf16.mxu0 0
        %1383 = vmatpush1.bf16.msra.mxu0 0
        %1384 = vmatprep.subr.bf16.mxu0 0
        %1385 = vmatpush1.bf16.msra.mxu0 0
        %1386 = vmatprep.subr.bf16.mxu0 0
        %1387 = vmatpush1.bf16.msra.mxu0 0
        %1388 = vmatprep.subr.bf16.mxu0 0
        %1389 = vmatpush1.bf16.msra.mxu0 0
        %1390 = vmatprep.subr.bf16.mxu0 0
        %1391 = vmatpush1.bf16.msra.mxu0 0
        %1392 = vmatprep.subr.bf16.mxu0 0
        %1393 = vmatpush1.bf16.msra.mxu0 0
        %1394 = vmatprep.mubr.bf16.mxu0 0
        %1395 = vmatmul.mubr.bf16.gmra.mrb[0].mxu0 %v1357
        %v1396 = vpop.f32.mrb[0].mxu0
        %v1397 = vadd.f32 0.0, %v1396
        %v1398 = vpop.f32.mrb[0].mxu0
        %v1399 = vpop.f32.mrb[0].mxu0
        %v1400 = vpop.f32.mrb[0].mxu0
        %1401 = vdwg.mxu0
        %v1403 = vsel %vm1084, %v1307, 0
        %v1406 = vsel %vm1312, %v895, 0
        %1408 = vmatprep.subr.bf16.mxu0 0
        %1409 = vmatpush1.bf16.msra.mxu0 %v1406
        %1410 = vmatprep.subr.bf16.mxu0 0
        %1411 = vmatpush1.bf16.msra.mxu0 0
        %1412 = vmatprep.subr.bf16.mxu0 0
        %1413 = vmatpush1.bf16.msra.mxu0 0
        %1414 = vmatprep.subr.bf16.mxu0 0
        %1415 = vmatpush1.bf16.msra.mxu0 0
        %1416 = vmatprep.subr.bf16.mxu0 0
        %1417 = vmatpush1.bf16.msra.mxu0 0
        %1418 = vmatprep.subr.bf16.mxu0 0
        %1419 = vmatpush1.bf16.msra.mxu0 0
        %1420 = vmatprep.subr.bf16.mxu0 0
        %1421 = vmatpush1.bf16.msra.mxu0 0
        %1422 = vmatprep.subr.bf16.mxu0 0
        %1423 = vmatpush1.bf16.msra.mxu0 0
        %1424 = vmatprep.subr.bf16.mxu0 0
        %1425 = vmatpush1.bf16.msra.mxu0 0
        %1426 = vmatprep.subr.bf16.mxu0 0
        %1427 = vmatpush1.bf16.msra.mxu0 0
        %1428 = vmatprep.subr.bf16.mxu0 0
        %1429 = vmatpush1.bf16.msra.mxu0 0
        %1430 = vmatprep.subr.bf16.mxu0 0
        %1431 = vmatpush1.bf16.msra.mxu0 0
        %1432 = vmatprep.subr.bf16.mxu0 0
        %1433 = vmatpush1.bf16.msra.mxu0 0
        %1434 = vmatprep.subr.bf16.mxu0 0
        %1435 = vmatpush1.bf16.msra.mxu0 0
        %1436 = vmatprep.subr.bf16.mxu0 0
        %1437 = vmatpush1.bf16.msra.mxu0 0
        %1438 = vmatprep.subr.bf16.mxu0 0
        %1439 = vmatpush1.bf16.msra.mxu0 0
        %1440 = vmatprep.mubr.bf16.mxu0 0
        %1441 = vmatmul.mubr.bf16.gmra.mrb[0].mxu0 %v1403
        %v1442 = vpop.f32.mrb[0].mxu0
        %v1443 = vadd.f32 0.0, %v1442
        %v1444 = vpop.f32.mrb[0].mxu0
        %v1445 = vpop.f32.mrb[0].mxu0
        %v1446 = vpop.f32.mrb[0].mxu0
        %1447 = vdwg.mxu0
        %v1449 = vsel %vm1084, %v1308, 0
        %v1452 = vsel %vm1312, %v896, 0
        %1454 = vmatprep.subr.bf16.mxu0 0
        %1455 = vmatpush1.bf16.msra.mxu0 %v1452
        %1456 = vmatprep.subr.bf16.mxu0 0
        %1457 = vmatpush1.bf16.msra.mxu0 0
        %1458 = vmatprep.subr.bf16.mxu0 0
        %1459 = vmatpush1.bf16.msra.mxu0 0
        %1460 = vmatprep.subr.bf16.mxu0 0
        %1461 = vmatpush1.bf16.msra.mxu0 0
        %1462 = vmatprep.subr.bf16.mxu0 0
        %1463 = vmatpush1.bf16.msra.mxu0 0
        %1464 = vmatprep.subr.bf16.mxu0 0
        %1465 = vmatpush1.bf16.msra.mxu0 0
        %1466 = vmatprep.subr.bf16.mxu0 0
        %1467 = vmatpush1.bf16.msra.mxu0 0
        %1468 = vmatprep.subr.bf16.mxu0 0
        %1469 = vmatpush1.bf16.msra.mxu0 0
        %1470 = vmatprep.subr.bf16.mxu0 0
        %1471 = vmatpush1.bf16.msra.mxu0 0
        %1472 = vmatprep.subr.bf16.mxu0 0
        %1473 = vmatpush1.bf16.msra.mxu0 0
        %1474 = vmatprep.subr.bf16.mxu0 0
        %1475 = vmatpush1.bf16.msra.mxu0 0
        %1476 = vmatprep.subr.bf16.mxu0 0
        %1477 = vmatpush1.bf16.msra.mxu0 0
        %1478 = vmatprep.subr.bf16.mxu0 0
        %1479 = vmatpush1.bf16.msra.mxu0 0
        %1480 = vmatprep.subr.bf16.mxu0 0
        %1481 = vmatpush1.bf16.msra.mxu0 0
        %1482 = vmatprep.subr.bf16.mxu0 0
        %1483 = vmatpush1.bf16.msra.mxu0 0
        %1484 = vmatprep.subr.bf16.mxu0 0
        %1485 = vmatpush1.bf16.msra.mxu0 0
        %1486 = vmatprep.mubr.bf16.mxu0 0
        %1487 = vmatmul.mubr.bf16.gmra.mrb[0].mxu0 %v1449
        %v1488 = vpop.f32.mrb[0].mxu0
        %v1489 = vadd.f32 0.0, %v1488
        %v1490 = vpop.f32.mrb[0].mxu0
        %v1491 = vpop.f32.mrb[0].mxu0
        %v1492 = vpop.f32.mrb[0].mxu0
        %1493 = vdwg.mxu0
        %v1494 = vrcp.pop %v1295
        %v1495 = vrcp.pop %v1298
        %v1496 = vrcp.pop %v1301
        %v1497 = vrcp.pop %v1304
        %v1498 = vmul.f32 %v1351, %v1494
        %v1499 = vmul.f32 %v1397, %v1495
        %v1500 = vmul.f32 %v1443, %v1496
        %v1501 = vmul.f32 %v1489, %v1497
        %v1502 = vcombine.low %v1498, %v1500
        %v1503 = vcombine.high %v1498, %v1500
        %v1505 = vunpack.c.l.s4 1983009808
        %v1506 = vunpack.c.0.s8 %v1505
        %v1507 = vlaneseq
        %v1508 = vshrl.u32 %v1507, 7
        %v1509 = vsub.s32 %v1506, %v1508
        %v1510 = vrot.slane %v1502, %v1509
        %v1512 = vunpack.c.l.s4 1983009808
        %v1513 = vunpack.c.0.s8 %v1512
        %v1514 = vlaneseq
        %v1515 = vshrl.u32 %v1514, 7
        %v1516 = vsub.s32 %v1513, %v1515
        %v1517 = vrot.slane %v1503, %v1516
        %v1518 = vcombine.low %v1499, %v1501
        %v1519 = vcombine.high %v1499, %v1501
        %v1521 = vunpack.c.l.s4 1983009808
        %v1522 = vunpack.c.0.s8 %v1521
        %v1523 = vlaneseq
        %v1524 = vshrl.u32 %v1523, 7
        %v1525 = vsub.s32 %v1522, %v1524
        %v1526 = vrot.slane %v1518, %v1525
        %v1528 = vunpack.c.l.s4 1983009808
        %v1529 = vunpack.c.0.s8 %v1528
        %v1530 = vlaneseq
        %v1531 = vshrl.u32 %v1530, 7
        %v1532 = vsub.s32 %v1529, %v1531
        %v1533 = vrot.slane %v1519, %v1532
        %v1534 = vcombine.low %v1510, %v1526
        %v1535 = vcombine.high %v1510, %v1526
        %v1537 = vunpack.c.l.s4 1934713408
        %v1538 = vunpack.c.0.s8 %v1537
        %v1539 = vlaneseq
        %v1540 = vshrl.u32 %v1539, 7
        %v1541 = vsub.s32 %v1538, %v1540
        %v1542 = vrot.slane %v1534, %v1541
        %v1544 = vunpack.c.l.s4 1934713408
        %v1545 = vunpack.c.0.s8 %v1544
        %v1546 = vlaneseq
        %v1547 = vshrl.u32 %v1546, 7
        %v1548 = vsub.s32 %v1545, %v1547
        %v1549 = vrot.slane %v1535, %v1548
        %v1550 = vcombine.low %v1517, %v1533
        %v1551 = vcombine.high %v1517, %v1533
        %v1553 = vunpack.c.l.s4 1934713408
        %v1554 = vunpack.c.0.s8 %v1553
        %v1555 = vlaneseq
        %v1556 = vshrl.u32 %v1555, 7
        %v1557 = vsub.s32 %v1554, %v1556
        %v1558 = vrot.slane %v1550, %v1557
        %v1560 = vunpack.c.l.s4 1934713408
        %v1561 = vunpack.c.0.s8 %v1560
        %v1562 = vlaneseq
        %v1563 = vshrl.u32 %v1562, 7
        %v1564 = vsub.s32 %v1561, %v1563
        %v1565 = vrot.slane %v1551, %v1564
        %v1566 = vcombine.high %v1542, 0.0
        %v1567 = vcombine.high %v1549, 0.0
        %v1568 = vcombine.high %v1558, 0.0
        %v1569 = vcombine.high %v1565, 0.0
        %v1570 = vcombine.low %v1542, %v1549
        %v1572 = vunpack.c.l.s4 1983009808
        %v1573 = vunpack.c.0.s8 %v1572
        %v1574 = vlaneseq
        %v1575 = vshrl.u32 %v1574, 7
        %v1576 = vsub.s32 %v1573, %v1575
        %v1577 = vrot.slane %v1570, %v1576
        %v1578 = vcombine.low %v1566, %v1567
        %v1580 = vunpack.c.l.s4 1983009808
        %v1581 = vunpack.c.0.s8 %v1580
        %v1582 = vlaneseq
        %v1583 = vshrl.u32 %v1582, 7
        %v1584 = vsub.s32 %v1581, %v1583
        %v1585 = vrot.slane %v1578, %v1584
        %v1586 = vcombine.low %v1558, %v1565
        %v1588 = vunpack.c.l.s4 1983009808
        %v1589 = vunpack.c.0.s8 %v1588
        %v1590 = vlaneseq
        %v1591 = vshrl.u32 %v1590, 7
        %v1592 = vsub.s32 %v1589, %v1591
        %v1593 = vrot.slane %v1586, %v1592
        %v1594 = vcombine.low %v1568, %v1569
        %v1596 = vunpack.c.l.s4 1983009808
        %v1597 = vunpack.c.0.s8 %v1596
        %v1598 = vlaneseq
        %v1599 = vshrl.u32 %v1598, 7
        %v1600 = vsub.s32 %v1597, %v1599
        %v1601 = vrot.slane %v1594, %v1600
        %v1602 = vcombine.low %v1577, %v1585
        %v1603 = vcombine.high %v1577, %v1585
        %v1605 = vunpack.c.l.s4 1934713408
        %v1606 = vunpack.c.0.s8 %v1605
        %v1607 = vlaneseq
        %v1608 = vshrl.u32 %v1607, 7
        %v1609 = vsub.s32 %v1606, %v1608
        %v1610 = vrot.slane %v1602, %v1609
        %v1612 = vunpack.c.l.s4 1934713408
        %v1613 = vunpack.c.0.s8 %v1612
        %v1614 = vlaneseq
        %v1615 = vshrl.u32 %v1614, 7
        %v1616 = vsub.s32 %v1613, %v1615
        %v1617 = vrot.slane %v1603, %v1616
        %v1618 = vcombine.low %v1593, %v1601
        %v1619 = vcombine.high %v1593, %v1601
        %v1621 = vunpack.c.l.s4 1934713408
        %v1622 = vunpack.c.0.s8 %v1621
        %v1623 = vlaneseq
        %v1624 = vshrl.u32 %v1623, 7
        %v1625 = vsub.s32 %v1622, %v1624
        %v1626 = vrot.slane %v1618, %v1625
        %v1628 = vunpack.c.l.s4 1934713408
        %v1629 = vunpack.c.0.s8 %v1628
        %v1630 = vlaneseq
        %v1631 = vshrl.u32 %v1630, 7
        %v1632 = vsub.s32 %v1629, %v1631
        %v1633 = vrot.slane %v1619, %v1632
        %v1634 = vcombine.low %v1610, %v1626
        %v1635 = vcombine.high %v1610, %v1626
        %v1636 = vcombine.low %v1617, %v1633
        %v1637 = vcombine.high %v1617, %v1633
        %1639 = vrot.lane.b32.xlu0 %v1635, 8
        %v1640 = vpop.permute.xlu0 %1639
        %1643 = vrot.lane.b32.xlu0 %v1636, 16
        %v1644 = vpop.permute.xlu0 %1643
        %1647 = vrot.lane.b32.xlu0 %v1637, 24
        %v1648 = vpop.permute.xlu0 %1647
        %v1650 = vsel %vm1084, %v1634, %v1640
        %vm1651 = vcmask 130048
        %v1652 = vsel %vm1651, %v1650, %v1644
        %vm1653 = vcmask 195584
        %v1654 = vsel %vm1653, %v1652, %v1648
        %v1655 = vpack.c.bf16 %v1654, %v1654
        %v1657 = vlaneseq
        %v1658 = vshrl.u32 %v1657, 7
        %v1659 = vsub.s32 0, %v1658
        %v1660 = vrot.slane %v901, %v1659
        %v1666 = vunpack.c.l.b16 %v897
        %v1667 = vunpack.c.l.b16 %v898
        %v1668 = vunpack.c.l.b16 %v899
        %v1669 = vunpack.c.l.b16 %v900
        %v1670 = vpack.c.b16 %v1667, %v1666
        %v1671 = vpack.c.b16 %v1669, %v1668
        %v1675 = vsel %vm482, %v1655, 0
        %1677 = vmatprep.subr.bf16.mxu0 0
        %1678 = vmatpush1.bf16.msra.mxu0 %v1670
        %1679 = vmatprep.subr.bf16.mxu0 0
        %1680 = vmatpush1.bf16.msra.mxu0 %v1671
        %1681 = vmatprep.subr.bf16.mxu0 0
        %1682 = vmatpush1.bf16.msra.mxu0 0
        %1683 = vmatprep.subr.bf16.mxu0 0
        %1684 = vmatpush1.bf16.msra.mxu0 0
        %1685 = vmatprep.subr.bf16.mxu0 0
        %1686 = vmatpush1.bf16.msra.mxu0 0
        %1687 = vmatprep.subr.bf16.mxu0 0
        %1688 = vmatpush1.bf16.msra.mxu0 0
        %1689 = vmatprep.subr.bf16.mxu0 0
        %1690 = vmatpush1.bf16.msra.mxu0 0
        %1691 = vmatprep.subr.bf16.mxu0 0
        %1692 = vmatpush1.bf16.msra.mxu0 0
        %1693 = vmatprep.subr.bf16.mxu0 0
        %1694 = vmatpush1.bf16.msra.mxu0 0
        %1695 = vmatprep.subr.bf16.mxu0 0
        %1696 = vmatpush1.bf16.msra.mxu0 0
        %1697 = vmatprep.subr.bf16.mxu0 0
        %1698 = vmatpush1.bf16.msra.mxu0 0
        %1699 = vmatprep.subr.bf16.mxu0 0
        %1700 = vmatpush1.bf16.msra.mxu0 0
        %1701 = vmatprep.subr.bf16.mxu0 0
        %1702 = vmatpush1.bf16.msra.mxu0 0
        %1703 = vmatprep.subr.bf16.mxu0 0
        %1704 = vmatpush1.bf16.msra.mxu0 0
        %1705 = vmatprep.subr.bf16.mxu0 0
        %1706 = vmatpush1.bf16.msra.mxu0 0
        %1707 = vmatprep.subr.bf16.mxu0 0
        %1708 = vmatpush1.bf16.msra.mxu0 0
        %1709 = vmatprep.mubr.bf16.mxu0 0
        %1710 = vmatmul.mubr.bf16.gmra.mrb[0].mxu0 %v1675
        %v1711 = vpop.f32.mrb[0].mxu0
        %v1712 = vadd.f32 %v1660, %v1711
        %v1713 = vpop.f32.mrb[0].mxu0
        %v1714 = vpop.f32.mrb[0].mxu0
        %v1715 = vpop.f32.mrb[0].mxu0
        %1716 = vdwg.mxu0
        %v1717 = vadd.f32 %v926, %v1712
        %v1718 = vsel %vm482, %v1717, 0.0
        %1719 = vadd.xlane.f32.xlu0 %v1718
        %v1720 = vpop.xlane.xlu0 %1719
        %v1721 = vmul.f32 %v1720, %v486
        %v1722 = vsub.f32 %v1717, %v1721
        %v1723 = vmul.f32 %v1722, %v1722
        %v1724 = vsel %vm482, %v1723, 0.0
        %1725 = vadd.xlane.f32.xlu0 %v1724
        %v1726 = vpop.xlane.xlu0 %1725
        %v1727 = vmul.f32 %v1726, 0.032258064
        %v1729 = vlaneseq
        %v1730 = vshrl.u32 %v1729, 7
        %v1731 = vsub.s32 0, %v1730
        %v1732 = vrot.slane %v902, %v1731
        %v1734 = vmul.f32 %v1732, %v1722
        %v1735 = vrsqrt.pop %v1727
        %v1736 = vmul.f32 %v1727, %v1735
        %vm1737 = vcmp.eq.f32.partialorder %v1727, inf
        %v1738 = vsel %vm1737, %v1727, %v1736
        %vm1739 = vcmp.eq.f32.partialorder %v1727, 0.0
        %v1740 = vand.u32 %v1727, 2147483648
        %v1741 = vsel %vm1739, %v1740, %v1738
        %v1742 = vadd.f32 %v1741, 1e-06
        %v1743 = vrcp.pop %v1742
        %v1744 = vmul.f32 %v1734, %v1743
        %v1746 = vlaneseq
        %v1747 = vshrl.u32 %v1746, 7
        %v1748 = vsub.s32 0, %v1747
        %v1749 = vrot.slane %v903, %v1748
        %v1751 = vadd.f32 %v1744, %v1749
        %v1752 = vpack.c.bf16 %v1751, %v1751
        %v1754 = vlaneseq
        %v1755 = vshrl.u32 %v1754, 7
        %v1756 = vsub.s32 0, %v1755
        %v1757 = vrot.slane %v908, %v1756
        %v1763 = vunpack.c.l.b16 %v904
        %v1764 = vunpack.c.l.b16 %v905
        %v1765 = vunpack.c.l.b16 %v906
        %v1766 = vunpack.c.l.b16 %v907
        %v1767 = vpack.c.b16 %v1764, %v1763
        %v1768 = vpack.c.b16 %v1766, %v1765
        %v1772 = vsel %vm482, %v1752, 0
        %1774 = vmatprep.subr.bf16.mxu0 0
        %1775 = vmatpush1.bf16.msra.mxu0 %v1767
        %1776 = vmatprep.subr.bf16.mxu0 0
        %1777 = vmatpush1.bf16.msra.mxu0 %v1768
        %1778 = vmatprep.subr.bf16.mxu0 0
        %1779 = vmatpush1.bf16.msra.mxu0 0
        %1780 = vmatprep.subr.bf16.mxu0 0
        %1781 = vmatpush1.bf16.msra.mxu0 0
        %1782 = vmatprep.subr.bf16.mxu0 0
        %1783 = vmatpush1.bf16.msra.mxu0 0
        %1784 = vmatprep.subr.bf16.mxu0 0
        %1785 = vmatpush1.bf16.msra.mxu0 0
        %1786 = vmatprep.subr.bf16.mxu0 0
        %1787 = vmatpush1.bf16.msra.mxu0 0
        %1788 = vmatprep.subr.bf16.mxu0 0
        %1789 = vmatpush1.bf16.msra.mxu0 0
        %1790 = vmatprep.subr.bf16.mxu0 0
        %1791 = vmatpush1.bf16.msra.mxu0 0
        %1792 = vmatprep.subr.bf16.mxu0 0
        %1793 = vmatpush1.bf16.msra.mxu0 0
        %1794 = vmatprep.subr.bf16.mxu0 0
        %1795 = vmatpush1.bf16.msra.mxu0 0
        %1796 = vmatprep.subr.bf16.mxu0 0
        %1797 = vmatpush1.bf16.msra.mxu0 0
        %1798 = vmatprep.subr.bf16.mxu0 0
        %1799 = vmatpush1.bf16.msra.mxu0 0
        %1800 = vmatprep.subr.bf16.mxu0 0
        %1801 = vmatpush1.bf16.msra.mxu0 0
        %1802 = vmatprep.subr.bf16.mxu0 0
        %1803 = vmatpush1.bf16.msra.mxu0 0
        %1804 = vmatprep.subr.bf16.mxu0 0
        %1805 = vmatpush1.bf16.msra.mxu0 0
        %1806 = vmatprep.mubr.bf16.mxu0 0
        %1807 = vmatmul.mubr.bf16.gmra.mrb[0].mxu0 %v1772
        %v1808 = vpop.f32.mrb[0].mxu0
        %v1809 = vadd.f32 %v1757, %v1808
        %v1810 = vpop.f32.mrb[0].mxu0
        %v1811 = vpop.f32.mrb[0].mxu0
        %v1812 = vpop.f32.mrb[0].mxu0
        %1813 = vdwg.mxu0
        %v1814 = vmul.f32 %v1809, 0.5
        %v1815 = vmul.f32 %v1809, 0.044715
        %v1816 = vmul.f32 %v1815, %v1809
        %v1817 = vmul.f32 %v1816, %v1809
        %v1818 = vadd.f32 %v1809, %v1817
        %v1819 = vmul.f32 %v1818, 0.7978846
        %v1820 = vtanh.pop %v1819
        %v1821 = vadd.f32 %v1820, 1.0
        %v1822 = vmul.f32 %v1814, %v1821
        %v1823 = vpack.c.bf16 %v1822, %v1822
        %v1825 = vlaneseq
        %v1826 = vshrl.u32 %v1825, 7
        %v1827 = vsub.s32 0, %v1826
        %v1828 = vrot.slane %v925, %v1827
        %v1846 = vunpack.c.l.b16 %v909
        %v1847 = vunpack.c.l.b16 %v910
        %v1848 = vunpack.c.l.b16 %v911
        %v1849 = vunpack.c.l.b16 %v912
        %v1850 = vunpack.c.l.b16 %v913
        %v1851 = vunpack.c.l.b16 %v914
        %v1852 = vunpack.c.l.b16 %v915
        %v1853 = vunpack.c.l.b16 %v916
        %v1854 = vunpack.c.l.b16 %v917
        %v1855 = vunpack.c.l.b16 %v918
        %v1856 = vunpack.c.l.b16 %v919
        %v1857 = vunpack.c.l.b16 %v920
        %v1858 = vunpack.c.l.b16 %v921
        %v1859 = vunpack.c.l.b16 %v922
        %v1860 = vunpack.c.l.b16 %v923
        %v1861 = vunpack.c.l.b16 %v924
        %v1862 = vpack.c.b16 %v1847, %v1846
        %v1863 = vpack.c.b16 %v1849, %v1848
        %v1864 = vpack.c.b16 %v1851, %v1850
        %v1865 = vpack.c.b16 %v1853, %v1852
        %v1866 = vpack.c.b16 %v1855, %v1854
        %v1867 = vpack.c.b16 %v1857, %v1856
        %v1868 = vpack.c.b16 %v1859, %v1858
        %v1869 = vpack.c.b16 %v1861, %v1860
        %1878 = vmatprep.subr.bf16.mxu0 0
        %1879 = vmatpush1.bf16.msra.mxu0 %v1862
        %1880 = vmatprep.subr.bf16.mxu0 0
        %1881 = vmatpush1.bf16.msra.mxu0 %v1863
        %1882 = vmatprep.subr.bf16.mxu0 0
        %1883 = vmatpush1.bf16.msra.mxu0 %v1864
        %1884 = vmatprep.subr.bf16.mxu0 0
        %1885 = vmatpush1.bf16.msra.mxu0 %v1865
        %1886 = vmatprep.subr.bf16.mxu0 0
        %1887 = vmatpush1.bf16.msra.mxu0 %v1866
        %1888 = vmatprep.subr.bf16.mxu0 0
        %1889 = vmatpush1.bf16.msra.mxu0 %v1867
        %1890 = vmatprep.subr.bf16.mxu0 0
        %1891 = vmatpush1.bf16.msra.mxu0 %v1868
        %1892 = vmatprep.subr.bf16.mxu0 0
        %1893 = vmatpush1.bf16.msra.mxu0 %v1869
        %1894 = vmatprep.subr.bf16.mxu0 0
        %1895 = vmatpush1.bf16.msra.mxu0 0
        %1896 = vmatprep.subr.bf16.mxu0 0
        %1897 = vmatpush1.bf16.msra.mxu0 0
        %1898 = vmatprep.subr.bf16.mxu0 0
        %1899 = vmatpush1.bf16.msra.mxu0 0
        %1900 = vmatprep.subr.bf16.mxu0 0
        %1901 = vmatpush1.bf16.msra.mxu0 0
        %1902 = vmatprep.subr.bf16.mxu0 0
        %1903 = vmatpush1.bf16.msra.mxu0 0
        %1904 = vmatprep.subr.bf16.mxu0 0
        %1905 = vmatpush1.bf16.msra.mxu0 0
        %1906 = vmatprep.subr.bf16.mxu0 0
        %1907 = vmatpush1.bf16.msra.mxu0 0
        %1908 = vmatprep.subr.bf16.mxu0 0
        %1909 = vmatpush1.bf16.msra.mxu0 0
        %1910 = vmatprep.mubr.bf16.mxu0 0
        %1911 = vmatmul.mubr.bf16.gmra.mrb[0].mxu0 %v1823
        %v1912 = vpop.f32.mrb[0].mxu0
        %v1913 = vadd.f32 %v1828, %v1912
        %v1914 = vpop.f32.mrb[0].mxu0
        %v1915 = vpop.f32.mrb[0].mxu0
        %v1916 = vpop.f32.mrb[0].mxu0
        %1917 = vdwg.mxu0
        %v1918 = vadd.f32 %v1717, %v1913
        %1919 = vst.msk [vmem:[%s469] sm:$0xff] %vm482, %v1918
        %s1920 = sand.u32 %s340, 1
        %s1921 = scalar_lea.sflag [#allocation4], %s1920
        %s1922 = sand.u32 %s340, 1
        %s1923 = smul.addr %s1922, 8
        %s1924 = scalar_lea.vmem [#allocation3], %s1923
        // Predicated region
        $region77: #{tpu_custom_call.1} parent=75 // pred_check
          %p1925 = pneg %p350
        $region78: #{tpu_custom_call.1} parent=75 // pred_check_branch
          %1927 = sbr.rel (%p1925) target = $region80
        $region79: #{tpu_custom_call.1} parent=75 // pred_region
          %s1929 = ssub.s32 128, 128
          %1930 = vsyncadd %s1921, %s1929
          %s1931 = smul.addr %s28, 128
          %s1932 = scalar_lea.hbm %s14, %s1931
          %s1934 = sshll.u32 %s1924, 4
          %s1935 = int_to_ptr.vmem [resolvable:$true] %s1934
          %1937 = dma.vmem_to_hbm [thread:$0]  %s1935, 128, %s1932, %s1921
        $region80: #{tpu_custom_call.1} parent=75 // pred_fallthru
          _
      $region76: #{tpu_custom_call.1} parent=5 // pred_fallthru
        _
      %p1938 = scmp.le.s32.totalorder 2, %s23
      // Predicated region
      $region81: #{tpu_custom_call.1} parent=5 // pred_check
        %p1939 = pneg %p1938
      $region82: #{tpu_custom_call.1} parent=5 // pred_check_branch
        %1941 = sbr.rel (%p1939) target = $region84
      $region83: #{tpu_custom_call.1} parent=5 // pred_region
        %s1942 = ssub.s32 %s23, 2
        // Predicated region
        $region85: #{tpu_custom_call.1} parent=83 // pred_check
          %p1943 = pneg %p356
        $region86: #{tpu_custom_call.1} parent=83 // pred_check_branch
          %1945 = sbr.rel (%p1943) target = $region88
        $region87: #{tpu_custom_call.1} parent=83 // pred_region
          %s1946 = sand.u32 %s341, 1
          %s1947 = scalar_lea.sflag [#allocation4], %s1946
          %s1948 = sand.u32 %s341, 1
          %s1949 = smul.addr %s1948, 8
          %s1950 = scalar_lea.vmem [#allocation3], %s1949
          %1951 = dma.done %s1947, 128
        $region88: #{tpu_custom_call.1} parent=83 // pred_fallthru
          _
      $region84: #{tpu_custom_call.1} parent=5 // pred_fallthru
        _
    $region6: #{tpu_custom_call.1} parent=1 // loop_footer
      %s27 = sadd.s32 1, %s23
    $region7: #{tpu_custom_call.1} parent=1 // loop_footer_branch
      %22 = sbr.rel target = $region3
    $region8: #{tpu_custom_call.1} parent=1 // loop_exit
      _
    %1952 = vsyncpa [#allocation4], 1
    %s1953 = scalar_lea.sflag [#allocation4], 1
    %1954 = vsyncpa %s1953, 1

</llo_original>
